<compile_context>
chip_gen: v7x
topology: tpu7x:2x2x1
jax: 0.10.0
libtpu: 0.0.40
codegen_flags: <defaults>
</compile_context>

<pallas_src>
import functools
import math

import jax
import jax.numpy as jnp
from jax.experimental import pallas as pl
from jax.experimental.pallas import tpu as pltpu

NEG = -1e9
LN_EPS = 1e-5

# Tile targets.
TM, TN, TK, TF = 256, 256, 512, 512


def _pick(dim, target, align=128):
    """Largest `align`-multiple <= target that divides dim; dim itself if small."""
    if dim <= target:
        return dim
    t = (target // align) * align
    while t >= align:
        if dim % t == 0:
            return t
        t -= align
    # TODO(synk): masked remainder blocks for dims with no aligned divisor.
    for t in range(target, 7, -8):
        if dim % t == 0:
            return t
    return dim


def _vmem_limit(block_bytes, scratch_bytes):
    """Scoped-VMEM request: double-buffered blocks + scratch + headroom."""
    need = 2 * block_bytes + scratch_bytes + (2 << 20)
    return int(min(max(need, 32 << 20), 64 << 20))


# ----------------------------------------------------------------------------
# Kernels
# ----------------------------------------------------------------------------
def _matmul_kernel(x_ref, w_ref, b_ref, o_ref, acc_ref):
    """Tiled y = x @ w + b. grid=(M/tm, N/tn, K/tk). bf16 operands, f32 acc."""
    @pl.when(pl.program_id(2) == 0)
    def _():
        acc_ref[...] = jnp.zeros_like(acc_ref)

    acc_ref[...] += jnp.dot(x_ref[...].astype(jnp.bfloat16),
                            w_ref[...].astype(jnp.bfloat16),
                            preferred_element_type=jnp.float32)

    @pl.when(pl.program_id(2) == pl.num_programs(2) - 1)
    def _():
        o_ref[...] = (acc_ref[...] + b_ref[...]).astype(o_ref.dtype)


def _linear_add_ln_kernel(x_ref, w_ref, b_ref, res_ref, g_ref, be_ref,
                          o_ref, acc_ref, *, eps):
    """Out-projection fused with residual add + LayerNorm. grid=(M/tm, K/tk)."""
    @pl.when(pl.program_id(1) == 0)
    def _():
        acc_ref[...] = jnp.zeros_like(acc_ref)

    acc_ref[...] += jnp.dot(x_ref[...].astype(jnp.bfloat16),
                            w_ref[...].astype(jnp.bfloat16),
                            preferred_element_type=jnp.float32)

    @pl.when(pl.program_id(1) == pl.num_programs(1) - 1)
    def _():
        y = acc_ref[...] + b_ref[...] + res_ref[...].astype(jnp.float32)
        mean = jnp.mean(y, axis=-1, keepdims=True)
        var = jnp.mean(jnp.square(y - mean), axis=-1, keepdims=True)
        n = (y - mean) * jax.lax.rsqrt(var + eps)
        o_ref[...] = (n * g_ref[...] + be_ref[...]).astype(o_ref.dtype)


def _ffn_kernel(x_ref, w1_ref, b1_ref, w2_ref, b2_ref, g_ref, be_ref,
                o_ref, acc_ref, *, eps):
    """fc1 -> relu -> fc2 -> +residual(x) -> LayerNorm. grid=(M/tm, F/tf)."""
    @pl.when(pl.program_id(1) == 0)
    def _():
        acc_ref[...] = jnp.zeros_like(acc_ref)

    h = jnp.dot(x_ref[...].astype(jnp.bfloat16), w1_ref[...],
                preferred_element_type=jnp.float32)
    h = jnp.maximum(h + b1_ref[...], 0.0)
    acc_ref[...] += jnp.dot(h.astype(jnp.bfloat16), w2_ref[...],
                            preferred_element_type=jnp.float32)

    @pl.when(pl.program_id(1) == pl.num_programs(1) - 1)
    def _():
        y = acc_ref[...] + b2_ref[...] + x_ref[...].astype(jnp.float32)
        mean = jnp.mean(y, axis=-1, keepdims=True)
        var = jnp.mean(jnp.square(y - mean), axis=-1, keepdims=True)
        n = (y - mean) * jax.lax.rsqrt(var + eps)
        o_ref[...] = (n * g_ref[...] + be_ref[...]).astype(o_ref.dtype)


def _self_attn_kernel(q_ref, k_ref, v_ref, o_ref, m_sc, l_sc, acc_sc,
                      *, scale, tq, tk):
    """Flash-style causal attention for one (batch, head). grid=(B*H, nq, nk).
    q:(1,tq,D) k/v:(1,tk,D) -> o:(1,tq,D). kv axis is the reduction axis."""
    ki = pl.program_id(2)

    @pl.when(ki == 0)
    def _():
        m_sc[...] = jnp.full_like(m_sc, -jnp.inf)
        l_sc[...] = jnp.zeros_like(l_sc)
        acc_sc[...] = jnp.zeros_like(acc_sc)

    q_start = pl.program_id(1) * tq
    k_start = ki * tk

    # Skip key tiles entirely in the causal future of this query tile.
    @pl.when(k_start <= q_start + (tq - 1))
    def _():
        s = jax.lax.dot_general(q_ref[0], k_ref[0], (((1,), (1,)), ((), ())),
                                preferred_element_type=jnp.float32) * scale
        qpos = q_start + jax.lax.broadcasted_iota(jnp.int32, (tq, tk), 0)
        kpos = k_start + jax.lax.broadcasted_iota(jnp.int32, (tq, tk), 1)
        s = jnp.where(kpos <= qpos, s, NEG)

        m_prev = m_sc[...]
        m_new = jnp.maximum(m_prev, jnp.max(s, axis=-1, keepdims=True))
        alpha = jnp.exp(m_prev - m_new)
        p = jnp.exp(s - m_new)
        l_sc[...] = alpha * l_sc[...] + jnp.sum(p, axis=-1, keepdims=True)
        acc_sc[...] = alpha * acc_sc[...] + jnp.dot(
            p.astype(jnp.bfloat16), v_ref[0], preferred_element_type=jnp.float32)
        m_sc[...] = m_new

    @pl.when(ki == pl.num_programs(2) - 1)
    def _():
        o_ref[0] = (acc_sc[...] *
                    pl.reciprocal(l_sc[...], approx=True)).astype(o_ref.dtype)


def _enc_attn_kernel(q_ref, k_ref, v_ref, bias_ref, o_ref, w_ref,
                     *, scale, inv_heads):
    """Encoder attention, one (batch, q-tile, head) per grid step.
    Head-averaged weights accumulated in the resident (1,tq,S) output block.
    q:(1,1,tq,D) k/v:(1,1,S,D) bias:(1,1,S) -> o:(1,1,tq,D) w:(1,tq,S)."""
    q = q_ref[0, 0]
    k = k_ref[0, 0]
    v = v_ref[0, 0]
    s = jax.lax.dot_general(q, k, (((1,), (1,)), ((), ())),
                            preferred_element_type=jnp.float32)
    s = s * scale + bias_ref[0]                       # (tq, S) f32
    m = jnp.max(s, axis=-1, keepdims=True)
    e = jnp.exp(s - m)
    p = e * pl.reciprocal(jnp.sum(e, axis=-1, keepdims=True), approx=True)
    o_ref[0, 0] = jnp.dot(p.astype(jnp.bfloat16), v,
                          preferred_element_type=jnp.float32).astype(o_ref.dtype)

    pw = p * inv_heads
    h = pl.program_id(2)

    @pl.when(h == 0)
    def _():
        w_ref[0] = pw

    @pl.when(h != 0)
    def _():
        w_ref[0] += pw


# ----------------------------------------------------------------------------
# Wrappers
# ----------------------------------------------------------------------------
def linear(x, w, b, out_dtype=None):
    M, K = x.shape
    N = w.shape[1]
    out_dtype = out_dtype or x.dtype
    tm, tn, tk = _pick(M, TM, 8), _pick(N, TN, 128), _pick(K, TK, 128)
    blk = (tm * tk * x.dtype.itemsize + tk * tn * w.dtype.itemsize
           + tn * 4 + tm * tn * jnp.dtype(out_dtype).itemsize)
    return pl.pallas_call(
        _matmul_kernel,
        grid=(M // tm, N // tn, K // tk),
        in_specs=[
            pl.BlockSpec((tm, tk), lambda i, j, k: (i, k)),
            pl.BlockSpec((tk, tn), lambda i, j, k: (k, j)),
            pl.BlockSpec((1, tn), lambda i, j, k: (0, j)),
        ],
        out_specs=pl.BlockSpec((tm, tn), lambda i, j, k: (i, j)),
        out_shape=jax.ShapeDtypeStruct((M, N), out_dtype),
        scratch_shapes=[pltpu.VMEM((tm, tn), jnp.float32)],
        compiler_params=pltpu.CompilerParams(
            dimension_semantics=("parallel", "parallel", "arbitrary"),
            vmem_limit_bytes=_vmem_limit(blk, tm * tn * 4)),
    )(x, w, b.reshape(1, N))


def linear_add_ln(x, w, b, residual, gamma, beta):
    """LayerNorm(residual + (x @ w + b)) fused; N=E kept whole for the LN."""
    M, K = x.shape
    E = w.shape[1]
    tm, tk = _pick(M, TM, 8), _pick(K, TK, 128)
    blk = (tm * tk * x.dtype.itemsize + tk * E * w.dtype.itemsize
           + 3 * E * 4 + tm * E * 4 + tm * E * 4)
    return pl.pallas_call(
        functools.partial(_linear_add_ln_kernel, eps=LN_EPS),
        grid=(M // tm, K // tk),
        in_specs=[
            pl.BlockSpec((tm, tk), lambda i, k: (i, k)),
            pl.BlockSpec((tk, E), lambda i, k: (k, 0)),
            pl.BlockSpec((1, E), lambda i, k: (0, 0)),
            pl.BlockSpec((tm, E), lambda i, k: (i, 0)),
            pl.BlockSpec((1, E), lambda i, k: (0, 0)),
            pl.BlockSpec((1, E), lambda i, k: (0, 0)),
        ],
        out_specs=pl.BlockSpec((tm, E), lambda i, k: (i, 0)),
        out_shape=jax.ShapeDtypeStruct((M, E), jnp.float32),
        scratch_shapes=[pltpu.VMEM((tm, E), jnp.float32)],
        compiler_params=pltpu.CompilerParams(
            dimension_semantics=("parallel", "arbitrary"),
            vmem_limit_bytes=_vmem_limit(blk, tm * E * 4)),
    )(x, w, b.reshape(1, E), residual, gamma.reshape(1, E), beta.reshape(1, E))


def ffn_block(x, w1, b1, w2, b2, gamma, beta):
    """LayerNorm(x + fc2(relu(fc1(x)))) fused; (M,F) intermediate stays in VMEM."""
    M, E = x.shape
    F = w1.shape[1]
    tm, tf = _pick(M, TM, 8), _pick(F, TF, 128)
    blk = (tm * E * 4 + E * tf * 2 + tf * 4 + tf * E * 2 + 3 * E * 4 + tm * E * 4)
    return pl.pallas_call(
        functools.partial(_ffn_kernel, eps=LN_EPS),
        grid=(M // tm, F // tf),
        in_specs=[
            pl.BlockSpec((tm, E), lambda i, f: (i, 0)),
            pl.BlockSpec((E, tf), lambda i, f: (0, f)),
            pl.BlockSpec((1, tf), lambda i, f: (0, f)),
            pl.BlockSpec((tf, E), lambda i, f: (f, 0)),
            pl.BlockSpec((1, E), lambda i, f: (0, 0)),
            pl.BlockSpec((1, E), lambda i, f: (0, 0)),
            pl.BlockSpec((1, E), lambda i, f: (0, 0)),
        ],
        out_specs=pl.BlockSpec((tm, E), lambda i, f: (i, 0)),
        out_shape=jax.ShapeDtypeStruct((M, E), jnp.float32),
        scratch_shapes=[pltpu.VMEM((tm, E), jnp.float32)],
        compiler_params=pltpu.CompilerParams(
            dimension_semantics=("parallel", "arbitrary"),
            vmem_limit_bytes=_vmem_limit(blk, tm * E * 4)),
    )(x, w1, b1.reshape(1, F), w2, b2.reshape(1, E),
      gamma.reshape(1, E), beta.reshape(1, E))


def self_attention(q, k, v, scale):
    """q/k/v: (B*H, T, D) bf16 -> (B*H, T, D) bf16. Flash over kv tiles."""
    BH, T, D = q.shape
    tq = _pick(T, 256, 128)
    tk = _pick(T, 256, 128)
    return pl.pallas_call(
        functools.partial(_self_attn_kernel, scale=scale, tq=tq, tk=tk),
        grid=(BH, T // tq, T // tk),
        in_specs=[
            pl.BlockSpec((1, tq, D), lambda b, i, j: (b, i, 0)),
            pl.BlockSpec((1, tk, D), lambda b, i, j: (b, j, 0)),
            pl.BlockSpec((1, tk, D), lambda b, i, j: (b, j, 0)),
        ],
        out_specs=pl.BlockSpec((1, tq, D), lambda b, i, j: (b, i, 0)),
        out_shape=jax.ShapeDtypeStruct((BH, T, D), q.dtype),
        scratch_shapes=[pltpu.VMEM((tq, 1), jnp.float32),
                        pltpu.VMEM((tq, 1), jnp.float32),
                        pltpu.VMEM((tq, D), jnp.float32)],
        compiler_params=pltpu.CompilerParams(
            dimension_semantics=("parallel", "parallel", "arbitrary")),
    )(q, k, v)


def encoder_attention(q, k, v, bias, scale):
    """q:(B,H,T,D) k/v:(B,H,S,D) bias:(B,1,S) -> out:(B,H,T,D), weights:(B,T,S)."""
    B, H, T, D = q.shape
    S = k.shape[2]
    tq = _pick(T, 256, 128)
    return pl.pallas_call(
        functools.partial(_enc_attn_kernel, scale=scale, inv_heads=1.0 / H),
        grid=(B, T // tq, H),
        in_specs=[
            pl.BlockSpec((1, 1, tq, D), lambda b, i, h: (b, h, i, 0)),
            pl.BlockSpec((1, 1, S, D), lambda b, i, h: (b, h, 0, 0)),
            pl.BlockSpec((1, 1, S, D), lambda b, i, h: (b, h, 0, 0)),
            pl.BlockSpec((1, 1, S), lambda b, i, h: (b, 0, 0)),
        ],
        out_specs=(
            pl.BlockSpec((1, 1, tq, D), lambda b, i, h: (b, h, i, 0)),
            pl.BlockSpec((1, tq, S), lambda b, i, h: (b, i, 0)),
        ),
        out_shape=(
            jax.ShapeDtypeStruct((B, H, T, D), q.dtype),
            jax.ShapeDtypeStruct((B, T, S), jnp.float32),
        ),
        compiler_params=pltpu.CompilerParams(
            dimension_semantics=("parallel", "parallel", "arbitrary")),
    )(q, k, v, bias)


# ----------------------------------------------------------------------------
# TransformerDecoderLayer forward (post-norm, eval mode)
# ----------------------------------------------------------------------------
def transformer_decoder_layer(x, encoder_out, encoder_padding_mask, params,
                              num_heads):
    T, B, E = x.shape
    S = encoder_out.shape[0]
    H = num_heads
    D = E // H
    scale = D ** -0.5

    # Seq-first flattening (row order irrelevant for matmuls/LN): no transposes.
    x2 = x.reshape(T * B, E)
    enc2 = encoder_out.reshape(S * B, E)

    # --- self attention (causal), fused QKV projection, heads on grid ---
    residual = x2
    qkv = linear(x2, params["self_in_w"], params["self_in_b"],
                 out_dtype=jnp.bfloat16)                         # (T*B, 3E) bf16
    qkv = qkv.reshape(T, B, 3, H, D).transpose(2, 1, 3, 0, 4)    # (3, B, H, T, D)
    q = qkv[0].reshape(B * H, T, D)
    k = qkv[1].reshape(B * H, T, D)
    v = qkv[2].reshape(B * H, T, D)
    y = self_attention(q, k, v, scale)                           # (B*H, T, D)
    y = y.reshape(B, H, T, D).transpose(2, 0, 1, 3).reshape(T * B, E)
    x2 = linear_add_ln(y, params["self_out_w"], params["self_out_b"],
                       residual, params["ln0_g"], params["ln0_b"])

    # --- encoder attention (key padding mask, head-averaged weights) ---
    residual = x2
    q = linear(x2, params["enc_q_w"], params["enc_q_b"],
               out_dtype=jnp.bfloat16)
    q = q.reshape(T, B, H, D).transpose(1, 2, 0, 3)              # (B, H, T, D)
    kv = linear(enc2, params["enc_kv_w"], params["enc_kv_b"],
                out_dtype=jnp.bfloat16)
    kv = kv.reshape(S, B, 2, H, D).transpose(2, 1, 3, 0, 4)      # (2, B, H, S, D)
    bias = jnp.where(encoder_padding_mask, NEG, 0.0).astype(
        jnp.float32).reshape(B, 1, S)
    y, attn = encoder_attention(q, kv[0], kv[1], bias, scale)    # attn:(B,T,S)
    y = y.transpose(2, 0, 1, 3).reshape(T * B, E)
    x2 = linear_add_ln(y, params["enc_out_w"], params["enc_out_b"],
                       residual, params["ln1_g"], params["ln1_b"])

    # --- feed forward (fc1 + relu + fc2 + residual + LN fused) ---
    x2 = ffn_block(x2, params["fc1_w"], params["fc1_b"],
                   params["fc2_w"], params["fc2_b"],
                   params["ln2_g"], params["ln2_b"])

    return x2.reshape(T, B, E), attn


# ----------------------------------------------------------------------------
# Deterministic parameter init (xavier_uniform weights in bf16, zero biases)
# ----------------------------------------------------------------------------
def xavier_uniform_bf16(key, fan_in, fan_out):
    bound = math.sqrt(6.0 / (fan_in + fan_out))
    w = jax.random.uniform(key, (fan_in, fan_out), jnp.float32, -bound, bound)
    return w.astype(jnp.bfloat16)


def init_params(key, embed_dim, ffn_dim):
    ks = jax.random.split(key, 7)
    E, F = embed_dim, ffn_dim
    p = {
        "self_in_w": xavier_uniform_bf16(ks[0], E, 3 * E),
        "self_in_b": jnp.zeros((3 * E,), jnp.float32),
        "self_out_w": xavier_uniform_bf16(ks[1], E, E),
        "self_out_b": jnp.zeros((E,), jnp.float32),
        # encoder-attn in_proj pre-split into q and kv (no per-call slicing)
        "enc_q_w": xavier_uniform_bf16(ks[2], E, E),
        "enc_q_b": jnp.zeros((E,), jnp.float32),
        "enc_kv_w": xavier_uniform_bf16(ks[3], E, 2 * E),
        "enc_kv_b": jnp.zeros((2 * E,), jnp.float32),
        "enc_out_w": xavier_uniform_bf16(ks[4], E, E),
        "enc_out_b": jnp.zeros((E,), jnp.float32),
        "fc1_w": xavier_uniform_bf16(ks[5], E, F),
        "fc1_b": jnp.zeros((F,), jnp.float32),
        "fc2_w": xavier_uniform_bf16(ks[6], F, E),
        "fc2_b": jnp.zeros((E,), jnp.float32),
    }
    for i in range(3):
        p[f"ln{i}_g"] = jnp.ones((E,), jnp.float32)
        p[f"ln{i}_b"] = jnp.zeros((E,), jnp.float32)
    return p


if __name__ == "__main__":
    # Small shapes consistent with the module (lane-aligned embed dim).
    T, S, B = 16, 32, 2        # decoder len, encoder len, batch
    E, H, F = 128, 4, 256      # embed dim, heads, ffn dim

    key = jax.random.PRNGKey(0)
    k_p, k_x, k_e = jax.random.split(key, 3)

    params = init_params(k_p, E, F)
    x = jax.random.normal(k_x, (T, B, E), jnp.float32)
    encoder_out = jax.random.normal(k_e, (S, B, E), jnp.float32)
    # batch 0: no padding; batch 1: last 8 encoder positions padded
    encoder_padding_mask = jnp.array(
        [[False] * S, [False] * (S - 8) + [True] * 8], dtype=jnp.bool_)

    layer = jax.jit(functools.partial(transformer_decoder_layer, num_heads=H))
    out, attn = layer(x, encoder_out, encoder_padding_mask, params)
    jax.block_until_ready(out)
    jax.block_until_ready(attn)
    assert out.shape == (T, B, E) and attn.shape == (B, T, S)
    assert bool(jnp.all(jnp.isfinite(out))) and bool(jnp.all(jnp.isfinite(attn)))
    print("KERNEL_OK")
</pallas_src>

<mosaic_0001>
module attributes {stable_mosaic.version = 11 : i64} {
  func.func @_matmul_kernel(%arg0: i32, %arg1: i32, %arg2: i32, %arg3: memref<32x128xf32, #tpu.memory_space<vmem>>, %arg4: memref<128x128xbf16, #tpu.memory_space<vmem>>, %arg5: memref<1x128xf32, #tpu.memory_space<vmem>>, %arg6: memref<32x128xbf16, #tpu.memory_space<vmem>>, %arg7: memref<32x128xf32, #tpu.memory_space<vmem>>) attributes {dimension_semantics = [#tpu.dimension_semantics<parallel>, #tpu.dimension_semantics<parallel>, #tpu.dimension_semantics<arbitrary>], iteration_bounds = array<i64: 1, 3, 1>, scalar_prefetch = 0 : i64, scratch_operands = 1 : i64, tpu.core_type = #tpu.core_type<tc>, window_params = [{transform_indices = @transform_0, window_bounds = array<i64: 32, 128>}, {transform_indices = @transform_1, window_bounds = array<i64: 128, 128>}, {transform_indices = @transform_2, window_bounds = array<i64: 1, 128>}, {transform_indices = @transform_3, window_bounds = array<i64: 32, 128>}]} {
    %c0_i32 = arith.constant 0 : i32
    %0 = arith.cmpi eq, %arg2, %c0_i32 : i32
    %1 = arith.extui %0 : i1 to i32
    %c0_i32_0 = arith.constant 0 : i32
    %2 = arith.cmpi ne, %1, %c0_i32_0 : i32
    scf.if %2 {
      %cst_10 = arith.constant 0.000000e+00 : f32
      %13 = vector.broadcast %cst_10 : f32 to vector<32x128xf32>
      %c0_11 = arith.constant 0 : index
      %c0_12 = arith.constant 0 : index
      %14 = vector.load %arg7[%c0_11, %c0_12] : memref<32x128xf32, #tpu.memory_space<vmem>>, vector<32x128xf32>
      tpu.vector_store %arg7[%c0_11, %c0_12], %13 {strides = array<i32>} : memref<32x128xf32, #tpu.memory_space<vmem>>, vector<32x128xf32>,
    } else {
    }
    %c0 = arith.constant 0 : index
    %c0_1 = arith.constant 0 : index
    %3 = vector.load %arg7[%c0, %c0_1] : memref<32x128xf32, #tpu.memory_space<vmem>>, vector<32x128xf32>
    %c0_2 = arith.constant 0 : index
    %c0_3 = arith.constant 0 : index
    %4 = vector.load %arg3[%c0_2, %c0_3] : memref<32x128xf32, #tpu.memory_space<vmem>>, vector<32x128xf32>
    %5 = arith.truncf %4 : vector<32x128xf32> to vector<32x128xbf16>
    %c0_4 = arith.constant 0 : index
    %c0_5 = arith.constant 0 : index
    %6 = vector.load %arg4[%c0_4, %c0_5] : memref<128x128xbf16, #tpu.memory_space<vmem>>, vector<128x128xbf16>
    %cst = arith.constant dense<0.000000e+00> : vector<32x128xf32>
    %7 = tpu.matmul %5, %6, %cst {dimension_numbers = #tpu.dot_dimension_numbers<[1], [0], [0], [1], [0, 0, 1, 1], [], []>} : vector<32x128xbf16>, vector<128x128xbf16>, vector<32x128xf32> -> vector<32x128xf32>
    %8 = arith.addf %3, %7 : vector<32x128xf32>
    %c0_6 = arith.constant 0 : index
    %c0_7 = arith.constant 0 : index
    %9 = vector.load %arg7[%c0_6, %c0_7] : memref<32x128xf32, #tpu.memory_space<vmem>>, vector<32x128xf32>
    tpu.vector_store %arg7[%c0_6, %c0_7], %8 {strides = array<i32>} : memref<32x128xf32, #tpu.memory_space<vmem>>, vector<32x128xf32>,
    %c0_i32_8 = arith.constant 0 : i32
    %10 = arith.cmpi eq, %arg2, %c0_i32_8 : i32
    %11 = arith.extui %10 : i1 to i32
    %c0_i32_9 = arith.constant 0 : i32
    %12 = arith.cmpi ne, %11, %c0_i32_9 : i32
    scf.if %12 {
      %c0_10 = arith.constant 0 : index
      %c0_11 = arith.constant 0 : index
      %13 = vector.load %arg7[%c0_10, %c0_11] : memref<32x128xf32, #tpu.memory_space<vmem>>, vector<32x128xf32>
      %c0_12 = arith.constant 0 : index
      %c0_13 = arith.constant 0 : index
      %14 = vector.load %arg5[%c0_12, %c0_13] : memref<1x128xf32, #tpu.memory_space<vmem>>, vector<1x128xf32>
      %15 = vector.broadcast %14 : vector<1x128xf32> to vector<32x128xf32>
      %16 = arith.addf %13, %15 : vector<32x128xf32>
      %17 = arith.truncf %16 : vector<32x128xf32> to vector<32x128xbf16>
      %c0_14 = arith.constant 0 : index
      %c0_15 = arith.constant 0 : index
      %18 = vector.load %arg6[%c0_14, %c0_15] : memref<32x128xbf16, #tpu.memory_space<vmem>>, vector<32x128xbf16>
      tpu.vector_store %arg6[%c0_14, %c0_15], %17 {strides = array<i32>} : memref<32x128xbf16, #tpu.memory_space<vmem>>, vector<32x128xbf16>,
    } else {
    }
    return
  }
  func.func @transform_0(%arg0: i32, %arg1: i32, %arg2: i32) -> (i32, i32) {
    %c0_i32 = arith.constant 0 : i32
    return %arg0, %arg2 : i32, i32
  }
  func.func @transform_1(%arg0: i32, %arg1: i32, %arg2: i32) -> (i32, i32) {
    %c0_i32 = arith.constant 0 : i32
    return %arg2, %arg1 : i32, i32
  }
  func.func @transform_2(%arg0: i32, %arg1: i32, %arg2: i32) -> (i32, i32) {
    %c0_i32 = arith.constant 0 : i32
    %c0_i32_0 = arith.constant 0 : i32
    return %c0_i32, %arg1 : i32, i32
  }
  func.func @transform_3(%arg0: i32, %arg1: i32, %arg2: i32) -> (i32, i32) {
    %c0_i32 = arith.constant 0 : i32
    return %arg0, %arg1 : i32, i32
  }
}

module attributes {stable_mosaic.version = 11 : i64} {
  func.func @_self_attn_kernel(%arg0: i32, %arg1: i32, %arg2: i32, %arg3: memref<1x16x32xbf16, #tpu.memory_space<vmem>>, %arg4: memref<1x16x32xbf16, #tpu.memory_space<vmem>>, %arg5: memref<1x16x32xbf16, #tpu.memory_space<vmem>>, %arg6: memref<1x16x32xbf16, #tpu.memory_space<vmem>>, %arg7: memref<16x1xf32, #tpu.memory_space<vmem>>, %arg8: memref<16x1xf32, #tpu.memory_space<vmem>>, %arg9: memref<16x32xf32, #tpu.memory_space<vmem>>) attributes {dimension_semantics = [#tpu.dimension_semantics<parallel>, #tpu.dimension_semantics<parallel>, #tpu.dimension_semantics<arbitrary>], iteration_bounds = array<i64: 8, 1, 1>, scalar_prefetch = 0 : i64, scratch_operands = 3 : i64, tpu.core_type = #tpu.core_type<tc>, window_params = [{transform_indices = @transform_0, window_bounds = array<i64: 1, 16, 32>}, {transform_indices = @transform_1, window_bounds = array<i64: 1, 16, 32>}, {transform_indices = @transform_2, window_bounds = array<i64: 1, 16, 32>}, {transform_indices = @transform_3, window_bounds = array<i64: 1, 16, 32>}]} {
    %c0_i32 = arith.constant 0 : i32
    %0 = arith.cmpi eq, %arg2, %c0_i32 : i32
    %1 = arith.extui %0 : i1 to i32
    %c0_i32_0 = arith.constant 0 : i32
    %2 = arith.cmpi ne, %1, %c0_i32_0 : i32
    scf.if %2 {
      %cst = arith.constant 0xFF800000 : f32
      %12 = vector.broadcast %cst : f32 to vector<16x1xf32>
      %c0 = arith.constant 0 : index
      %c0_5 = arith.constant 0 : index
      %13 = vector.load %arg7[%c0, %c0_5] : memref<16x1xf32, #tpu.memory_space<vmem>>, vector<16x1xf32>
      tpu.vector_store %arg7[%c0, %c0_5], %12 {strides = array<i32>} : memref<16x1xf32, #tpu.memory_space<vmem>>, vector<16x1xf32>,
      %cst_6 = arith.constant 0.000000e+00 : f32
      %14 = vector.broadcast %cst_6 : f32 to vector<16x1xf32>
      %c0_7 = arith.constant 0 : index
      %c0_8 = arith.constant 0 : index
      %15 = vector.load %arg8[%c0_7, %c0_8] : memref<16x1xf32, #tpu.memory_space<vmem>>, vector<16x1xf32>
      tpu.vector_store %arg8[%c0_7, %c0_8], %14 {strides = array<i32>} : memref<16x1xf32, #tpu.memory_space<vmem>>, vector<16x1xf32>,
      %cst_9 = arith.constant 0.000000e+00 : f32
      %16 = vector.broadcast %cst_9 : f32 to vector<16x32xf32>
      %c0_10 = arith.constant 0 : index
      %c0_11 = arith.constant 0 : index
      %17 = vector.load %arg9[%c0_10, %c0_11] : memref<16x32xf32, #tpu.memory_space<vmem>>, vector<16x32xf32>
      tpu.vector_store %arg9[%c0_10, %c0_11], %16 {strides = array<i32>} : memref<16x32xf32, #tpu.memory_space<vmem>>, vector<16x32xf32>,
    } else {
    }
    %c16_i32 = arith.constant 16 : i32
    %3 = arith.muli %arg1, %c16_i32 : i32
    %c16_i32_1 = arith.constant 16 : i32
    %4 = arith.muli %arg2, %c16_i32_1 : i32
    %c15_i32 = arith.constant 15 : i32
    %5 = arith.addi %3, %c15_i32 : i32
    %6 = arith.cmpi sle, %4, %5 : i32
    %7 = arith.extui %6 : i1 to i32
    %c0_i32_2 = arith.constant 0 : i32
    %8 = arith.cmpi ne, %7, %c0_i32_2 : i32
    scf.if %8 {
      %c0 = arith.constant 0 : index
      %c0_5 = arith.constant 0 : index
      %c0_6 = arith.constant 0 : index
      %12 = vector.load %arg3[%c0, %c0_5, %c0_6] : memref<1x16x32xbf16, #tpu.memory_space<vmem>>, vector<1x16x32xbf16>
      %13 = vector.shape_cast %12 : vector<1x16x32xbf16> to vector<16x32xbf16>
      %c0_7 = arith.constant 0 : index
      %c0_8 = arith.constant 0 : index
      %c0_9 = arith.constant 0 : index
      %14 = vector.load %arg4[%c0_7, %c0_8, %c0_9] : memref<1x16x32xbf16, #tpu.memory_space<vmem>>, vector<1x16x32xbf16>
      %15 = vector.shape_cast %14 : vector<1x16x32xbf16> to vector<16x32xbf16>
      %cst = arith.constant dense<0.000000e+00> : vector<16x16xf32>
      %16 = tpu.matmul %13, %15, %cst {dimension_numbers = #tpu.dot_dimension_numbers<[1], [1], [0], [0], [0, 0, 1, 0], [], []>} : vector<16x32xbf16>, vector<16x32xbf16>, vector<16x16xf32> -> vector<16x16xf32>
      %cst_10 = arith.constant 0.176776692 : f32
      %17 = vector.broadcast %cst_10 : f32 to vector<16x16xf32>
      %18 = arith.mulf %16, %17 : vector<16x16xf32>
      %19 = tpu.iota {dimensions = array<i32: 0>} : vector<16x16xi32>
      %20 = vector.broadcast %3 : i32 to vector<16x16xi32>
      %21 = arith.addi %20, %19 : vector<16x16xi32>
      %22 = tpu.iota {dimensions = array<i32: 1>} : vector<16x16xi32>
      %23 = vector.broadcast %4 : i32 to vector<16x16xi32>
      %24 = arith.addi %23, %22 : vector<16x16xi32>
      %25 = arith.cmpi sle, %24, %21 : vector<16x16xi32>
      %cst_11 = arith.constant -1.000000e+09 : f32
      %26 = vector.broadcast %cst_11 : f32 to vector<16x16xf32>
      %27 = arith.select %25, %18, %26 : vector<16x16xi1>, vector<16x16xf32>
      %c0_12 = arith.constant 0 : index
      %c0_13 = arith.constant 0 : index
      %28 = vector.load %arg7[%c0_12, %c0_13] : memref<16x1xf32, #tpu.memory_space<vmem>>, vector<16x1xf32>
      %cst_14 = arith.constant dense<0xFF800000> : vector<16xf32>
      %29 = vector.multi_reduction <maximumf>, %27, %cst_14 [1] : vector<16x16xf32> to vector<16xf32>
      %30 = vector.shape_cast %29 : vector<16xf32> to vector<16x1xf32>
      %31 = arith.maximumf %28, %30 : vector<16x1xf32>
      %32 = arith.subf %28, %31 : vector<16x1xf32>
      %33 = math.exp %32 : vector<16x1xf32>
      %34 = vector.broadcast %31 : vector<16x1xf32> to vector<16x16xf32>
      %35 = arith.subf %27, %34 : vector<16x16xf32>
      %36 = math.exp %35 : vector<16x16xf32>
      %c0_15 = arith.constant 0 : index
      %c0_16 = arith.constant 0 : index
      %37 = vector.load %arg8[%c0_15, %c0_16] : memref<16x1xf32, #tpu.memory_space<vmem>>, vector<16x1xf32>
      %38 = arith.mulf %33, %37 : vector<16x1xf32>
      %cst_17 = arith.constant dense<0.000000e+00> : vector<16xf32>
      %39 = vector.multi_reduction <add>, %36, %cst_17 [1] : vector<16x16xf32> to vector<16xf32>
      %40 = vector.shape_cast %39 : vector<16xf32> to vector<16x1xf32>
      %41 = arith.addf %38, %40 : vector<16x1xf32>
      %c0_18 = arith.constant 0 : index
      %c0_19 = arith.constant 0 : index
      %42 = vector.load %arg8[%c0_18, %c0_19] : memref<16x1xf32, #tpu.memory_space<vmem>>, vector<16x1xf32>
      tpu.vector_store %arg8[%c0_18, %c0_19], %41 {strides = array<i32>} : memref<16x1xf32, #tpu.memory_space<vmem>>, vector<16x1xf32>,
      %c0_20 = arith.constant 0 : index
      %c0_21 = arith.constant 0 : index
      %43 = vector.load %arg9[%c0_20, %c0_21] : memref<16x32xf32, #tpu.memory_space<vmem>>, vector<16x32xf32>
      %44 = vector.broadcast %33 : vector<16x1xf32> to vector<16x32xf32>
      %45 = arith.mulf %44, %43 : vector<16x32xf32>
      %46 = arith.truncf %36 : vector<16x16xf32> to vector<16x16xbf16>
      %c0_22 = arith.constant 0 : index
      %c0_23 = arith.constant 0 : index
      %c0_24 = arith.constant 0 : index
      %47 = vector.load %arg5[%c0_22, %c0_23, %c0_24] : memref<1x16x32xbf16, #tpu.memory_space<vmem>>, vector<1x16x32xbf16>
      %48 = vector.shape_cast %47 : vector<1x16x32xbf16> to vector<16x32xbf16>
      %cst_25 = arith.constant dense<0.000000e+00> : vector<16x32xf32>
      %49 = tpu.matmul %46, %48, %cst_25 {dimension_numbers = #tpu.dot_dimension_numbers<[1], [0], [0], [1], [0, 0, 1, 1], [], []>} : vector<16x16xbf16>, vector<16x32xbf16>, vector<16x32xf32> -> vector<16x32xf32>
      %50 = arith.addf %45, %49 : vector<16x32xf32>
      %c0_26 = arith.constant 0 : index
      %c0_27 = arith.constant 0 : index
      %51 = vector.load %arg9[%c0_26, %c0_27] : memref<16x32xf32, #tpu.memory_space<vmem>>, vector<16x32xf32>
      tpu.vector_store %arg9[%c0_26, %c0_27], %50 {strides = array<i32>} : memref<16x32xf32, #tpu.memory_space<vmem>>, vector<16x32xf32>,
      %c0_28 = arith.constant 0 : index
      %c0_29 = arith.constant 0 : index
      %52 = vector.load %arg7[%c0_28, %c0_29] : memref<16x1xf32, #tpu.memory_space<vmem>>, vector<16x1xf32>
      tpu.vector_store %arg7[%c0_28, %c0_29], %31 {strides = array<i32>} : memref<16x1xf32, #tpu.memory_space<vmem>>, vector<16x1xf32>,
    } else {
    }
    %c0_i32_3 = arith.constant 0 : i32
    %9 = arith.cmpi eq, %arg2, %c0_i32_3 : i32
    %10 = arith.extui %9 : i1 to i32
    %c0_i32_4 = arith.constant 0 : i32
    %11 = arith.cmpi ne, %10, %c0_i32_4 : i32
    scf.if %11 {
      %c0 = arith.constant 0 : index
      %c0_5 = arith.constant 0 : index
      %12 = vector.load %arg9[%c0, %c0_5] : memref<16x32xf32, #tpu.memory_space<vmem>>, vector<16x32xf32>
      %c0_6 = arith.constant 0 : index
      %c0_7 = arith.constant 0 : index
      %13 = vector.load %arg8[%c0_6, %c0_7] : memref<16x1xf32, #tpu.memory_space<vmem>>, vector<16x1xf32>
      %14 = tpu.reciprocal %13 {approx = true} : vector<16x1xf32> -> vector<16x1xf32>
      %15 = vector.broadcast %14 : vector<16x1xf32> to vector<16x32xf32>
      %16 = arith.mulf %12, %15 : vector<16x32xf32>
      %17 = arith.truncf %16 : vector<16x32xf32> to vector<16x32xbf16>
      %c0_8 = arith.constant 0 : index
      %c0_9 = arith.constant 0 : index
      %c0_10 = arith.constant 0 : index
      %18 = vector.load %arg6[%c0_8, %c0_9, %c0_10] : memref<1x16x32xbf16, #tpu.memory_space<vmem>>, vector<1x16x32xbf16>
      %19 = vector.shape_cast %18 : vector<1x16x32xbf16> to vector<16x32xbf16>
      %20 = vector.shape_cast %17 : vector<16x32xbf16> to vector<1x16x32xbf16>
      tpu.vector_store %arg6[%c0_8, %c0_9, %c0_10], %20 {strides = array<i32>} : memref<1x16x32xbf16, #tpu.memory_space<vmem>>, vector<1x16x32xbf16>,
    } else {
    }
    return
  }
  func.func @transform_0(%arg0: i32, %arg1: i32, %arg2: i32) -> (i32, i32, i32) {
    %c0_i32 = arith.constant 0 : i32
    %c0_i32_0 = arith.constant 0 : i32
    return %arg0, %arg1, %c0_i32 : i32, i32, i32
  }
  func.func @transform_1(%arg0: i32, %arg1: i32, %arg2: i32) -> (i32, i32, i32) {
    %c0_i32 = arith.constant 0 : i32
    %c0_i32_0 = arith.constant 0 : i32
    return %arg0, %arg2, %c0_i32 : i32, i32, i32
  }
  func.func @transform_2(%arg0: i32, %arg1: i32, %arg2: i32) -> (i32, i32, i32) {
    %c0_i32 = arith.constant 0 : i32
    %c0_i32_0 = arith.constant 0 : i32
    return %arg0, %arg2, %c0_i32 : i32, i32, i32
  }
  func.func @transform_3(%arg0: i32, %arg1: i32, %arg2: i32) -> (i32, i32, i32) {
    %c0_i32 = arith.constant 0 : i32
    %c0_i32_0 = arith.constant 0 : i32
    return %arg0, %arg1, %c0_i32 : i32, i32, i32
  }
}

module attributes {stable_mosaic.version = 11 : i64} {
  func.func @_linear_add_ln_kernel(%arg0: i32, %arg1: i32, %arg2: memref<32x128xbf16, #tpu.memory_space<vmem>>, %arg3: memref<128x128xbf16, #tpu.memory_space<vmem>>, %arg4: memref<1x128xf32, #tpu.memory_space<vmem>>, %arg5: memref<32x128xf32, #tpu.memory_space<vmem>>, %arg6: memref<1x128xf32, #tpu.memory_space<vmem>>, %arg7: memref<1x128xf32, #tpu.memory_space<vmem>>, %arg8: memref<32x128xf32, #tpu.memory_space<vmem>>, %arg9: memref<32x128xf32, #tpu.memory_space<vmem>>) attributes {dimension_semantics = [#tpu.dimension_semantics<parallel>, #tpu.dimension_semantics<arbitrary>], iteration_bounds = array<i64: 1, 1>, scalar_prefetch = 0 : i64, scratch_operands = 1 : i64, tpu.core_type = #tpu.core_type<tc>, window_params = [{transform_indices = @transform_0, window_bounds = array<i64: 32, 128>}, {transform_indices = @transform_1, window_bounds = array<i64: 128, 128>}, {pipeline_mode = #tpu.pipeline_mode<synchronous>, transform_indices = @transform_2, window_bounds = array<i64: 1, 128>}, {transform_indices = @transform_3, window_bounds = array<i64: 32, 128>}, {pipeline_mode = #tpu.pipeline_mode<synchronous>, transform_indices = @transform_4, window_bounds = array<i64: 1, 128>}, {pipeline_mode = #tpu.pipeline_mode<synchronous>, transform_indices = @transform_5, window_bounds = array<i64: 1, 128>}, {transform_indices = @transform_6, window_bounds = array<i64: 32, 128>}]} {
    %c0_i32 = arith.constant 0 : i32
    %0 = arith.cmpi eq, %arg1, %c0_i32 : i32
    %1 = arith.extui %0 : i1 to i32
    %c0_i32_0 = arith.constant 0 : i32
    %2 = arith.cmpi ne, %1, %c0_i32_0 : i32
    scf.if %2 {
      %cst_10 = arith.constant 0.000000e+00 : f32
      %12 = vector.broadcast %cst_10 : f32 to vector<32x128xf32>
      %c0_11 = arith.constant 0 : index
      %c0_12 = arith.constant 0 : index
      %13 = vector.load %arg9[%c0_11, %c0_12] : memref<32x128xf32, #tpu.memory_space<vmem>>, vector<32x128xf32>
      tpu.vector_store %arg9[%c0_11, %c0_12], %12 {strides = array<i32>} : memref<32x128xf32, #tpu.memory_space<vmem>>, vector<32x128xf32>,
    } else {
    }
    %c0 = arith.constant 0 : index
    %c0_1 = arith.constant 0 : index
    %3 = vector.load %arg9[%c0, %c0_1] : memref<32x128xf32, #tpu.memory_space<vmem>>, vector<32x128xf32>
    %c0_2 = arith.constant 0 : index
    %c0_3 = arith.constant 0 : index
    %4 = vector.load %arg2[%c0_2, %c0_3] : memref<32x128xbf16, #tpu.memory_space<vmem>>, vector<32x128xbf16>
    %c0_4 = arith.constant 0 : index
    %c0_5 = arith.constant 0 : index
    %5 = vector.load %arg3[%c0_4, %c0_5] : memref<128x128xbf16, #tpu.memory_space<vmem>>, vector<128x128xbf16>
    %cst = arith.constant dense<0.000000e+00> : vector<32x128xf32>
    %6 = tpu.matmul %4, %5, %cst {dimension_numbers = #tpu.dot_dimension_numbers<[1], [0], [0], [1], [0, 0, 1, 1], [], []>} : vector<32x128xbf16>, vector<128x128xbf16>, vector<32x128xf32> -> vector<32x128xf32>
    %7 = arith.addf %3, %6 : vector<32x128xf32>
    %c0_6 = arith.constant 0 : index
    %c0_7 = arith.constant 0 : index
    %8 = vector.load %arg9[%c0_6, %c0_7] : memref<32x128xf32, #tpu.memory_space<vmem>>, vector<32x128xf32>
    tpu.vector_store %arg9[%c0_6, %c0_7], %7 {strides = array<i32>} : memref<32x128xf32, #tpu.memory_space<vmem>>, vector<32x128xf32>,
    %c0_i32_8 = arith.constant 0 : i32
    %9 = arith.cmpi eq, %arg1, %c0_i32_8 : i32
    %10 = arith.extui %9 : i1 to i32
    %c0_i32_9 = arith.constant 0 : i32
    %11 = arith.cmpi ne, %10, %c0_i32_9 : i32
    scf.if %11 {
      %c0_10 = arith.constant 0 : index
      %c0_11 = arith.constant 0 : index
      %12 = vector.load %arg9[%c0_10, %c0_11] : memref<32x128xf32, #tpu.memory_space<vmem>>, vector<32x128xf32>
      %c0_12 = arith.constant 0 : index
      %c0_13 = arith.constant 0 : index
      %13 = vector.load %arg4[%c0_12, %c0_13] : memref<1x128xf32, #tpu.memory_space<vmem>>, vector<1x128xf32>
      %14 = vector.broadcast %13 : vector<1x128xf32> to vector<32x128xf32>
      %15 = arith.addf %12, %14 : vector<32x128xf32>
      %c0_14 = arith.constant 0 : index
      %c0_15 = arith.constant 0 : index
      %16 = vector.load %arg5[%c0_14, %c0_15] : memref<32x128xf32, #tpu.memory_space<vmem>>, vector<32x128xf32>
      %17 = arith.addf %15, %16 : vector<32x128xf32>
      %cst_16 = arith.constant dense<0.000000e+00> : vector<32xf32>
      %18 = vector.multi_reduction <add>, %17, %cst_16 [1] : vector<32x128xf32> to vector<32xf32>
      %19 = vector.shape_cast %18 : vector<32xf32> to vector<32x1xf32>
      %cst_17 = arith.constant 1.280000e+02 : f32
      %20 = vector.broadcast %cst_17 : f32 to vector<32x1xf32>
      %21 = arith.divf %19, %20 : vector<32x1xf32>
      %22 = vector.broadcast %21 : vector<32x1xf32> to vector<32x128xf32>
      %23 = arith.subf %17, %22 : vector<32x128xf32>
      %24 = arith.mulf %23, %23 : vector<32x128xf32>
      %cst_18 = arith.constant dense<0.000000e+00> : vector<32xf32>
      %25 = vector.multi_reduction <add>, %24, %cst_18 [1] : vector<32x128xf32> to vector<32xf32>
      %26 = vector.shape_cast %25 : vector<32xf32> to vector<32x1xf32>
      %cst_19 = arith.constant 1.280000e+02 : f32
      %27 = vector.broadcast %cst_19 : f32 to vector<32x1xf32>
      %28 = arith.divf %26, %27 : vector<32x1xf32>
      %29 = vector.broadcast %21 : vector<32x1xf32> to vector<32x128xf32>
      %30 = arith.subf %17, %29 : vector<32x128xf32>
      %cst_20 = arith.constant 9.99999974E-6 : f32
      %31 = vector.broadcast %cst_20 : f32 to vector<32x1xf32>
      %32 = arith.addf %28, %31 : vector<32x1xf32>
      %33 = math.rsqrt %32 : vector<32x1xf32>
      %34 = vector.broadcast %33 : vector<32x1xf32> to vector<32x128xf32>
      %35 = arith.mulf %30, %34 : vector<32x128xf32>
      %c0_21 = arith.constant 0 : index
      %c0_22 = arith.constant 0 : index
      %36 = vector.load %arg6[%c0_21, %c0_22] : memref<1x128xf32, #tpu.memory_space<vmem>>, vector<1x128xf32>
      %37 = vector.broadcast %36 : vector<1x128xf32> to vector<32x128xf32>
      %38 = arith.mulf %35, %37 : vector<32x128xf32>
      %c0_23 = arith.constant 0 : index
      %c0_24 = arith.constant 0 : index
      %39 = vector.load %arg7[%c0_23, %c0_24] : memref<1x128xf32, #tpu.memory_space<vmem>>, vector<1x128xf32>
      %40 = vector.broadcast %39 : vector<1x128xf32> to vector<32x128xf32>
      %41 = arith.addf %38, %40 : vector<32x128xf32>
      %c0_25 = arith.constant 0 : index
      %c0_26 = arith.constant 0 : index
      %42 = vector.load %arg8[%c0_25, %c0_26] : memref<32x128xf32, #tpu.memory_space<vmem>>, vector<32x128xf32>
      tpu.vector_store %arg8[%c0_25, %c0_26], %41 {strides = array<i32>} : memref<32x128xf32, #tpu.memory_space<vmem>>, vector<32x128xf32>,
    } else {
    }
    return
  }
  func.func @transform_0(%arg0: i32, %arg1: i32) -> (i32, i32) {
    %c0_i32 = arith.constant 0 : i32
    return %arg0, %arg1 : i32, i32
  }
  func.func @transform_1(%arg0: i32, %arg1: i32) -> (i32, i32) {
    %c0_i32 = arith.constant 0 : i32
    %c0_i32_0 = arith.constant 0 : i32
    return %arg1, %c0_i32 : i32, i32
  }
  func.func @transform_2(%arg0: i32, %arg1: i32) -> (i32, i32) {
    %c0_i32 = arith.constant 0 : i32
    %c0_i32_0 = arith.constant 0 : i32
    %c0_i32_1 = arith.constant 0 : i32
    return %c0_i32, %c0_i32_0 : i32, i32
  }
  func.func @transform_3(%arg0: i32, %arg1: i32) -> (i32, i32) {
    %c0_i32 = arith.constant 0 : i32
    %c0_i32_0 = arith.constant 0 : i32
    return %arg0, %c0_i32 : i32, i32
  }
  func.func @transform_4(%arg0: i32, %arg1: i32) -> (i32, i32) {
    %c0_i32 = arith.constant 0 : i32
    %c0_i32_0 = arith.constant 0 : i32
    %c0_i32_1 = arith.constant 0 : i32
    return %c0_i32, %c0_i32_0 : i32, i32
  }
  func.func @transform_5(%arg0: i32, %arg1: i32) -> (i32, i32) {
    %c0_i32 = arith.constant 0 : i32
    %c0_i32_0 = arith.constant 0 : i32
    %c0_i32_1 = arith.constant 0 : i32
    return %c0_i32, %c0_i32_0 : i32, i32
  }
  func.func @transform_6(%arg0: i32, %arg1: i32) -> (i32, i32) {
    %c0_i32 = arith.constant 0 : i32
    %c0_i32_0 = arith.constant 0 : i32
    return %arg0, %c0_i32 : i32, i32
  }
}

module attributes {stable_mosaic.version = 11 : i64} {
  func.func @_matmul_kernel(%arg0: i32, %arg1: i32, %arg2: i32, %arg3: memref<32x128xf32, #tpu.memory_space<vmem>>, %arg4: memref<128x128xbf16, #tpu.memory_space<vmem>>, %arg5: memref<1x128xf32, #tpu.memory_space<vmem>>, %arg6: memref<32x128xbf16, #tpu.memory_space<vmem>>, %arg7: memref<32x128xf32, #tpu.memory_space<vmem>>) attributes {dimension_semantics = [#tpu.dimension_semantics<parallel>, #tpu.dimension_semantics<parallel>, #tpu.dimension_semantics<arbitrary>], iteration_bounds = array<i64: 1, 1, 1>, scalar_prefetch = 0 : i64, scratch_operands = 1 : i64, tpu.core_type = #tpu.core_type<tc>, window_params = [{transform_indices = @transform_0, window_bounds = array<i64: 32, 128>}, {transform_indices = @transform_1, window_bounds = array<i64: 128, 128>}, {transform_indices = @transform_2, window_bounds = array<i64: 1, 128>}, {transform_indices = @transform_3, window_bounds = array<i64: 32, 128>}]} {
    %c0_i32 = arith.constant 0 : i32
    %0 = arith.cmpi eq, %arg2, %c0_i32 : i32
    %1 = arith.extui %0 : i1 to i32
    %c0_i32_0 = arith.constant 0 : i32
    %2 = arith.cmpi ne, %1, %c0_i32_0 : i32
    scf.if %2 {
      %cst_10 = arith.constant 0.000000e+00 : f32
      %13 = vector.broadcast %cst_10 : f32 to vector<32x128xf32>
      %c0_11 = arith.constant 0 : index
      %c0_12 = arith.constant 0 : index
      %14 = vector.load %arg7[%c0_11, %c0_12] : memref<32x128xf32, #tpu.memory_space<vmem>>, vector<32x128xf32>
      tpu.vector_store %arg7[%c0_11, %c0_12], %13 {strides = array<i32>} : memref<32x128xf32, #tpu.memory_space<vmem>>, vector<32x128xf32>,
    } else {
    }
    %c0 = arith.constant 0 : index
    %c0_1 = arith.constant 0 : index
    %3 = vector.load %arg7[%c0, %c0_1] : memref<32x128xf32, #tpu.memory_space<vmem>>, vector<32x128xf32>
    %c0_2 = arith.constant 0 : index
    %c0_3 = arith.constant 0 : index
    %4 = vector.load %arg3[%c0_2, %c0_3] : memref<32x128xf32, #tpu.memory_space<vmem>>, vector<32x128xf32>
    %5 = arith.truncf %4 : vector<32x128xf32> to vector<32x128xbf16>
    %c0_4 = arith.constant 0 : index
    %c0_5 = arith.constant 0 : index
    %6 = vector.load %arg4[%c0_4, %c0_5] : memref<128x128xbf16, #tpu.memory_space<vmem>>, vector<128x128xbf16>
    %cst = arith.constant dense<0.000000e+00> : vector<32x128xf32>
    %7 = tpu.matmul %5, %6, %cst {dimension_numbers = #tpu.dot_dimension_numbers<[1], [0], [0], [1], [0, 0, 1, 1], [], []>} : vector<32x128xbf16>, vector<128x128xbf16>, vector<32x128xf32> -> vector<32x128xf32>
    %8 = arith.addf %3, %7 : vector<32x128xf32>
    %c0_6 = arith.constant 0 : index
    %c0_7 = arith.constant 0 : index
    %9 = vector.load %arg7[%c0_6, %c0_7] : memref<32x128xf32, #tpu.memory_space<vmem>>, vector<32x128xf32>
    tpu.vector_store %arg7[%c0_6, %c0_7], %8 {strides = array<i32>} : memref<32x128xf32, #tpu.memory_space<vmem>>, vector<32x128xf32>,
    %c0_i32_8 = arith.constant 0 : i32
    %10 = arith.cmpi eq, %arg2, %c0_i32_8 : i32
    %11 = arith.extui %10 : i1 to i32
    %c0_i32_9 = arith.constant 0 : i32
    %12 = arith.cmpi ne, %11, %c0_i32_9 : i32
    scf.if %12 {
      %c0_10 = arith.constant 0 : index
      %c0_11 = arith.constant 0 : index
      %13 = vector.load %arg7[%c0_10, %c0_11] : memref<32x128xf32, #tpu.memory_space<vmem>>, vector<32x128xf32>
      %c0_12 = arith.constant 0 : index
      %c0_13 = arith.constant 0 : index
      %14 = vector.load %arg5[%c0_12, %c0_13] : memref<1x128xf32, #tpu.memory_space<vmem>>, vector<1x128xf32>
      %15 = vector.broadcast %14 : vector<1x128xf32> to vector<32x128xf32>
      %16 = arith.addf %13, %15 : vector<32x128xf32>
      %17 = arith.truncf %16 : vector<32x128xf32> to vector<32x128xbf16>
      %c0_14 = arith.constant 0 : index
      %c0_15 = arith.constant 0 : index
      %18 = vector.load %arg6[%c0_14, %c0_15] : memref<32x128xbf16, #tpu.memory_space<vmem>>, vector<32x128xbf16>
      tpu.vector_store %arg6[%c0_14, %c0_15], %17 {strides = array<i32>} : memref<32x128xbf16, #tpu.memory_space<vmem>>, vector<32x128xbf16>,
    } else {
    }
    return
  }
  func.func @transform_0(%arg0: i32, %arg1: i32, %arg2: i32) -> (i32, i32) {
    %c0_i32 = arith.constant 0 : i32
    return %arg0, %arg2 : i32, i32
  }
  func.func @transform_1(%arg0: i32, %arg1: i32, %arg2: i32) -> (i32, i32) {
    %c0_i32 = arith.constant 0 : i32
    return %arg2, %arg1 : i32, i32
  }
  func.func @transform_2(%arg0: i32, %arg1: i32, %arg2: i32) -> (i32, i32) {
    %c0_i32 = arith.constant 0 : i32
    %c0_i32_0 = arith.constant 0 : i32
    return %c0_i32, %arg1 : i32, i32
  }
  func.func @transform_3(%arg0: i32, %arg1: i32, %arg2: i32) -> (i32, i32) {
    %c0_i32 = arith.constant 0 : i32
    return %arg0, %arg1 : i32, i32
  }
}

module attributes {stable_mosaic.version = 11 : i64} {
  func.func @_matmul_kernel(%arg0: i32, %arg1: i32, %arg2: i32, %arg3: memref<64x128xf32, #tpu.memory_space<vmem>>, %arg4: memref<128x256xbf16, #tpu.memory_space<vmem>>, %arg5: memref<1x256xf32, #tpu.memory_space<vmem>>, %arg6: memref<64x256xbf16, #tpu.memory_space<vmem>>, %arg7: memref<64x256xf32, #tpu.memory_space<vmem>>) attributes {dimension_semantics = [#tpu.dimension_semantics<parallel>, #tpu.dimension_semantics<parallel>, #tpu.dimension_semantics<arbitrary>], iteration_bounds = array<i64: 1, 1, 1>, scalar_prefetch = 0 : i64, scratch_operands = 1 : i64, tpu.core_type = #tpu.core_type<tc>, window_params = [{transform_indices = @transform_0, window_bounds = array<i64: 64, 128>}, {transform_indices = @transform_1, window_bounds = array<i64: 128, 256>}, {transform_indices = @transform_2, window_bounds = array<i64: 1, 256>}, {transform_indices = @transform_3, window_bounds = array<i64: 64, 256>}]} {
    %c0_i32 = arith.constant 0 : i32
    %0 = arith.cmpi eq, %arg2, %c0_i32 : i32
    %1 = arith.extui %0 : i1 to i32
    %c0_i32_0 = arith.constant 0 : i32
    %2 = arith.cmpi ne, %1, %c0_i32_0 : i32
    scf.if %2 {
      %cst_10 = arith.constant 0.000000e+00 : f32
      %13 = vector.broadcast %cst_10 : f32 to vector<64x256xf32>
      %c0_11 = arith.constant 0 : index
      %c0_12 = arith.constant 0 : index
      %14 = vector.load %arg7[%c0_11, %c0_12] : memref<64x256xf32, #tpu.memory_space<vmem>>, vector<64x256xf32>
      tpu.vector_store %arg7[%c0_11, %c0_12], %13 {strides = array<i32>} : memref<64x256xf32, #tpu.memory_space<vmem>>, vector<64x256xf32>,
    } else {
    }
    %c0 = arith.constant 0 : index
    %c0_1 = arith.constant 0 : index
    %3 = vector.load %arg7[%c0, %c0_1] : memref<64x256xf32, #tpu.memory_space<vmem>>, vector<64x256xf32>
    %c0_2 = arith.constant 0 : index
    %c0_3 = arith.constant 0 : index
    %4 = vector.load %arg3[%c0_2, %c0_3] : memref<64x128xf32, #tpu.memory_space<vmem>>, vector<64x128xf32>
    %5 = arith.truncf %4 : vector<64x128xf32> to vector<64x128xbf16>
    %c0_4 = arith.constant 0 : index
    %c0_5 = arith.constant 0 : index
    %6 = vector.load %arg4[%c0_4, %c0_5] : memref<128x256xbf16, #tpu.memory_space<vmem>>, vector<128x256xbf16>
    %cst = arith.constant dense<0.000000e+00> : vector<64x256xf32>
    %7 = tpu.matmul %5, %6, %cst {dimension_numbers = #tpu.dot_dimension_numbers<[1], [0], [0], [1], [0, 0, 1, 1], [], []>} : vector<64x128xbf16>, vector<128x256xbf16>, vector<64x256xf32> -> vector<64x256xf32>
    %8 = arith.addf %3, %7 : vector<64x256xf32>
    %c0_6 = arith.constant 0 : index
    %c0_7 = arith.constant 0 : index
    %9 = vector.load %arg7[%c0_6, %c0_7] : memref<64x256xf32, #tpu.memory_space<vmem>>, vector<64x256xf32>
    tpu.vector_store %arg7[%c0_6, %c0_7], %8 {strides = array<i32>} : memref<64x256xf32, #tpu.memory_space<vmem>>, vector<64x256xf32>,
    %c0_i32_8 = arith.constant 0 : i32
    %10 = arith.cmpi eq, %arg2, %c0_i32_8 : i32
    %11 = arith.extui %10 : i1 to i32
    %c0_i32_9 = arith.constant 0 : i32
    %12 = arith.cmpi ne, %11, %c0_i32_9 : i32
    scf.if %12 {
      %c0_10 = arith.constant 0 : index
      %c0_11 = arith.constant 0 : index
      %13 = vector.load %arg7[%c0_10, %c0_11] : memref<64x256xf32, #tpu.memory_space<vmem>>, vector<64x256xf32>
      %c0_12 = arith.constant 0 : index
      %c0_13 = arith.constant 0 : index
      %14 = vector.load %arg5[%c0_12, %c0_13] : memref<1x256xf32, #tpu.memory_space<vmem>>, vector<1x256xf32>
      %15 = vector.broadcast %14 : vector<1x256xf32> to vector<64x256xf32>
      %16 = arith.addf %13, %15 : vector<64x256xf32>
      %17 = arith.truncf %16 : vector<64x256xf32> to vector<64x256xbf16>
      %c0_14 = arith.constant 0 : index
      %c0_15 = arith.constant 0 : index
      %18 = vector.load %arg6[%c0_14, %c0_15] : memref<64x256xbf16, #tpu.memory_space<vmem>>, vector<64x256xbf16>
      tpu.vector_store %arg6[%c0_14, %c0_15], %17 {strides = array<i32>} : memref<64x256xbf16, #tpu.memory_space<vmem>>, vector<64x256xbf16>,
    } else {
    }
    return
  }
  func.func @transform_0(%arg0: i32, %arg1: i32, %arg2: i32) -> (i32, i32) {
    %c0_i32 = arith.constant 0 : i32
    return %arg0, %arg2 : i32, i32
  }
  func.func @transform_1(%arg0: i32, %arg1: i32, %arg2: i32) -> (i32, i32) {
    %c0_i32 = arith.constant 0 : i32
    return %arg2, %arg1 : i32, i32
  }
  func.func @transform_2(%arg0: i32, %arg1: i32, %arg2: i32) -> (i32, i32) {
    %c0_i32 = arith.constant 0 : i32
    %c0_i32_0 = arith.constant 0 : i32
    return %c0_i32, %arg1 : i32, i32
  }
  func.func @transform_3(%arg0: i32, %arg1: i32, %arg2: i32) -> (i32, i32) {
    %c0_i32 = arith.constant 0 : i32
    return %arg0, %arg1 : i32, i32
  }
}

module attributes {stable_mosaic.version = 11 : i64} {
  func.func @_enc_attn_kernel(%arg0: i32, %arg1: i32, %arg2: i32, %arg3: memref<1x1x16x32xbf16, #tpu.memory_space<vmem>>, %arg4: memref<1x1x32x32xbf16, #tpu.memory_space<vmem>>, %arg5: memref<1x1x32x32xbf16, #tpu.memory_space<vmem>>, %arg6: memref<1x1x32xf32, #tpu.memory_space<vmem>>, %arg7: memref<1x1x16x32xbf16, #tpu.memory_space<vmem>>, %arg8: memref<1x16x32xf32, #tpu.memory_space<vmem>>) attributes {dimension_semantics = [#tpu.dimension_semantics<parallel>, #tpu.dimension_semantics<parallel>, #tpu.dimension_semantics<arbitrary>], iteration_bounds = array<i64: 2, 1, 4>, scalar_prefetch = 0 : i64, scratch_operands = 0 : i64, tpu.core_type = #tpu.core_type<tc>, window_params = [{transform_indices = @transform_0, window_bounds = array<i64: 1, 1, 16, 32>}, {transform_indices = @transform_1, window_bounds = array<i64: 1, 1, 32, 32>}, {transform_indices = @transform_2, window_bounds = array<i64: 1, 1, 32, 32>}, {transform_indices = @transform_3, window_bounds = array<i64: 1, 1, 32>}, {transform_indices = @transform_4, window_bounds = array<i64: 1, 1, 16, 32>}, {transform_indices = @transform_5, window_bounds = array<i64: 1, 16, 32>}]} {
    %c0 = arith.constant 0 : index
    %c0_0 = arith.constant 0 : index
    %c0_1 = arith.constant 0 : index
    %c0_2 = arith.constant 0 : index
    %0 = vector.load %arg3[%c0, %c0_0, %c0_1, %c0_2] : memref<1x1x16x32xbf16, #tpu.memory_space<vmem>>, vector<1x1x16x32xbf16>
    %1 = vector.shape_cast %0 : vector<1x1x16x32xbf16> to vector<16x32xbf16>
    %c0_3 = arith.constant 0 : index
    %c0_4 = arith.constant 0 : index
    %c0_5 = arith.constant 0 : index
    %c0_6 = arith.constant 0 : index
    %2 = vector.load %arg4[%c0_3, %c0_4, %c0_5, %c0_6] : memref<1x1x32x32xbf16, #tpu.memory_space<vmem>>, vector<1x1x32x32xbf16>
    %3 = vector.shape_cast %2 : vector<1x1x32x32xbf16> to vector<32x32xbf16>
    %c0_7 = arith.constant 0 : index
    %c0_8 = arith.constant 0 : index
    %c0_9 = arith.constant 0 : index
    %c0_10 = arith.constant 0 : index
    %4 = vector.load %arg5[%c0_7, %c0_8, %c0_9, %c0_10] : memref<1x1x32x32xbf16, #tpu.memory_space<vmem>>, vector<1x1x32x32xbf16>
    %5 = vector.shape_cast %4 : vector<1x1x32x32xbf16> to vector<32x32xbf16>
    %cst = arith.constant dense<0.000000e+00> : vector<16x32xf32>
    %6 = tpu.matmul %1, %3, %cst {dimension_numbers = #tpu.dot_dimension_numbers<[1], [1], [0], [0], [0, 0, 1, 0], [], []>} : vector<16x32xbf16>, vector<32x32xbf16>, vector<16x32xf32> -> vector<16x32xf32>
    %cst_11 = arith.constant 0.176776692 : f32
    %7 = vector.broadcast %cst_11 : f32 to vector<16x32xf32>
    %8 = arith.mulf %6, %7 : vector<16x32xf32>
    %c0_12 = arith.constant 0 : index
    %c0_13 = arith.constant 0 : index
    %c0_14 = arith.constant 0 : index
    %9 = vector.load %arg6[%c0_12, %c0_13, %c0_14] : memref<1x1x32xf32, #tpu.memory_space<vmem>>, vector<1x1x32xf32>
    %10 = vector.shape_cast %9 : vector<1x1x32xf32> to vector<1x32xf32>
    %11 = vector.broadcast %10 : vector<1x32xf32> to vector<16x32xf32>
    %12 = arith.addf %8, %11 : vector<16x32xf32>
    %cst_15 = arith.constant dense<0xFF800000> : vector<16xf32>
    %13 = vector.multi_reduction <maximumf>, %12, %cst_15 [1] : vector<16x32xf32> to vector<16xf32>
    %14 = vector.shape_cast %13 : vector<16xf32> to vector<16x1xf32>
    %15 = vector.broadcast %14 : vector<16x1xf32> to vector<16x32xf32>
    %16 = arith.subf %12, %15 : vector<16x32xf32>
    %17 = math.exp %16 : vector<16x32xf32>
    %cst_16 = arith.constant dense<0.000000e+00> : vector<16xf32>
    %18 = vector.multi_reduction <add>, %17, %cst_16 [1] : vector<16x32xf32> to vector<16xf32>
    %19 = vector.shape_cast %18 : vector<16xf32> to vector<16x1xf32>
    %20 = tpu.reciprocal %19 {approx = true} : vector<16x1xf32> -> vector<16x1xf32>
    %21 = vector.broadcast %20 : vector<16x1xf32> to vector<16x32xf32>
    %22 = arith.mulf %17, %21 : vector<16x32xf32>
    %23 = arith.truncf %22 : vector<16x32xf32> to vector<16x32xbf16>
    %cst_17 = arith.constant dense<0.000000e+00> : vector<16x32xf32>
    %24 = tpu.matmul %23, %5, %cst_17 {dimension_numbers = #tpu.dot_dimension_numbers<[1], [0], [0], [1], [0, 0, 1, 1], [], []>} : vector<16x32xbf16>, vector<32x32xbf16>, vector<16x32xf32> -> vector<16x32xf32>
    %25 = arith.truncf %24 : vector<16x32xf32> to vector<16x32xbf16>
    %c0_18 = arith.constant 0 : index
    %c0_19 = arith.constant 0 : index
    %c0_20 = arith.constant 0 : index
    %c0_21 = arith.constant 0 : index
    %26 = vector.load %arg7[%c0_18, %c0_19, %c0_20, %c0_21] : memref<1x1x16x32xbf16, #tpu.memory_space<vmem>>, vector<1x1x16x32xbf16>
    %27 = vector.shape_cast %26 : vector<1x1x16x32xbf16> to vector<16x32xbf16>
    %28 = vector.shape_cast %25 : vector<16x32xbf16> to vector<1x1x16x32xbf16>
    tpu.vector_store %arg7[%c0_18, %c0_19, %c0_20, %c0_21], %28 {strides = array<i32>} : memref<1x1x16x32xbf16, #tpu.memory_space<vmem>>, vector<1x1x16x32xbf16>,
    %cst_22 = arith.constant 2.500000e-01 : f32
    %29 = vector.broadcast %cst_22 : f32 to vector<16x32xf32>
    %30 = arith.mulf %22, %29 : vector<16x32xf32>
    %c0_i32 = arith.constant 0 : i32
    %31 = arith.cmpi eq, %arg2, %c0_i32 : i32
    %32 = arith.extui %31 : i1 to i32
    %c0_i32_23 = arith.constant 0 : i32
    %33 = arith.cmpi ne, %32, %c0_i32_23 : i32
    scf.if %33 {
      %c0_26 = arith.constant 0 : index
      %c0_27 = arith.constant 0 : index
      %c0_28 = arith.constant 0 : index
      %37 = vector.load %arg8[%c0_26, %c0_27, %c0_28] : memref<1x16x32xf32, #tpu.memory_space<vmem>>, vector<1x16x32xf32>
      %38 = vector.shape_cast %37 : vector<1x16x32xf32> to vector<16x32xf32>
      %39 = vector.shape_cast %30 : vector<16x32xf32> to vector<1x16x32xf32>
      tpu.vector_store %arg8[%c0_26, %c0_27, %c0_28], %39 {strides = array<i32>} : memref<1x16x32xf32, #tpu.memory_space<vmem>>, vector<1x16x32xf32>,
    } else {
    }
    %c0_i32_24 = arith.constant 0 : i32
    %34 = arith.cmpi ne, %arg2, %c0_i32_24 : i32
    %35 = arith.extui %34 : i1 to i32
    %c0_i32_25 = arith.constant 0 : i32
    %36 = arith.cmpi ne, %35, %c0_i32_25 : i32
    scf.if %36 {
      %c0_26 = arith.constant 0 : index
      %c0_27 = arith.constant 0 : index
      %c0_28 = arith.constant 0 : index
      %37 = vector.load %arg8[%c0_26, %c0_27, %c0_28] : memref<1x16x32xf32, #tpu.memory_space<vmem>>, vector<1x16x32xf32>
      %38 = vector.shape_cast %37 : vector<1x16x32xf32> to vector<16x32xf32>
      %39 = arith.addf %38, %30 : vector<16x32xf32>
      %c0_29 = arith.constant 0 : index
      %c0_30 = arith.constant 0 : index
      %c0_31 = arith.constant 0 : index
      %40 = vector.load %arg8[%c0_29, %c0_30, %c0_31] : memref<1x16x32xf32, #tpu.memory_space<vmem>>, vector<1x16x32xf32>
      %41 = vector.shape_cast %40 : vector<1x16x32xf32> to vector<16x32xf32>
      %42 = vector.shape_cast %39 : vector<16x32xf32> to vector<1x16x32xf32>
      tpu.vector_store %arg8[%c0_29, %c0_30, %c0_31], %42 {strides = array<i32>} : memref<1x16x32xf32, #tpu.memory_space<vmem>>, vector<1x16x32xf32>,
    } else {
    }
    return
  }
  func.func @transform_0(%arg0: i32, %arg1: i32, %arg2: i32) -> (i32, i32, i32, i32) {
    %c0_i32 = arith.constant 0 : i32
    %c0_i32_0 = arith.constant 0 : i32
    return %arg0, %arg2, %arg1, %c0_i32 : i32, i32, i32, i32
  }
  func.func @transform_1(%arg0: i32, %arg1: i32, %arg2: i32) -> (i32, i32, i32, i32) {
    %c0_i32 = arith.constant 0 : i32
    %c0_i32_0 = arith.constant 0 : i32
    %c0_i32_1 = arith.constant 0 : i32
    return %arg0, %arg2, %c0_i32, %c0_i32_0 : i32, i32, i32, i32
  }
  func.func @transform_2(%arg0: i32, %arg1: i32, %arg2: i32) -> (i32, i32, i32, i32) {
    %c0_i32 = arith.constant 0 : i32
    %c0_i32_0 = arith.constant 0 : i32
    %c0_i32_1 = arith.constant 0 : i32
    return %arg0, %arg2, %c0_i32, %c0_i32_0 : i32, i32, i32, i32
  }
  func.func @transform_3(%arg0: i32, %arg1: i32, %arg2: i32) -> (i32, i32, i32) {
    %c0_i32 = arith.constant 0 : i32
    %c0_i32_0 = arith.constant 0 : i32
    %c0_i32_1 = arith.constant 0 : i32
    return %arg0, %c0_i32, %c0_i32_0 : i32, i32, i32
  }
  func.func @transform_4(%arg0: i32, %arg1: i32, %arg2: i32) -> (i32, i32, i32, i32) {
    %c0_i32 = arith.constant 0 : i32
    %c0_i32_0 = arith.constant 0 : i32
    return %arg0, %arg2, %arg1, %c0_i32 : i32, i32, i32, i32
  }
  func.func @transform_5(%arg0: i32, %arg1: i32, %arg2: i32) -> (i32, i32, i32) {
    %c0_i32 = arith.constant 0 : i32
    %c0_i32_0 = arith.constant 0 : i32
    return %arg0, %arg1, %c0_i32 : i32, i32, i32
  }
}

module attributes {stable_mosaic.version = 11 : i64} {
  func.func @_ffn_kernel(%arg0: i32, %arg1: i32, %arg2: memref<32x128xf32, #tpu.memory_space<vmem>>, %arg3: memref<128x256xbf16, #tpu.memory_space<vmem>>, %arg4: memref<1x256xf32, #tpu.memory_space<vmem>>, %arg5: memref<256x128xbf16, #tpu.memory_space<vmem>>, %arg6: memref<1x128xf32, #tpu.memory_space<vmem>>, %arg7: memref<1x128xf32, #tpu.memory_space<vmem>>, %arg8: memref<1x128xf32, #tpu.memory_space<vmem>>, %arg9: memref<32x128xf32, #tpu.memory_space<vmem>>, %arg10: memref<32x128xf32, #tpu.memory_space<vmem>>) attributes {dimension_semantics = [#tpu.dimension_semantics<parallel>, #tpu.dimension_semantics<arbitrary>], iteration_bounds = array<i64: 1, 1>, scalar_prefetch = 0 : i64, scratch_operands = 1 : i64, tpu.core_type = #tpu.core_type<tc>, window_params = [{transform_indices = @transform_0, window_bounds = array<i64: 32, 128>}, {transform_indices = @transform_1, window_bounds = array<i64: 128, 256>}, {transform_indices = @transform_2, window_bounds = array<i64: 1, 256>}, {transform_indices = @transform_3, window_bounds = array<i64: 256, 128>}, {pipeline_mode = #tpu.pipeline_mode<synchronous>, transform_indices = @transform_4, window_bounds = array<i64: 1, 128>}, {pipeline_mode = #tpu.pipeline_mode<synchronous>, transform_indices = @transform_5, window_bounds = array<i64: 1, 128>}, {pipeline_mode = #tpu.pipeline_mode<synchronous>, transform_indices = @transform_6, window_bounds = array<i64: 1, 128>}, {transform_indices = @transform_7, window_bounds = array<i64: 32, 128>}]} {
    %c0_i32 = arith.constant 0 : i32
    %0 = arith.cmpi eq, %arg1, %c0_i32 : i32
    %1 = arith.extui %0 : i1 to i32
    %c0_i32_0 = arith.constant 0 : i32
    %2 = arith.cmpi ne, %1, %c0_i32_0 : i32
    scf.if %2 {
      %cst_16 = arith.constant 0.000000e+00 : f32
      %21 = vector.broadcast %cst_16 : f32 to vector<32x128xf32>
      %c0_17 = arith.constant 0 : index
      %c0_18 = arith.constant 0 : index
      %22 = vector.load %arg10[%c0_17, %c0_18] : memref<32x128xf32, #tpu.memory_space<vmem>>, vector<32x128xf32>
      tpu.vector_store %arg10[%c0_17, %c0_18], %21 {strides = array<i32>} : memref<32x128xf32, #tpu.memory_space<vmem>>, vector<32x128xf32>,
    } else {
    }
    %c0 = arith.constant 0 : index
    %c0_1 = arith.constant 0 : index
    %3 = vector.load %arg2[%c0, %c0_1] : memref<32x128xf32, #tpu.memory_space<vmem>>, vector<32x128xf32>
    %4 = arith.truncf %3 : vector<32x128xf32> to vector<32x128xbf16>
    %c0_2 = arith.constant 0 : index
    %c0_3 = arith.constant 0 : index
    %5 = vector.load %arg3[%c0_2, %c0_3] : memref<128x256xbf16, #tpu.memory_space<vmem>>, vector<128x256xbf16>
    %cst = arith.constant dense<0.000000e+00> : vector<32x256xf32>
    %6 = tpu.matmul %4, %5, %cst {dimension_numbers = #tpu.dot_dimension_numbers<[1], [0], [0], [1], [0, 0, 1, 1], [], []>} : vector<32x128xbf16>, vector<128x256xbf16>, vector<32x256xf32> -> vector<32x256xf32>
    %c0_4 = arith.constant 0 : index
    %c0_5 = arith.constant 0 : index
    %7 = vector.load %arg4[%c0_4, %c0_5] : memref<1x256xf32, #tpu.memory_space<vmem>>, vector<1x256xf32>
    %8 = vector.broadcast %7 : vector<1x256xf32> to vector<32x256xf32>
    %9 = arith.addf %6, %8 : vector<32x256xf32>
    %cst_6 = arith.constant 0.000000e+00 : f32
    %10 = vector.broadcast %cst_6 : f32 to vector<32x256xf32>
    %11 = arith.maximumf %9, %10 : vector<32x256xf32>
    %c0_7 = arith.constant 0 : index
    %c0_8 = arith.constant 0 : index
    %12 = vector.load %arg10[%c0_7, %c0_8] : memref<32x128xf32, #tpu.memory_space<vmem>>, vector<32x128xf32>
    %13 = arith.truncf %11 : vector<32x256xf32> to vector<32x256xbf16>
    %c0_9 = arith.constant 0 : index
    %c0_10 = arith.constant 0 : index
    %14 = vector.load %arg5[%c0_9, %c0_10] : memref<256x128xbf16, #tpu.memory_space<vmem>>, vector<256x128xbf16>
    %cst_11 = arith.constant dense<0.000000e+00> : vector<32x128xf32>
    %15 = tpu.matmul %13, %14, %cst_11 {dimension_numbers = #tpu.dot_dimension_numbers<[1], [0], [0], [1], [0, 0, 1, 1], [], []>} : vector<32x256xbf16>, vector<256x128xbf16>, vector<32x128xf32> -> vector<32x128xf32>
    %16 = arith.addf %12, %15 : vector<32x128xf32>
    %c0_12 = arith.constant 0 : index
    %c0_13 = arith.constant 0 : index
    %17 = vector.load %arg10[%c0_12, %c0_13] : memref<32x128xf32, #tpu.memory_space<vmem>>, vector<32x128xf32>
    tpu.vector_store %arg10[%c0_12, %c0_13], %16 {strides = array<i32>} : memref<32x128xf32, #tpu.memory_space<vmem>>, vector<32x128xf32>,
    %c0_i32_14 = arith.constant 0 : i32
    %18 = arith.cmpi eq, %arg1, %c0_i32_14 : i32
    %19 = arith.extui %18 : i1 to i32
    %c0_i32_15 = arith.constant 0 : i32
    %20 = arith.cmpi ne, %19, %c0_i32_15 : i32
    scf.if %20 {
      %c0_16 = arith.constant 0 : index
      %c0_17 = arith.constant 0 : index
      %21 = vector.load %arg10[%c0_16, %c0_17] : memref<32x128xf32, #tpu.memory_space<vmem>>, vector<32x128xf32>
      %c0_18 = arith.constant 0 : index
      %c0_19 = arith.constant 0 : index
      %22 = vector.load %arg6[%c0_18, %c0_19] : memref<1x128xf32, #tpu.memory_space<vmem>>, vector<1x128xf32>
      %23 = vector.broadcast %22 : vector<1x128xf32> to vector<32x128xf32>
      %24 = arith.addf %21, %23 : vector<32x128xf32>
      %c0_20 = arith.constant 0 : index
      %c0_21 = arith.constant 0 : index
      %25 = vector.load %arg2[%c0_20, %c0_21] : memref<32x128xf32, #tpu.memory_space<vmem>>, vector<32x128xf32>
      %26 = arith.addf %24, %25 : vector<32x128xf32>
      %cst_22 = arith.constant dense<0.000000e+00> : vector<32xf32>
      %27 = vector.multi_reduction <add>, %26, %cst_22 [1] : vector<32x128xf32> to vector<32xf32>
      %28 = vector.shape_cast %27 : vector<32xf32> to vector<32x1xf32>
      %cst_23 = arith.constant 1.280000e+02 : f32
      %29 = vector.broadcast %cst_23 : f32 to vector<32x1xf32>
      %30 = arith.divf %28, %29 : vector<32x1xf32>
      %31 = vector.broadcast %30 : vector<32x1xf32> to vector<32x128xf32>
      %32 = arith.subf %26, %31 : vector<32x128xf32>
      %33 = arith.mulf %32, %32 : vector<32x128xf32>
      %cst_24 = arith.constant dense<0.000000e+00> : vector<32xf32>
      %34 = vector.multi_reduction <add>, %33, %cst_24 [1] : vector<32x128xf32> to vector<32xf32>
      %35 = vector.shape_cast %34 : vector<32xf32> to vector<32x1xf32>
      %cst_25 = arith.constant 1.280000e+02 : f32
      %36 = vector.broadcast %cst_25 : f32 to vector<32x1xf32>
      %37 = arith.divf %35, %36 : vector<32x1xf32>
      %38 = vector.broadcast %30 : vector<32x1xf32> to vector<32x128xf32>
      %39 = arith.subf %26, %38 : vector<32x128xf32>
      %cst_26 = arith.constant 9.99999974E-6 : f32
      %40 = vector.broadcast %cst_26 : f32 to vector<32x1xf32>
      %41 = arith.addf %37, %40 : vector<32x1xf32>
      %42 = math.rsqrt %41 : vector<32x1xf32>
      %43 = vector.broadcast %42 : vector<32x1xf32> to vector<32x128xf32>
      %44 = arith.mulf %39, %43 : vector<32x128xf32>
      %c0_27 = arith.constant 0 : index
      %c0_28 = arith.constant 0 : index
      %45 = vector.load %arg7[%c0_27, %c0_28] : memref<1x128xf32, #tpu.memory_space<vmem>>, vector<1x128xf32>
      %46 = vector.broadcast %45 : vector<1x128xf32> to vector<32x128xf32>
      %47 = arith.mulf %44, %46 : vector<32x128xf32>
      %c0_29 = arith.constant 0 : index
      %c0_30 = arith.constant 0 : index
      %48 = vector.load %arg8[%c0_29, %c0_30] : memref<1x128xf32, #tpu.memory_space<vmem>>, vector<1x128xf32>
      %49 = vector.broadcast %48 : vector<1x128xf32> to vector<32x128xf32>
      %50 = arith.addf %47, %49 : vector<32x128xf32>
      %c0_31 = arith.constant 0 : index
      %c0_32 = arith.constant 0 : index
      %51 = vector.load %arg9[%c0_31, %c0_32] : memref<32x128xf32, #tpu.memory_space<vmem>>, vector<32x128xf32>
      tpu.vector_store %arg9[%c0_31, %c0_32], %50 {strides = array<i32>} : memref<32x128xf32, #tpu.memory_space<vmem>>, vector<32x128xf32>,
    } else {
    }
    return
  }
  func.func @transform_0(%arg0: i32, %arg1: i32) -> (i32, i32) {
    %c0_i32 = arith.constant 0 : i32
    %c0_i32_0 = arith.constant 0 : i32
    return %arg0, %c0_i32 : i32, i32
  }
  func.func @transform_1(%arg0: i32, %arg1: i32) -> (i32, i32) {
    %c0_i32 = arith.constant 0 : i32
    %c0_i32_0 = arith.constant 0 : i32
    return %c0_i32, %arg1 : i32, i32
  }
  func.func @transform_2(%arg0: i32, %arg1: i32) -> (i32, i32) {
    %c0_i32 = arith.constant 0 : i32
    %c0_i32_0 = arith.constant 0 : i32
    return %c0_i32, %arg1 : i32, i32
  }
  func.func @transform_3(%arg0: i32, %arg1: i32) -> (i32, i32) {
    %c0_i32 = arith.constant 0 : i32
    %c0_i32_0 = arith.constant 0 : i32
    return %arg1, %c0_i32 : i32, i32
  }
  func.func @transform_4(%arg0: i32, %arg1: i32) -> (i32, i32) {
    %c0_i32 = arith.constant 0 : i32
    %c0_i32_0 = arith.constant 0 : i32
    %c0_i32_1 = arith.constant 0 : i32
    return %c0_i32, %c0_i32_0 : i32, i32
  }
  func.func @transform_5(%arg0: i32, %arg1: i32) -> (i32, i32) {
    %c0_i32 = arith.constant 0 : i32
    %c0_i32_0 = arith.constant 0 : i32
    %c0_i32_1 = arith.constant 0 : i32
    return %c0_i32, %c0_i32_0 : i32, i32
  }
  func.func @transform_6(%arg0: i32, %arg1: i32) -> (i32, i32) {
    %c0_i32 = arith.constant 0 : i32
    %c0_i32_0 = arith.constant 0 : i32
    %c0_i32_1 = arith.constant 0 : i32
    return %c0_i32, %c0_i32_0 : i32, i32
  }
  func.func @transform_7(%arg0: i32, %arg1: i32) -> (i32, i32) {
    %c0_i32 = arith.constant 0 : i32
    %c0_i32_0 = arith.constant 0 : i32
    return %arg0, %c0_i32 : i32, i32
  }
}

</mosaic_0001>

<llo_original>
// kernel: transformer_decoder_layer.8
$region0: #{transformer_decoder_layer.8}
  #allocation0 [shape = 'u32[]', space=smem, size = 0x4, offset = 0x4, fixed_abs, tag = 'smem constant byte address 0x4 - core index']
  #allocation1 [shape = 'u32[144,128]{1,0:T(1,128)}', space=vmem, size = 0x12000, scoped, tag = 'internal scratch']
  #allocation2 [shape = 'f32[32,128]{1,0:T(8,128)}', space=vmem, size = 0x4000, scoped, tag = 'scratch operand']
  %s0 = inlined_call_operand.vmem [shape: f32[32,128], index: 0, kind: input, shape index: {}]
  %s1 = inlined_call_operand.hbm [shape: bf16[128,384], index: 1, kind: input, shape index: {}]
  %s2 = inlined_call_operand.vmem [shape: f32[1,384], index: 2, kind: input, shape index: {}]
  %s3 = inlined_call_operand.vmem [shape: bf16[32,384], index: 3, kind: output, shape index: {}]
  %s4 = sld [smem:[#allocation0]]
  $region94: #{transformer_decoder_layer.8} parent=0
    _
  %s6 = ssub.s32 1, %s4
  %s7 = scalar_select 0, %s6, %s4
  $region1: #{transformer_decoder_layer.8} parent=0
    #allocation3 [shape = 'u8[65536]{0}', space=vmem, size = 0x10000, scoped, tag = 'input window, operand 1']
    #allocation4 [shape = 's32[2]{0}', space=sflag, size = 0x8, scoped, tag = 'scoped memory for transformer_decoder_layer.8']
    #allocation5 [shape = 'u8[16384]{0}', space=vmem, size = 0x4000, scoped, tag = 'output window, operand 0']
    %8 = vsyncpa [#allocation4], 0
    %s9 = scalar_lea.sflag [#allocation4], 1
    %10 = vsyncpa %s9, 0
    loop: start=0, step=1, limit=5
    $region2: #{transformer_decoder_layer.8} parent=1 // loop_pre_header
      _
    $region3: #{transformer_decoder_layer.8} parent=1 // loop_header
      %s12 = sphi 0, %s16
      %p13 = scmp.ge.s32.totalorder %s12, 5
      %s19 = sphi 0, %s38
      %s20 = sphi 0, %s34
      %s21 = sphi 0, %s30
      %s22 = sphi 0, %s19
      %s23 = sphi 0, %s20
      %s24 = sphi 0, %s21
      %s25 = sphi 0, %s22
      %s26 = sphi 0, %s23
      %s27 = sphi 0, %s24
      %s43 = sphi 0, %s45
      %s46 = sphi 0, %s43
      %s47 = sphi 0, %s46
      %s63 = sphi 0, %s47
      %s71 = sphi 0, %s73
      %s74 = sphi 0, %s71
      %s75 = sphi 0, %s74
      %s91 = sphi 0, %s75
      %s97 = sphi 0, %s99
      %s100 = sphi 0, %s97
      %s101 = sphi 0, %s100
      %s117 = sphi 0, %s101
      %s125 = sphi 0, %s127
      %s128 = sphi 0, %s125
      %s129 = sphi 0, %s128
      %s145 = sphi 0, %s129
    $region4: #{transformer_decoder_layer.8} parent=1 // loop_header_branch
      %15 = sbr.rel (%p13) target = $region8
    $region5: #{transformer_decoder_layer.8} parent=1 // loop_body
      %s17 = ssub.s32 %s12, 1
      %s18 = ssub.s32 %s12, 2
      %s28 = sadd.s32 1, %s21
      %p29 = scmp.ge.s32.totalorder %s28, 1
      %s30 = scalar_select %p29, 0, %s28
      %s31 = sadd.s32 1, %s20
      %s32 = scalar_select %p29, %s31, %s20
      %p33 = scmp.ge.s32.totalorder %s32, 3
      %s34 = scalar_select %p33, 0, %s32
      %s35 = sadd.s32 1, %s19
      %s36 = scalar_select %p33, %s35, %s19
      %p37 = scmp.ge.s32.totalorder %s36, 1
      %s38 = scalar_select %p37, 0, %s36
      %s39 = ssub.s32 %s19, %s38
      %s40 = ssub.s32 %s21, %s30
      %s41 = sor.u32 %s39, %s40
      %p42 = scmp.eq.s32.totalorder %s41, 0
      %s44 = sadd.s32 %s43, 1
      %s45 = scalar_select %p42, %s43, %s44
      %p48 = pneg %p42
      %p49 = scmp.eq.s32.totalorder %s12, 2
      %p50 = por %p48, %p49
      %p51 = scmp.ne.s32.totalorder %s43, %s46
      %p52 = scmp.eq.s32.totalorder %s12, 0
      %p53 = por %p51, %p52
      %p54 = scmp.ne.s32.totalorder %s43, %s46
      %p55 = scmp.eq.s32.totalorder %s17, 2
      %p56 = por %p54, %p55
      %p57 = scmp.ne.s32.totalorder %s46, %s47
      %p58 = scmp.eq.s32.totalorder %s17, 0
      %p59 = por %p57, %p58
      %p60 = scmp.ne.s32.totalorder %s46, %s47
      %p61 = scmp.eq.s32.totalorder %s18, 2
      %p62 = por %p60, %p61
      %p64 = scmp.ne.s32.totalorder %s47, %s63
      %p65 = scmp.eq.s32.totalorder %s18, 0
      %p66 = por %p64, %p65
      %s67 = ssub.s32 %s21, %s30
      %s68 = ssub.s32 %s20, %s34
      %s69 = sor.u32 %s67, %s68
      %p70 = scmp.eq.s32.totalorder %s69, 0
      %s72 = sadd.s32 %s71, 1
      %s73 = scalar_select %p70, %s71, %s72
      %p76 = pneg %p70
      %p77 = scmp.eq.s32.totalorder %s12, 2
      %p78 = por %p76, %p77
      %p79 = scmp.ne.s32.totalorder %s71, %s74
      %p80 = scmp.eq.s32.totalorder %s12, 0
      %p81 = por %p79, %p80
      %p82 = scmp.ne.s32.totalorder %s71, %s74
      %p83 = scmp.eq.s32.totalorder %s17, 2
      %p84 = por %p82, %p83
      %p85 = scmp.ne.s32.totalorder %s74, %s75
      %p86 = scmp.eq.s32.totalorder %s17, 0
      %p87 = por %p85, %p86
      %p88 = scmp.ne.s32.totalorder %s74, %s75
      %p89 = scmp.eq.s32.totalorder %s18, 2
      %p90 = por %p88, %p89
      %p92 = scmp.ne.s32.totalorder %s75, %s91
      %p93 = scmp.eq.s32.totalorder %s18, 0
      %p94 = por %p92, %p93
      %s95 = ssub.s32 %s20, %s34
      %p96 = scmp.eq.s32.totalorder %s95, 0
      %s98 = sadd.s32 %s97, 1
      %s99 = scalar_select %p96, %s97, %s98
      %p102 = pneg %p96
      %p103 = scmp.eq.s32.totalorder %s12, 2
      %p104 = por %p102, %p103
      %p105 = scmp.ne.s32.totalorder %s97, %s100
      %p106 = scmp.eq.s32.totalorder %s12, 0
      %p107 = por %p105, %p106
      %p108 = scmp.ne.s32.totalorder %s97, %s100
      %p109 = scmp.eq.s32.totalorder %s17, 2
      %p110 = por %p108, %p109
      %p111 = scmp.ne.s32.totalorder %s100, %s101
      %p112 = scmp.eq.s32.totalorder %s17, 0
      %p113 = por %p111, %p112
      %p114 = scmp.ne.s32.totalorder %s100, %s101
      %p115 = scmp.eq.s32.totalorder %s18, 2
      %p116 = por %p114, %p115
      %p118 = scmp.ne.s32.totalorder %s101, %s117
      %p119 = scmp.eq.s32.totalorder %s18, 0
      %p120 = por %p118, %p119
      %s121 = ssub.s32 %s19, %s38
      %s122 = ssub.s32 %s20, %s34
      %s123 = sor.u32 %s121, %s122
      %p124 = scmp.eq.s32.totalorder %s123, 0
      %s126 = sadd.s32 %s125, 1
      %s127 = scalar_select %p124, %s125, %s126
      %p130 = pneg %p124
      %p131 = scmp.eq.s32.totalorder %s12, 2
      %p132 = por %p130, %p131
      %p133 = scmp.ne.s32.totalorder %s125, %s128
      %p134 = scmp.eq.s32.totalorder %s12, 0
      %p135 = por %p133, %p134
      %p136 = scmp.ne.s32.totalorder %s125, %s128
      %p137 = scmp.eq.s32.totalorder %s17, 2
      %p138 = por %p136, %p137
      %p139 = scmp.ne.s32.totalorder %s128, %s129
      %p140 = scmp.eq.s32.totalorder %s17, 0
      %p141 = por %p139, %p140
      %p142 = scmp.ne.s32.totalorder %s128, %s129
      %p143 = scmp.eq.s32.totalorder %s18, 2
      %p144 = por %p142, %p143
      %p146 = scmp.ne.s32.totalorder %s129, %s145
      %p147 = scmp.eq.s32.totalorder %s18, 0
      %p148 = por %p146, %p147
      %p149 = scmp.le.s32.totalorder 1, %s12
      %p150 = scmp.lt.s32.totalorder %s12, 4
      %p151 = pnand %p149, %p150
      %p152 = pneg %p151
      // Predicated region
      $region9: #{transformer_decoder_layer.8} parent=5 // pred_check
        _
      $region10: #{transformer_decoder_layer.8} parent=5 // pred_check_branch
        %154 = sbr.rel (%p151) target = $region12
      $region11: #{transformer_decoder_layer.8} parent=5 // pred_region
        %s155 = ssub.s32 %s12, 1
        // Predicated region
        $region13: #{transformer_decoder_layer.8} parent=11 // pred_check
          %p156 = pneg %p59
        $region14: #{transformer_decoder_layer.8} parent=11 // pred_check_branch
          %158 = sbr.rel (%p156) target = $region16
        $region15: #{transformer_decoder_layer.8} parent=11 // pred_region
          %s159 = smul.u32 4, %s22
          %p160 = scmp.lt.s32.totalorder %s159, 3
          %s161 = scalar_select %p160, %s159, 3
          %p162 = scmp.lt.s32.totalorder %s24, 0
          %s163 = scalar_select %p162, %s24, 0
          %s164 = sadd.s32 %s163, %s161
          %s165 = smul.addr %s164, 8
          %s166 = scalar_lea.vmem %s0, %s165
          %s167 = smul.u32 4, %s22
        $region16: #{transformer_decoder_layer.8} parent=11 // pred_fallthru
          _
      $region12: #{transformer_decoder_layer.8} parent=5 // pred_fallthru
        _
      %p168 = scmp.lt.s32.totalorder %s12, 3
      // Predicated region
      $region17: #{transformer_decoder_layer.8} parent=5 // pred_check
        %p169 = pneg %p168
      $region18: #{transformer_decoder_layer.8} parent=5 // pred_check_branch
        %171 = sbr.rel (%p169) target = $region20
      $region19: #{transformer_decoder_layer.8} parent=5 // pred_region
        // Predicated region
        $region21: #{transformer_decoder_layer.8} parent=19 // pred_check
          %p172 = pneg %p81
        $region22: #{transformer_decoder_layer.8} parent=19 // pred_check_branch
          %174 = sbr.rel (%p172) target = $region24
        $region23: #{transformer_decoder_layer.8} parent=19 // pred_region
          %s175 = sand.u32 %s71, 1
          %s176 = scalar_lea.sflag [#allocation4], %s175
          %s177 = sand.u32 %s71, 1
          %s178 = smul.addr %s177, 64
          %s179 = scalar_lea.vmem [#allocation3], %s178
          %s180 = smul.u32 16, %s21
          %s182 = ssub.s32 1024, 1024
          %183 = vsyncadd %s176, %s182
          %s184 = smul.addr %s180, 3
          %s185 = sadd.s32 %s20, %s184
          %s186 = smul.addr %s185, 64
          %s187 = scalar_lea.hbm %s1, %s186
          %s188 = sshll.u32 %s179, 4
          %s189 = int_to_ptr.vmem [resolvable:$true] %s188
          %194 = dma.hbm_to_vmem [thread:$0]  %s187, 1024, %s189, %s176, 192, 64, 4
        $region24: #{transformer_decoder_layer.8} parent=19 // pred_fallthru
          _
        // Predicated region
        $region25: #{transformer_decoder_layer.8} parent=19 // pred_check
          %p195 = pneg %p107
        $region26: #{transformer_decoder_layer.8} parent=19 // pred_check_branch
          %197 = sbr.rel (%p195) target = $region28
        $region27: #{transformer_decoder_layer.8} parent=19 // pred_region
          %p198 = scmp.lt.s32.totalorder %s20, 2
          %s199 = scalar_select %p198, %s20, 2
          %s200 = scalar_lea.vmem %s2, %s199
        $region28: #{transformer_decoder_layer.8} parent=19 // pred_fallthru
          _
      $region20: #{transformer_decoder_layer.8} parent=5 // pred_fallthru
        _
      %p201 = scmp.le.s32.totalorder 1, %s12
      %p202 = scmp.lt.s32.totalorder %s12, 4
      %p203 = pnand %p201, %p202
      %p204 = pneg %p203
      // Predicated region
      $region29: #{transformer_decoder_layer.8} parent=5 // pred_check
        _
      $region30: #{transformer_decoder_layer.8} parent=5 // pred_check_branch
        %206 = sbr.rel (%p203) target = $region32
      $region31: #{transformer_decoder_layer.8} parent=5 // pred_region
        %s207 = ssub.s32 %s12, 1
        %s208 = sand.u32 %s74, 1
        %s209 = scalar_lea.sflag [#allocation4], %s208
        %s210 = sand.u32 %s74, 1
        %s211 = smul.addr %s210, 64
        %s212 = scalar_lea.vmem [#allocation3], %s211
        // Predicated region
        $region33: #{transformer_decoder_layer.8} parent=31 // pred_check
          %p213 = pneg %p87
        $region34: #{transformer_decoder_layer.8} parent=31 // pred_check_branch
          %215 = sbr.rel (%p213) target = $region36
        $region35: #{transformer_decoder_layer.8} parent=31 // pred_region
          %216 = dma.done %s209, 1024
        $region36: #{transformer_decoder_layer.8} parent=31 // pred_fallthru
          _
        %s217 = smul.u32 4, %s22
        %p218 = scmp.lt.s32.totalorder %s217, 3
        %s219 = scalar_select %p218, %s217, 3
        %p220 = scmp.lt.s32.totalorder %s24, 0
        %s221 = scalar_select %p220, %s24, 0
        %s222 = sadd.s32 %s221, %s219
        %s223 = smul.addr %s222, 8
        %s224 = scalar_lea.vmem %s0, %s223
        %p225 = pneg %p59
        %p226 = pneg %p56
        %s227 = sand.u32 %s74, 1
        %s228 = scalar_lea.sflag [#allocation4], %s227
        %s229 = sand.u32 %s74, 1
        %s230 = smul.addr %s229, 64
        %s231 = scalar_lea.vmem [#allocation3], %s230
        %p232 = pneg %p87
        %p233 = pneg %p84
        %p234 = scmp.lt.s32.totalorder %s23, 2
        %s235 = scalar_select %p234, %s23, 2
        %s236 = scalar_lea.vmem %s2, %s235
        %p237 = pneg %p113
        %p238 = pneg %p110
        %p239 = pneg %p141
        %p240 = pneg %p138
        %s241 = sand.u32 %s128, 1
        %s242 = sand.u32 %s128, 1
        %s243 = smul.addr %s242, 16
        %s244 = scalar_lea.vmem [#allocation5], %s243
        %s245 = smul.u32 4, %s22
        %p246 = scmp.lt.s32.totalorder %s245, 3
        %s247 = scalar_select %p246, %s245, 3
        %p248 = scmp.lt.s32.totalorder %s24, 0
        %s249 = scalar_select %p248, %s24, 0
        %s250 = sadd.s32 %s249, %s247
        %s251 = smul.addr %s250, 8
        %s252 = scalar_lea.vmem %s0, %s251
        %s253 = smul.u32 4, %s22
        %s254 = smul.u32 16, %s24
        %p255 = scmp.lt.s32.totalorder %s23, 2
        %s256 = scalar_select %p255, %s23, 2
        %s257 = scalar_lea.vmem %s2, %s256
        %s258 = smul.u32 4, %s22
        %p260 = scmp.eq.s32.totalorder %s24, 0
        // Predicated region
        $region37: #{transformer_decoder_layer.8} parent=31 // pred_check
          %p261 = pneg %p260
        $region38: #{transformer_decoder_layer.8} parent=31 // pred_check_branch
          %263 = sbr.rel (%p261) target = $region40
        $region39: #{transformer_decoder_layer.8} parent=31 // pred_region
          %264 = vst [vmem:[#allocation2] sm:$0xff] 0.0
          %265 = vst [vmem:[#allocation2 + $0x8] sm:$0xff] 0.0
          %266 = vst [vmem:[#allocation2 + $0x10] sm:$0xff] 0.0
          %267 = vst [vmem:[#allocation2 + $0x18] sm:$0xff] 0.0
        $region40: #{transformer_decoder_layer.8} parent=31 // pred_fallthru
          _
        %v268 = vld [vmem:[#allocation2] sm:$0xff]
        %v269 = vld [vmem:[#allocation2 + $0x8] sm:$0xff]
        %v270 = vld [vmem:[#allocation2 + $0x10] sm:$0xff]
        %v271 = vld [vmem:[#allocation2 + $0x18] sm:$0xff]
        %v272 = vld [vmem:[%s252] sm:$0xff]
        %v273 = vld [vmem:[%s252 + $0x8] sm:$0xff]
        %v274 = vld [vmem:[%s252 + $0x10] sm:$0xff]
        %v275 = vld [vmem:[%s252 + $0x18] sm:$0xff]
        %v276 = vpack.c.bf16 %v273, %v272
        %v277 = vpack.c.bf16 %v275, %v274
        %v278 = vld [vmem:[%s212] sm:$0xf]
        %v279 = vld [vmem:[%s212 + $0x4] sm:$0xf]
        %v280 = vld [vmem:[%s212 + $0x8] sm:$0xf]
        %v281 = vld [vmem:[%s212 + $0xc] sm:$0xf]
        %v282 = vld [vmem:[%s212 + $0x10] sm:$0xf]
        %v283 = vld [vmem:[%s212 + $0x14] sm:$0xf]
        %v284 = vld [vmem:[%s212 + $0x18] sm:$0xf]
        %v285 = vld [vmem:[%s212 + $0x1c] sm:$0xf]
        %v286 = vld [vmem:[%s212 + $0x20] sm:$0xf]
        %v287 = vld [vmem:[%s212 + $0x24] sm:$0xf]
        %v288 = vld [vmem:[%s212 + $0x28] sm:$0xf]
        %v289 = vld [vmem:[%s212 + $0x2c] sm:$0xf]
        %v290 = vld [vmem:[%s212 + $0x30] sm:$0xf]
        %v291 = vld [vmem:[%s212 + $0x34] sm:$0xf]
        %v292 = vld [vmem:[%s212 + $0x38] sm:$0xf]
        %v293 = vld [vmem:[%s212 + $0x3c] sm:$0xf]
        %v310 = vunpack.c.l.b16 %v278
        %v311 = vunpack.c.l.b16 %v279
        %v312 = vunpack.c.l.b16 %v280
        %v313 = vunpack.c.l.b16 %v281
        %v314 = vunpack.c.l.b16 %v282
        %v315 = vunpack.c.l.b16 %v283
        %v316 = vunpack.c.l.b16 %v284
        %v317 = vunpack.c.l.b16 %v285
        %v318 = vunpack.c.l.b16 %v286
        %v319 = vunpack.c.l.b16 %v287
        %v320 = vunpack.c.l.b16 %v288
        %v321 = vunpack.c.l.b16 %v289
        %v322 = vunpack.c.l.b16 %v290
        %v323 = vunpack.c.l.b16 %v291
        %v324 = vunpack.c.l.b16 %v292
        %v325 = vunpack.c.l.b16 %v293
        %v326 = vpack.c.b16 %v311, %v310
        %v327 = vpack.c.b16 %v313, %v312
        %v328 = vpack.c.b16 %v315, %v314
        %v329 = vpack.c.b16 %v317, %v316
        %v330 = vpack.c.b16 %v319, %v318
        %v331 = vpack.c.b16 %v321, %v320
        %v332 = vpack.c.b16 %v323, %v322
        %v333 = vpack.c.b16 %v325, %v324
        %342 = vmatprep.subr.bf16.mxu0 0
        %343 = vmatpush1.bf16.msra.mxu0 %v326
        %344 = vmatprep.subr.bf16.mxu0 0
        %345 = vmatpush1.bf16.msra.mxu0 %v327
        %346 = vmatprep.subr.bf16.mxu0 0
        %347 = vmatpush1.bf16.msra.mxu0 %v328
        %348 = vmatprep.subr.bf16.mxu0 0
        %349 = vmatpush1.bf16.msra.mxu0 %v329
        %350 = vmatprep.subr.bf16.mxu0 0
        %351 = vmatpush1.bf16.msra.mxu0 %v330
        %352 = vmatprep.subr.bf16.mxu0 0
        %353 = vmatpush1.bf16.msra.mxu0 %v331
        %354 = vmatprep.subr.bf16.mxu0 0
        %355 = vmatpush1.bf16.msra.mxu0 %v332
        %356 = vmatprep.subr.bf16.mxu0 0
        %357 = vmatpush1.bf16.msra.mxu0 %v333
        %358 = vmatprep.subr.bf16.mxu0 0
        %359 = vmatpush1.bf16.msra.mxu0 0
        %360 = vmatprep.subr.bf16.mxu0 0
        %361 = vmatpush1.bf16.msra.mxu0 0
        %362 = vmatprep.subr.bf16.mxu0 0
        %363 = vmatpush1.bf16.msra.mxu0 0
        %364 = vmatprep.subr.bf16.mxu0 0
        %365 = vmatpush1.bf16.msra.mxu0 0
        %366 = vmatprep.subr.bf16.mxu0 0
        %367 = vmatpush1.bf16.msra.mxu0 0
        %368 = vmatprep.subr.bf16.mxu0 0
        %369 = vmatpush1.bf16.msra.mxu0 0
        %370 = vmatprep.subr.bf16.mxu0 0
        %371 = vmatpush1.bf16.msra.mxu0 0
        %372 = vmatprep.subr.bf16.mxu0 0
        %373 = vmatpush1.bf16.msra.mxu0 0
        %374 = vmatprep.mubr.bf16.mxu0 0
        %375 = vmatmul.mubr.bf16.gmra.mrb[0].mxu0 %v276
        %v376 = vpop.f32.mrb[0].mxu0
        %v377 = vadd.f32 0.0, %v376
        %v378 = vpop.f32.mrb[0].mxu0
        %v379 = vpop.f32.mrb[0].mxu0
        %v380 = vadd.f32 0.0, %v379
        %v381 = vpop.f32.mrb[0].mxu0
        %382 = vmatprep.mubr.bf16.mxu0 0
        %383 = vmatmul.mubr.bf16.gmra.mrb[0].mxu0 %v277
        %v384 = vpop.f32.mrb[0].mxu0
        %v385 = vadd.f32 0.0, %v384
        %v386 = vpop.f32.mrb[0].mxu0
        %v387 = vpop.f32.mrb[0].mxu0
        %v388 = vadd.f32 0.0, %v387
        %v389 = vpop.f32.mrb[0].mxu0
        %390 = vdwg.mxu0
        %v391 = vadd.f32 %v268, %v377
        %v392 = vadd.f32 %v269, %v380
        %v393 = vadd.f32 %v270, %v385
        %v394 = vadd.f32 %v271, %v388
        %395 = vst [vmem:[#allocation2] sm:$0xff] %v391
        %396 = vst [vmem:[#allocation2 + $0x8] sm:$0xff] %v392
        %397 = vst [vmem:[#allocation2 + $0x10] sm:$0xff] %v393
        %398 = vst [vmem:[#allocation2 + $0x18] sm:$0xff] %v394
        // Predicated region
        $region41: #{transformer_decoder_layer.8} parent=31 // pred_check
          %p399 = pneg %p260
        $region42: #{transformer_decoder_layer.8} parent=31 // pred_check_branch
          %401 = sbr.rel (%p399) target = $region44
        $region43: #{transformer_decoder_layer.8} parent=31 // pred_region
          %v402 = vld [vmem:[#allocation2] sm:$0xff]
          %v403 = vld [vmem:[#allocation2 + $0x8] sm:$0xff]
          %v404 = vld [vmem:[#allocation2 + $0x10] sm:$0xff]
          %v405 = vld [vmem:[#allocation2 + $0x18] sm:$0xff]
          %v406 = vld [vmem:[%s257] sm:$0x1]
          %v408 = vlaneseq
          %v409 = vshrl.u32 %v408, 7
          %v410 = vsub.s32 0, %v409
          %v411 = vrot.slane %v406, %v410
          %v413 = vadd.f32 %v402, %v411
          %v414 = vadd.f32 %v403, %v411
          %v415 = vadd.f32 %v404, %v411
          %v416 = vadd.f32 %v405, %v411
          %v417 = vpack.c.bf16 %v414, %v413
          %v418 = vpack.c.bf16 %v416, %v415
          %v421 = vunpack.c.l.b16 %v417
          %v422 = vunpack.c.h.b16 %v417
          %v423 = vunpack.c.l.b16 %v418
          %v424 = vunpack.c.h.b16 %v418
          %v425 = vpack.c.b16 %v421, %v421
          %v426 = vpack.c.b16 %v422, %v422
          %v427 = vpack.c.b16 %v423, %v423
          %v428 = vpack.c.b16 %v424, %v424
          %433 = vst [vmem:[%s244] sm:$0xf] %v425
          %434 = vst [vmem:[%s244 + $0x4] sm:$0xf] %v426
          %435 = vst [vmem:[%s244 + $0x8] sm:$0xf] %v427
          %436 = vst [vmem:[%s244 + $0xc] sm:$0xf] %v428
        $region44: #{transformer_decoder_layer.8} parent=31 // pred_fallthru
          _
        %s437 = sand.u32 %s128, 1
        %s438 = sand.u32 %s128, 1
        %s439 = smul.addr %s438, 16
        %s440 = scalar_lea.vmem [#allocation5], %s439
        // Predicated region
        $region45: #{transformer_decoder_layer.8} parent=31 // pred_check
          %p441 = pneg %p138
        $region46: #{transformer_decoder_layer.8} parent=31 // pred_check_branch
          %443 = sbr.rel (%p441) target = $region48
        $region47: #{transformer_decoder_layer.8} parent=31 // pred_region
          %s444 = smul.u32 4, %s22
          %s445 = smul.addr %s444, 3
          %s446 = sadd.s32 %s23, %s445
          %s447 = smul.addr %s446, 4
          %s448 = scalar_lea.vmem %s3, %s447
          // Predicated region
          $region49: #{transformer_decoder_layer.8} parent=47 // pred_check
            _
          $region50: #{transformer_decoder_layer.8} parent=47 // pred_check_branch
            %450 = sbr.rel (0) target = $region52
          $region51: #{transformer_decoder_layer.8} parent=47 // pred_region
            // Predicated region
            $region53: #{transformer_decoder_layer.8} parent=51 // pred_check
              _
            $region54: #{transformer_decoder_layer.8} parent=51 // pred_check_branch
              %452 = sbr.rel target = $region56
            $region55: #{transformer_decoder_layer.8} parent=51 // pred_region
              // Predicated region
              $region68: #{transformer_decoder_layer.8} parent=55 // pred_check
                _
              $region69: #{transformer_decoder_layer.8} parent=55 // pred_check_branch
                %473 = sbr.rel (0) target = $region71
              $region70: #{transformer_decoder_layer.8} parent=55 // pred_region
                loop: start=0, step=1, limit=1
                $region72: #{transformer_decoder_layer.8} parent=70 // loop_pre_header
                  _
                $region73: #{transformer_decoder_layer.8} parent=70 // loop_header
                  %s475 = sphi 0, %s479
                  %p476 = scmp.ge.s32.totalorder %s475, 1
                  %s480 = sphi %s440, %s440
                  %s481 = sphi %s448, %s448
                $region74: #{transformer_decoder_layer.8} parent=70 // loop_header_branch
                  %478 = sbr.rel (%p476) target = $region78
                $region75: #{transformer_decoder_layer.8} parent=70 // loop_body
                  _
                $region76: #{transformer_decoder_layer.8} parent=70 // loop_footer
                  %s479 = sadd.s32 1, %s475
                $region77: #{transformer_decoder_layer.8} parent=70 // loop_footer_branch
                  %474 = sbr.rel target = $region73
                $region78: #{transformer_decoder_layer.8} parent=70 // loop_exit
                  _
                loop: start=0, step=1, limit=1
                $region79: #{transformer_decoder_layer.8} parent=70 // loop_pre_header
                  _
                $region80: #{transformer_decoder_layer.8} parent=70 // loop_header
                  %s484 = sphi 0, %s488
                  %p485 = scmp.ge.s32.totalorder %s484, 1
                  %s489 = sphi %s440, %s440
                  %s490 = sphi %s448, %s448
                $region81: #{transformer_decoder_layer.8} parent=70 // loop_header_branch
                  %487 = sbr.rel (%p485) target = $region85
                $region82: #{transformer_decoder_layer.8} parent=70 // loop_body
                  %v491 = vld [vmem:[%s489] sm:$0xf]
                  %492 = vst [vmem:[%s490] sm:$0xf] %v491
                  %v493 = vld [vmem:[%s489 + $0x4] sm:$0xf]
                  %494 = vst [vmem:[%s490 + $0xc] sm:$0xf] %v493
                  %v495 = vld [vmem:[%s489 + $0x8] sm:$0xf]
                  %496 = vst [vmem:[%s490 + $0x18] sm:$0xf] %v495
                  %v497 = vld [vmem:[%s489 + $0xc] sm:$0xf]
                  %498 = vst [vmem:[%s490 + $0x24] sm:$0xf] %v497
                $region83: #{transformer_decoder_layer.8} parent=70 // loop_footer
                  %s488 = sadd.s32 1, %s484
                $region84: #{transformer_decoder_layer.8} parent=70 // loop_footer_branch
                  %483 = sbr.rel target = $region80
                $region85: #{transformer_decoder_layer.8} parent=70 // loop_exit
                  _
              $region71: #{transformer_decoder_layer.8} parent=55 // pred_fallthru
                _
            $region56: #{transformer_decoder_layer.8} parent=51 // pred_fallthru
              _
            // Predicated region
            $region57: #{transformer_decoder_layer.8} parent=51 // pred_check
              _
            $region58: #{transformer_decoder_layer.8} parent=51 // pred_check_branch
              %454 = sbr.rel (0) target = $region60
            $region59: #{transformer_decoder_layer.8} parent=51 // pred_region
              loop: start=0, step=1, limit=1
              $region61: #{transformer_decoder_layer.8} parent=59 // loop_pre_header
                _
              $region62: #{transformer_decoder_layer.8} parent=59 // loop_header
                %s457 = sphi 0, %s461
                %p458 = scmp.ge.s32.totalorder %s457, 1
                %s462 = sphi %s440, %s440
                %s463 = sphi %s448, %s448
              $region63: #{transformer_decoder_layer.8} parent=59 // loop_header_branch
                %460 = sbr.rel (%p458) target = $region67
              $region64: #{transformer_decoder_layer.8} parent=59 // loop_body
                %v464 = vld [vmem:[%s462] sm:$0xf]
                %465 = vst [vmem:[%s463] sm:$0xf] %v464
                %v466 = vld [vmem:[%s462 + $0x4] sm:$0xf]
                %467 = vst [vmem:[%s463 + $0xc] sm:$0xf] %v466
                %v468 = vld [vmem:[%s462 + $0x8] sm:$0xf]
                %469 = vst [vmem:[%s463 + $0x18] sm:$0xf] %v468
                %v470 = vld [vmem:[%s462 + $0xc] sm:$0xf]
                %471 = vst [vmem:[%s463 + $0x24] sm:$0xf] %v470
              $region65: #{transformer_decoder_layer.8} parent=59 // loop_footer
                %s461 = sadd.s32 1, %s457
              $region66: #{transformer_decoder_layer.8} parent=59 // loop_footer_branch
                %456 = sbr.rel target = $region62
              $region67: #{transformer_decoder_layer.8} parent=59 // loop_exit
                _
            $region60: #{transformer_decoder_layer.8} parent=51 // pred_fallthru
              _
          $region52: #{transformer_decoder_layer.8} parent=47 // pred_fallthru
            _
          %499 = vnop
        $region48: #{transformer_decoder_layer.8} parent=31 // pred_fallthru
          _
      $region32: #{transformer_decoder_layer.8} parent=5 // pred_fallthru
        _
      %p500 = scmp.le.s32.totalorder 2, %s12
      // Predicated region
      $region86: #{transformer_decoder_layer.8} parent=5 // pred_check
        %p501 = pneg %p500
      $region87: #{transformer_decoder_layer.8} parent=5 // pred_check_branch
        %503 = sbr.rel (%p501) target = $region89
      $region88: #{transformer_decoder_layer.8} parent=5 // pred_region
        %s504 = ssub.s32 %s12, 2
        // Predicated region
        $region90: #{transformer_decoder_layer.8} parent=88 // pred_check
          %p505 = pneg %p144
        $region91: #{transformer_decoder_layer.8} parent=88 // pred_check_branch
          %507 = sbr.rel (%p505) target = $region93
        $region92: #{transformer_decoder_layer.8} parent=88 // pred_region
          %s508 = sand.u32 %s129, 1
          %s509 = sand.u32 %s129, 1
          %s510 = smul.addr %s509, 16
          %s511 = scalar_lea.vmem [#allocation5], %s510
        $region93: #{transformer_decoder_layer.8} parent=88 // pred_fallthru
          _
      $region89: #{transformer_decoder_layer.8} parent=5 // pred_fallthru
        _
    $region6: #{transformer_decoder_layer.8} parent=1 // loop_footer
      %s16 = sadd.s32 1, %s12
    $region7: #{transformer_decoder_layer.8} parent=1 // loop_footer_branch
      %11 = sbr.rel target = $region3
    $region8: #{transformer_decoder_layer.8} parent=1 // loop_exit
      _
    %512 = vsyncpa [#allocation4], 1
    %s513 = scalar_lea.sflag [#allocation4], 1
    %514 = vsyncpa %s513, 1

// kernel: transformer_decoder_layer.9
$region0: #{transformer_decoder_layer.9}
  #allocation0 [shape = 'u32[]', space=smem, size = 0x4, offset = 0x4, fixed_abs, tag = 'smem constant byte address 0x4 - core index']
  #allocation1 [shape = 'u32[144,128]{1,0:T(1,128)}', space=vmem, size = 0x12000, scoped, tag = 'internal scratch']
  #allocation2 [shape = 'f32[16,1]{1,0:T(8,128)}', space=vmem, size = 0x2000, scoped, tag = 'scratch operand']
  #allocation3 [shape = 'f32[16,1]{1,0:T(8,128)}', space=vmem, size = 0x2000, scoped, tag = 'scratch operand']
  #allocation4 [shape = 'f32[16,32]{1,0:T(8,128)}', space=vmem, size = 0x2000, scoped, tag = 'scratch operand']
  %s0 = inlined_call_operand.vmem [shape: bf16[8,16,32], index: 0, kind: input, shape index: {}]
  %s1 = inlined_call_operand.vmem [shape: bf16[8,16,32], index: 1, kind: input, shape index: {}]
  %s2 = inlined_call_operand.vmem [shape: bf16[8,16,32], index: 2, kind: input, shape index: {}]
  %s3 = inlined_call_operand.vmem [shape: bf16[8,16,32], index: 3, kind: output, shape index: {}]
  %s4 = sld [smem:[#allocation0]]
  $region57: #{transformer_decoder_layer.9} parent=0
    _
  %s6 = ssub.s32 1, %s4
  %s7 = scalar_select 0, %s6, %s4
  loop: start=0, step=1, limit=10
  $region2: #{transformer_decoder_layer.9} parent=0 // loop_pre_header
    _
  $region3: #{transformer_decoder_layer.9} parent=0 // loop_header
    %s9 = sphi 0, %s13
    %p10 = scmp.ge.s32.totalorder %s9, 10
    %s16 = sphi 0, %s35
    %s17 = sphi 0, %s31
    %s18 = sphi 0, %s27
    %s19 = sphi 0, %s16
    %s20 = sphi 0, %s17
    %s21 = sphi 0, %s18
    %s22 = sphi 0, %s19
    %s23 = sphi 0, %s20
    %s24 = sphi 0, %s21
    %s40 = sphi 0, %s42
    %s43 = sphi 0, %s40
    %s44 = sphi 0, %s43
    %s60 = sphi 0, %s44
    %s68 = sphi 0, %s70
    %s71 = sphi 0, %s68
    %s72 = sphi 0, %s71
    %s88 = sphi 0, %s72
    %s96 = sphi 0, %s98
    %s99 = sphi 0, %s96
    %s100 = sphi 0, %s99
    %s116 = sphi 0, %s100
    %s124 = sphi 0, %s126
    %s127 = sphi 0, %s124
    %s128 = sphi 0, %s127
    %s144 = sphi 0, %s128
  $region4: #{transformer_decoder_layer.9} parent=0 // loop_header_branch
    %12 = sbr.rel (%p10) target = $region8
  $region5: #{transformer_decoder_layer.9} parent=0 // loop_body
    %s14 = ssub.s32 %s9, 1
    %s15 = ssub.s32 %s9, 2
    %s25 = sadd.s32 1, %s18
    %p26 = scmp.ge.s32.totalorder %s25, 1
    %s27 = scalar_select %p26, 0, %s25
    %s28 = sadd.s32 1, %s17
    %s29 = scalar_select %p26, %s28, %s17
    %p30 = scmp.ge.s32.totalorder %s29, 1
    %s31 = scalar_select %p30, 0, %s29
    %s32 = sadd.s32 1, %s16
    %s33 = scalar_select %p30, %s32, %s16
    %p34 = scmp.ge.s32.totalorder %s33, 8
    %s35 = scalar_select %p34, 0, %s33
    %s36 = ssub.s32 %s16, %s35
    %s37 = ssub.s32 %s17, %s31
    %s38 = sor.u32 %s36, %s37
    %p39 = scmp.eq.s32.totalorder %s38, 0
    %s41 = sadd.s32 %s40, 1
    %s42 = scalar_select %p39, %s40, %s41
    %p45 = pneg %p39
    %p46 = scmp.eq.s32.totalorder %s9, 7
    %p47 = por %p45, %p46
    %p48 = scmp.ne.s32.totalorder %s40, %s43
    %p49 = scmp.eq.s32.totalorder %s9, 0
    %p50 = por %p48, %p49
    %p51 = scmp.ne.s32.totalorder %s40, %s43
    %p52 = scmp.eq.s32.totalorder %s14, 7
    %p53 = por %p51, %p52
    %p54 = scmp.ne.s32.totalorder %s43, %s44
    %p55 = scmp.eq.s32.totalorder %s14, 0
    %p56 = por %p54, %p55
    %p57 = scmp.ne.s32.totalorder %s43, %s44
    %p58 = scmp.eq.s32.totalorder %s15, 7
    %p59 = por %p57, %p58
    %p61 = scmp.ne.s32.totalorder %s44, %s60
    %p62 = scmp.eq.s32.totalorder %s15, 0
    %p63 = por %p61, %p62
    %s64 = ssub.s32 %s16, %s35
    %s65 = ssub.s32 %s18, %s27
    %s66 = sor.u32 %s64, %s65
    %p67 = scmp.eq.s32.totalorder %s66, 0
    %s69 = sadd.s32 %s68, 1
    %s70 = scalar_select %p67, %s68, %s69
    %p73 = pneg %p67
    %p74 = scmp.eq.s32.totalorder %s9, 7
    %p75 = por %p73, %p74
    %p76 = scmp.ne.s32.totalorder %s68, %s71
    %p77 = scmp.eq.s32.totalorder %s9, 0
    %p78 = por %p76, %p77
    %p79 = scmp.ne.s32.totalorder %s68, %s71
    %p80 = scmp.eq.s32.totalorder %s14, 7
    %p81 = por %p79, %p80
    %p82 = scmp.ne.s32.totalorder %s71, %s72
    %p83 = scmp.eq.s32.totalorder %s14, 0
    %p84 = por %p82, %p83
    %p85 = scmp.ne.s32.totalorder %s71, %s72
    %p86 = scmp.eq.s32.totalorder %s15, 7
    %p87 = por %p85, %p86
    %p89 = scmp.ne.s32.totalorder %s72, %s88
    %p90 = scmp.eq.s32.totalorder %s15, 0
    %p91 = por %p89, %p90
    %s92 = ssub.s32 %s16, %s35
    %s93 = ssub.s32 %s18, %s27
    %s94 = sor.u32 %s92, %s93
    %p95 = scmp.eq.s32.totalorder %s94, 0
    %s97 = sadd.s32 %s96, 1
    %s98 = scalar_select %p95, %s96, %s97
    %p101 = pneg %p95
    %p102 = scmp.eq.s32.totalorder %s9, 7
    %p103 = por %p101, %p102
    %p104 = scmp.ne.s32.totalorder %s96, %s99
    %p105 = scmp.eq.s32.totalorder %s9, 0
    %p106 = por %p104, %p105
    %p107 = scmp.ne.s32.totalorder %s96, %s99
    %p108 = scmp.eq.s32.totalorder %s14, 7
    %p109 = por %p107, %p108
    %p110 = scmp.ne.s32.totalorder %s99, %s100
    %p111 = scmp.eq.s32.totalorder %s14, 0
    %p112 = por %p110, %p111
    %p113 = scmp.ne.s32.totalorder %s99, %s100
    %p114 = scmp.eq.s32.totalorder %s15, 7
    %p115 = por %p113, %p114
    %p117 = scmp.ne.s32.totalorder %s100, %s116
    %p118 = scmp.eq.s32.totalorder %s15, 0
    %p119 = por %p117, %p118
    %s120 = ssub.s32 %s16, %s35
    %s121 = ssub.s32 %s17, %s31
    %s122 = sor.u32 %s120, %s121
    %p123 = scmp.eq.s32.totalorder %s122, 0
    %s125 = sadd.s32 %s124, 1
    %s126 = scalar_select %p123, %s124, %s125
    %p129 = pneg %p123
    %p130 = scmp.eq.s32.totalorder %s9, 7
    %p131 = por %p129, %p130
    %p132 = scmp.ne.s32.totalorder %s124, %s127
    %p133 = scmp.eq.s32.totalorder %s9, 0
    %p134 = por %p132, %p133
    %p135 = scmp.ne.s32.totalorder %s124, %s127
    %p136 = scmp.eq.s32.totalorder %s14, 7
    %p137 = por %p135, %p136
    %p138 = scmp.ne.s32.totalorder %s127, %s128
    %p139 = scmp.eq.s32.totalorder %s14, 0
    %p140 = por %p138, %p139
    %p141 = scmp.ne.s32.totalorder %s127, %s128
    %p142 = scmp.eq.s32.totalorder %s15, 7
    %p143 = por %p141, %p142
    %p145 = scmp.ne.s32.totalorder %s128, %s144
    %p146 = scmp.eq.s32.totalorder %s15, 0
    %p147 = por %p145, %p146
    %p148 = scmp.le.s32.totalorder 1, %s9
    %p149 = scmp.lt.s32.totalorder %s9, 9
    %p150 = pnand %p148, %p149
    %p151 = pneg %p150
    // Predicated region
    $region9: #{transformer_decoder_layer.9} parent=5 // pred_check
      _
    $region10: #{transformer_decoder_layer.9} parent=5 // pred_check_branch
      %153 = sbr.rel (%p150) target = $region12
    $region11: #{transformer_decoder_layer.9} parent=5 // pred_region
      %s154 = ssub.s32 %s9, 1
    $region12: #{transformer_decoder_layer.9} parent=5 // pred_fallthru
      _
    %p155 = scmp.lt.s32.totalorder %s9, 8
    // Predicated region
    $region13: #{transformer_decoder_layer.9} parent=5 // pred_check
      %p156 = pneg %p155
    $region14: #{transformer_decoder_layer.9} parent=5 // pred_check_branch
      %158 = sbr.rel (%p156) target = $region16
    $region15: #{transformer_decoder_layer.9} parent=5 // pred_region
      // Predicated region
      $region17: #{transformer_decoder_layer.9} parent=15 // pred_check
        %p159 = pneg %p50
      $region18: #{transformer_decoder_layer.9} parent=15 // pred_check_branch
        %161 = sbr.rel (%p159) target = $region20
      $region19: #{transformer_decoder_layer.9} parent=15 // pred_region
        %s162 = smul.u32 2, %s17
        %p163 = scmp.lt.s32.totalorder %s16, 7
        %s164 = scalar_select %p163, %s16, 7
        %p165 = scmp.lt.s32.totalorder %s162, 1
        %s166 = scalar_select %p165, %s162, 1
        %s167 = smul.addr %s164, 2
        %s168 = sadd.s32 %s166, %s167
        %s169 = smul.addr %s168, 4
        %s170 = scalar_lea.vmem %s0, %s169
        %s171 = smul.u32 2, %s17
      $region20: #{transformer_decoder_layer.9} parent=15 // pred_fallthru
        _
      // Predicated region
      $region21: #{transformer_decoder_layer.9} parent=15 // pred_check
        %p172 = pneg %p78
      $region22: #{transformer_decoder_layer.9} parent=15 // pred_check_branch
        %174 = sbr.rel (%p172) target = $region24
      $region23: #{transformer_decoder_layer.9} parent=15 // pred_region
        %s175 = smul.u32 2, %s18
        %p176 = scmp.lt.s32.totalorder %s16, 7
        %s177 = scalar_select %p176, %s16, 7
        %p178 = scmp.lt.s32.totalorder %s175, 1
        %s179 = scalar_select %p178, %s175, 1
        %s180 = smul.addr %s177, 2
        %s181 = sadd.s32 %s179, %s180
        %s182 = smul.addr %s181, 4
        %s183 = scalar_lea.vmem %s1, %s182
        %s184 = smul.u32 2, %s18
      $region24: #{transformer_decoder_layer.9} parent=15 // pred_fallthru
        _
      // Predicated region
      $region25: #{transformer_decoder_layer.9} parent=15 // pred_check
        %p185 = pneg %p106
      $region26: #{transformer_decoder_layer.9} parent=15 // pred_check_branch
        %187 = sbr.rel (%p185) target = $region28
      $region27: #{transformer_decoder_layer.9} parent=15 // pred_region
        %s188 = smul.u32 2, %s18
        %p189 = scmp.lt.s32.totalorder %s16, 7
        %s190 = scalar_select %p189, %s16, 7
        %p191 = scmp.lt.s32.totalorder %s188, 1
        %s192 = scalar_select %p191, %s188, 1
        %s193 = smul.addr %s190, 2
        %s194 = sadd.s32 %s192, %s193
        %s195 = smul.addr %s194, 4
        %s196 = scalar_lea.vmem %s2, %s195
        %s197 = smul.u32 2, %s18
      $region28: #{transformer_decoder_layer.9} parent=15 // pred_fallthru
        _
    $region16: #{transformer_decoder_layer.9} parent=5 // pred_fallthru
      _
    %p198 = scmp.le.s32.totalorder 1, %s9
    %p199 = scmp.lt.s32.totalorder %s9, 9
    %p200 = pnand %p198, %p199
    %p201 = pneg %p200
    // Predicated region
    $region29: #{transformer_decoder_layer.9} parent=5 // pred_check
      _
    $region30: #{transformer_decoder_layer.9} parent=5 // pred_check_branch
      %203 = sbr.rel (%p200) target = $region32
    $region31: #{transformer_decoder_layer.9} parent=5 // pred_region
      %s204 = ssub.s32 %s9, 1
      %s205 = smul.u32 2, %s20
      %p206 = scmp.lt.s32.totalorder %s19, 7
      %s207 = scalar_select %p206, %s19, 7
      %p208 = scmp.lt.s32.totalorder %s205, 1
      %s209 = scalar_select %p208, %s205, 1
      %s210 = smul.addr %s207, 2
      %s211 = sadd.s32 %s209, %s210
      %s212 = smul.addr %s211, 4
      %s213 = scalar_lea.vmem %s0, %s212
      %p214 = pneg %p56
      %p215 = pneg %p53
      %s216 = smul.u32 2, %s21
      %p217 = scmp.lt.s32.totalorder %s19, 7
      %s218 = scalar_select %p217, %s19, 7
      %p219 = scmp.lt.s32.totalorder %s216, 1
      %s220 = scalar_select %p219, %s216, 1
      %s221 = smul.addr %s218, 2
      %s222 = sadd.s32 %s220, %s221
      %s223 = smul.addr %s222, 4
      %s224 = scalar_lea.vmem %s1, %s223
      %p225 = pneg %p84
      %p226 = pneg %p81
      %s227 = smul.u32 2, %s21
      %p228 = scmp.lt.s32.totalorder %s19, 7
      %s229 = scalar_select %p228, %s19, 7
      %p230 = scmp.lt.s32.totalorder %s227, 1
      %s231 = scalar_select %p230, %s227, 1
      %s232 = smul.addr %s229, 2
      %s233 = sadd.s32 %s231, %s232
      %s234 = smul.addr %s233, 4
      %s235 = scalar_lea.vmem %s2, %s234
      %p236 = pneg %p112
      %p237 = pneg %p109
      %p238 = pneg %p140
      %p239 = pneg %p137
      %s240 = smul.u32 2, %s20
      %p241 = scmp.lt.s32.totalorder %s19, 7
      %s242 = scalar_select %p241, %s19, 7
      %p243 = scmp.lt.s32.totalorder %s240, 1
      %s244 = scalar_select %p243, %s240, 1
      %s245 = smul.addr %s242, 2
      %s246 = sadd.s32 %s244, %s245
      %s247 = smul.addr %s246, 4
      %s248 = scalar_lea.vmem %s3, %s247
      %s249 = smul.u32 2, %s20
      %p250 = scmp.lt.s32.totalorder %s19, 7
      %s251 = scalar_select %p250, %s19, 7
      %p252 = scmp.lt.s32.totalorder %s249, 1
      %s253 = scalar_select %p252, %s249, 1
      %s254 = smul.addr %s251, 2
      %s255 = sadd.s32 %s253, %s254
      %s256 = smul.addr %s255, 4
      %s257 = scalar_lea.vmem %s0, %s256
      %s258 = smul.u32 2, %s20
      %s259 = smul.u32 2, %s21
      %p260 = scmp.lt.s32.totalorder %s19, 7
      %s261 = scalar_select %p260, %s19, 7
      %p262 = scmp.lt.s32.totalorder %s259, 1
      %s263 = scalar_select %p262, %s259, 1
      %s264 = smul.addr %s261, 2
      %s265 = sadd.s32 %s263, %s264
      %s266 = smul.addr %s265, 4
      %s267 = scalar_lea.vmem %s1, %s266
      %s268 = smul.u32 2, %s21
      %s269 = smul.u32 2, %s21
      %p270 = scmp.lt.s32.totalorder %s19, 7
      %s271 = scalar_select %p270, %s19, 7
      %p272 = scmp.lt.s32.totalorder %s269, 1
      %s273 = scalar_select %p272, %s269, 1
      %s274 = smul.addr %s271, 2
      %s275 = sadd.s32 %s273, %s274
      %s276 = smul.addr %s275, 4
      %s277 = scalar_lea.vmem %s2, %s276
      %s278 = smul.u32 2, %s21
      %s279 = smul.u32 2, %s20
      %p280 = scmp.lt.s32.totalorder %s19, 7
      %s281 = scalar_select %p280, %s19, 7
      %p282 = scmp.lt.s32.totalorder %s279, 1
      %s283 = scalar_select %p282, %s279, 1
      %s284 = smul.addr %s281, 2
      %s285 = sadd.s32 %s283, %s284
      %s286 = smul.addr %s285, 4
      %s287 = scalar_lea.vmem %s3, %s286
      %s288 = smul.u32 2, %s20
      %p290 = scmp.eq.s32.totalorder %s21, 0
      // Predicated region
      $region33: #{transformer_decoder_layer.9} parent=31 // pred_check
        %p291 = pneg %p290
      $region34: #{transformer_decoder_layer.9} parent=31 // pred_check_branch
        %293 = sbr.rel (%p291) target = $region36
      $region35: #{transformer_decoder_layer.9} parent=31 // pred_region
        %vm294 = vcmask 7168
        %295 = vst.msk [vmem:[#allocation2] sm:$0xff] %vm294, -inf
        %296 = vst.msk [vmem:[#allocation2 + $0x8] sm:$0xff] %vm294, -inf
        %297 = vst.msk [vmem:[#allocation3] sm:$0xff] %vm294, 0.0
        %298 = vst.msk [vmem:[#allocation3 + $0x8] sm:$0xff] %vm294, 0.0
        %vm299 = vcmask 261120
        %300 = vst.msk [vmem:[#allocation4] sm:$0xff] %vm299, 0.0
        %301 = vst.msk [vmem:[#allocation4 + $0x8] sm:$0xff] %vm299, 0.0
      $region36: #{transformer_decoder_layer.9} parent=31 // pred_fallthru
        _
      %s302 = smul.u32 %s20, 16
      %s303 = smul.u32 %s21, 16
      %s304 = sadd.s32 %s302, 15
      %p305 = scmp.le.s32.totalorder %s303, %s304
      // Predicated region
      $region37: #{transformer_decoder_layer.9} parent=31 // pred_check
        %p306 = pneg %p305
      $region38: #{transformer_decoder_layer.9} parent=31 // pred_check_branch
        %308 = sbr.rel (%p306) target = $region40
      $region39: #{transformer_decoder_layer.9} parent=31 // pred_region
        %v309 = vld [vmem:[%s257] sm:$0xf]
        %v310 = vld [vmem:[%s257 + $0x4] sm:$0xf]
        %v311 = vld [vmem:[%s267] sm:$0xf]
        %v312 = vld [vmem:[%s267 + $0x4] sm:$0xf]
        %v315 = vunpack.c.l.b16 %v309
        %v316 = vunpack.c.l.b16 %v310
        %v317 = vpack.c.b16 %v316, %v315
        %v320 = vunpack.c.l.b16 %v311
        %v321 = vunpack.c.l.b16 %v312
        %v322 = vpack.c.b16 %v321, %v320
        %vm323 = vcmask 261120
        %v325 = vsel %vm323, %v317, 0
        %v328 = vsel %vm323, %v322, 0
        %330 = vmatprep.subr.bf16.mxu0 0
        %331 = vmatpush1.bf16.xpose.msra.mxu0 %v328
        %332 = vmatprep.subr.bf16.mxu0 0
        %333 = vmatpush1.bf16.xpose.msra.mxu0 0
        %334 = vmatprep.subr.bf16.mxu0 0
        %335 = vmatpush1.bf16.xpose.msra.mxu0 0
        %336 = vmatprep.subr.bf16.mxu0 0
        %337 = vmatpush1.bf16.xpose.msra.mxu0 0
        %338 = vmatprep.subr.bf16.mxu0 0
        %339 = vmatpush1.bf16.xpose.msra.mxu0 0
        %340 = vmatprep.subr.bf16.mxu0 0
        %341 = vmatpush1.bf16.xpose.msra.mxu0 0
        %342 = vmatprep.subr.bf16.mxu0 0
        %343 = vmatpush1.bf16.xpose.msra.mxu0 0
        %344 = vmatprep.subr.bf16.mxu0 0
        %345 = vmatpush1.bf16.xpose.msra.mxu0 0
        %346 = vmatprep.subr.bf16.mxu0 0
        %347 = vmatpush1.bf16.xpose.msra.mxu0 0
        %348 = vmatprep.subr.bf16.mxu0 0
        %349 = vmatpush1.bf16.xpose.msra.mxu0 0
        %350 = vmatprep.subr.bf16.mxu0 0
        %351 = vmatpush1.bf16.xpose.msra.mxu0 0
        %352 = vmatprep.subr.bf16.mxu0 0
        %353 = vmatpush1.bf16.xpose.msra.mxu0 0
        %354 = vmatprep.subr.bf16.mxu0 0
        %355 = vmatpush1.bf16.xpose.msra.mxu0 0
        %356 = vmatprep.subr.bf16.mxu0 0
        %357 = vmatpush1.bf16.xpose.msra.mxu0 0
        %358 = vmatprep.subr.bf16.mxu0 0
        %359 = vmatpush1.bf16.xpose.msra.mxu0 0
        %360 = vmatprep.subr.bf16.mxu0 0
        %361 = vmatpush1.bf16.xpose.msra.mxu0 0
        %362 = vmatprep.mubr.bf16.mxu0 0
        %363 = vmatmul.mubr.bf16.gmra.mrb[0].mxu0 %v325
        %v364 = vpop.f32.mrb[0].mxu0
        %v365 = vadd.f32 0.0, %v364
        %v366 = vpop.f32.mrb[0].mxu0
        %v367 = vpop.f32.mrb[0].mxu0
        %v368 = vadd.f32 0.0, %v367
        %v369 = vpop.f32.mrb[0].mxu0
        %370 = vdwg.mxu0
        %v371 = vmul.f32 %v365, 0.17677669
        %v372 = vmul.f32 %v368, 0.17677669
        %v373 = vlaneseq
        %v374 = vshrl.u32 %v373, 7
        %v375 = vadd.s32 %v374, 8
        %v376 = vstv %s302
        %v377 = vadd.s32 %v376, %v374
        %v378 = vadd.s32 %v376, %v375
        %v379 = vlaneseq
        %v380 = vand.u32 %v379, 127
        %v381 = vstv %s303
        %v382 = vadd.s32 %v381, %v380
        %vm383 = vcmp.le.s32.totalorder %v382, %v377
        %vm384 = vcmp.le.s32.totalorder %v382, %v378
        %v385 = vsel %vm383, %v371, -1e+09
        %v386 = vsel %vm384, %v372, -1e+09
        %v387 = vld [vmem:[#allocation2] sm:$0xff]
        %v388 = vld [vmem:[#allocation2 + $0x8] sm:$0xff]
        %vm389 = vcmask 130048
        %v390 = vsel %vm389, %v385, -inf
        %391 = vmax.xlane.f32.xlu0 %v390
        %v392 = vpop.xlane.xlu0 %391
        %v393 = vsel %vm389, %v386, -inf
        %394 = vmax.xlane.f32.xlu0 %v393
        %v395 = vpop.xlane.xlu0 %394
        %v396 = vmax.f32 %v387, %v392
        %v397 = vmax.f32 %v388, %v395
        %v398 = vsub.f32 %v387, %v396
        %v399 = vsub.f32 %v388, %v397
        %v400 = vmul.f32 %v398, 1.442695
        %v401 = vpow.pop %v400
        %v402 = vmul.f32 %v399, 1.442695
        %v403 = vpow.pop %v402
        %405 = vset.pattern.permute.xlu0 0
        %406 = vperm.xlu0 %405, %v396
        %v407 = vpop.permute.xlu0 %406
        %410 = vset.pattern.permute.xlu0 0
        %411 = vperm.xlu0 %410, %v397
        %v412 = vpop.permute.xlu0 %411
        %v414 = vsub.f32 %v385, %v407
        %v415 = vsub.f32 %v386, %v412
        %v416 = vmul.f32 %v414, 1.442695
        %v417 = vpow.pop %v416
        %v418 = vmul.f32 %v415, 1.442695
        %v419 = vpow.pop %v418
        %v420 = vld [vmem:[#allocation3] sm:$0xff]
        %v421 = vld [vmem:[#allocation3 + $0x8] sm:$0xff]
        %v422 = vmul.f32 %v401, %v420
        %v423 = vmul.f32 %v403, %v421
        %v424 = vsel %vm389, %v417, 0.0
        %425 = vadd.xlane.f32.xlu0 %v424
        %v426 = vpop.xlane.xlu0 %425
        %v427 = vsel %vm389, %v419, 0.0
        %428 = vadd.xlane.f32.xlu0 %v427
        %v429 = vpop.xlane.xlu0 %428
        %v430 = vadd.f32 %v422, %v426
        %v431 = vadd.f32 %v423, %v429
        %vm432 = vcmask 7168
        %433 = vst.msk [vmem:[#allocation3] sm:$0xff] %vm432, %v430
        %434 = vst.msk [vmem:[#allocation3 + $0x8] sm:$0xff] %vm432, %v431
        %v435 = vld [vmem:[#allocation4] sm:$0xff]
        %v436 = vld [vmem:[#allocation4 + $0x8] sm:$0xff]
        %438 = vset.pattern.permute.xlu0 0
        %439 = vperm.xlu0 %438, %v401
        %v440 = vpop.permute.xlu0 %439
        %443 = vset.pattern.permute.xlu0 0
        %444 = vperm.xlu0 %443, %v403
        %v445 = vpop.permute.xlu0 %444
        %v447 = vmul.f32 %v440, %v435
        %v448 = vmul.f32 %v445, %v436
        %v449 = vpack.c.bf16 %v419, %v417
        %v450 = vld [vmem:[%s277] sm:$0xf]
        %v451 = vld [vmem:[%s277 + $0x4] sm:$0xf]
        %v454 = vunpack.c.l.b16 %v450
        %v455 = vunpack.c.l.b16 %v451
        %v456 = vpack.c.b16 %v455, %v454
        %v459 = vsel %vm389, %v449, 0
        %461 = vmatprep.subr.bf16.mxu0 0
        %462 = vmatpush1.bf16.msra.mxu0 %v456
        %463 = vmatprep.subr.bf16.mxu0 0
        %464 = vmatpush1.bf16.msra.mxu0 0
        %465 = vmatprep.subr.bf16.mxu0 0
        %466 = vmatpush1.bf16.msra.mxu0 0
        %467 = vmatprep.subr.bf16.mxu0 0
        %468 = vmatpush1.bf16.msra.mxu0 0
        %469 = vmatprep.subr.bf16.mxu0 0
        %470 = vmatpush1.bf16.msra.mxu0 0
        %471 = vmatprep.subr.bf16.mxu0 0
        %472 = vmatpush1.bf16.msra.mxu0 0
        %473 = vmatprep.subr.bf16.mxu0 0
        %474 = vmatpush1.bf16.msra.mxu0 0
        %475 = vmatprep.subr.bf16.mxu0 0
        %476 = vmatpush1.bf16.msra.mxu0 0
        %477 = vmatprep.subr.bf16.mxu0 0
        %478 = vmatpush1.bf16.msra.mxu0 0
        %479 = vmatprep.subr.bf16.mxu0 0
        %480 = vmatpush1.bf16.msra.mxu0 0
        %481 = vmatprep.subr.bf16.mxu0 0
        %482 = vmatpush1.bf16.msra.mxu0 0
        %483 = vmatprep.subr.bf16.mxu0 0
        %484 = vmatpush1.bf16.msra.mxu0 0
        %485 = vmatprep.subr.bf16.mxu0 0
        %486 = vmatpush1.bf16.msra.mxu0 0
        %487 = vmatprep.subr.bf16.mxu0 0
        %488 = vmatpush1.bf16.msra.mxu0 0
        %489 = vmatprep.subr.bf16.mxu0 0
        %490 = vmatpush1.bf16.msra.mxu0 0
        %491 = vmatprep.subr.bf16.mxu0 0
        %492 = vmatpush1.bf16.msra.mxu0 0
        %493 = vmatprep.mubr.bf16.mxu0 0
        %494 = vmatmul.mubr.bf16.gmra.mrb[0].mxu0 %v459
        %v495 = vpop.f32.mrb[0].mxu0
        %v496 = vadd.f32 0.0, %v495
        %v497 = vpop.f32.mrb[0].mxu0
        %v498 = vpop.f32.mrb[0].mxu0
        %v499 = vadd.f32 0.0, %v498
        %v500 = vpop.f32.mrb[0].mxu0
        %501 = vdwg.mxu0
        %v502 = vadd.f32 %v447, %v496
        %v503 = vadd.f32 %v448, %v499
        %504 = vst.msk [vmem:[#allocation4] sm:$0xff] %vm323, %v502
        %505 = vst.msk [vmem:[#allocation4 + $0x8] sm:$0xff] %vm323, %v503
        %506 = vst.msk [vmem:[#allocation2] sm:$0xff] %vm432, %v396
        %507 = vst.msk [vmem:[#allocation2 + $0x8] sm:$0xff] %vm432, %v397
      $region40: #{transformer_decoder_layer.9} parent=31 // pred_fallthru
        _
      // Predicated region
      $region41: #{transformer_decoder_layer.9} parent=31 // pred_check
        %p508 = pneg %p290
      $region42: #{transformer_decoder_layer.9} parent=31 // pred_check_branch
        %510 = sbr.rel (%p508) target = $region44
      $region43: #{transformer_decoder_layer.9} parent=31 // pred_region
        %v511 = vld [vmem:[#allocation4] sm:$0xff]
        %v512 = vld [vmem:[#allocation4 + $0x8] sm:$0xff]
        %v513 = vld [vmem:[#allocation3] sm:$0xff]
        %v514 = vld [vmem:[#allocation3 + $0x8] sm:$0xff]
        %v515 = vrcp.pop %v513
        %v516 = vrcp.pop %v514
        %518 = vset.pattern.permute.xlu0 0
        %519 = vperm.xlu0 %518, %v515
        %v520 = vpop.permute.xlu0 %519
        %523 = vset.pattern.permute.xlu0 0
        %524 = vperm.xlu0 %523, %v516
        %v525 = vpop.permute.xlu0 %524
        %v527 = vmul.f32 %v511, %v520
        %v528 = vmul.f32 %v512, %v525
        %v529 = vpack.c.bf16 %v528, %v527
        %v531 = vunpack.c.l.b16 %v529
        %v532 = vunpack.c.h.b16 %v529
        %v533 = vpack.c.b16 %v531, %v531
        %v534 = vpack.c.b16 %v532, %v532
        %vm537 = vcmask 257024
        %538 = vst.msk [vmem:[%s287] sm:$0xf] %vm537, %v533
        %539 = vst.msk [vmem:[%s287 + $0x4] sm:$0xf] %vm537, %v534
      $region44: #{transformer_decoder_layer.9} parent=31 // pred_fallthru
        _
      %s540 = smul.u32 2, %s20
      %p541 = scmp.lt.s32.totalorder %s19, 7
      %s542 = scalar_select %p541, %s19, 7
      %p543 = scmp.lt.s32.totalorder %s540, 1
      %s544 = scalar_select %p543, %s540, 1
      %s545 = smul.addr %s542, 2
      %s546 = sadd.s32 %s544, %s545
      %s547 = smul.addr %s546, 4
      %s548 = scalar_lea.vmem %s3, %s547
      // Predicated region
      $region45: #{transformer_decoder_layer.9} parent=31 // pred_check
        %p549 = pneg %p137
      $region46: #{transformer_decoder_layer.9} parent=31 // pred_check_branch
        %551 = sbr.rel (%p549) target = $region48
      $region47: #{transformer_decoder_layer.9} parent=31 // pred_region
        %s552 = smul.u32 2, %s20
      $region48: #{transformer_decoder_layer.9} parent=31 // pred_fallthru
        _
    $region32: #{transformer_decoder_layer.9} parent=5 // pred_fallthru
      _
    %p553 = scmp.le.s32.totalorder 2, %s9
    // Predicated region
    $region49: #{transformer_decoder_layer.9} parent=5 // pred_check
      %p554 = pneg %p553
    $region50: #{transformer_decoder_layer.9} parent=5 // pred_check_branch
      %556 = sbr.rel (%p554) target = $region52
    $region51: #{transformer_decoder_layer.9} parent=5 // pred_region
      %s557 = ssub.s32 %s9, 2
      // Predicated region
      $region53: #{transformer_decoder_layer.9} parent=51 // pred_check
        %p558 = pneg %p143
      $region54: #{transformer_decoder_layer.9} parent=51 // pred_check_branch
        %560 = sbr.rel (%p558) target = $region56
      $region55: #{transformer_decoder_layer.9} parent=51 // pred_region
        %s561 = smul.u32 2, %s23
        %p562 = scmp.lt.s32.totalorder %s22, 7
        %s563 = scalar_select %p562, %s22, 7
        %p564 = scmp.lt.s32.totalorder %s561, 1
        %s565 = scalar_select %p564, %s561, 1
        %s566 = smul.addr %s563, 2
        %s567 = sadd.s32 %s565, %s566
        %s568 = smul.addr %s567, 4
        %s569 = scalar_lea.vmem %s3, %s568
      $region56: #{transformer_decoder_layer.9} parent=51 // pred_fallthru
        _
    $region52: #{transformer_decoder_layer.9} parent=5 // pred_fallthru
      _
  $region6: #{transformer_decoder_layer.9} parent=0 // loop_footer
    %s13 = sadd.s32 1, %s9
  $region7: #{transformer_decoder_layer.9} parent=0 // loop_footer_branch
    %8 = sbr.rel target = $region3
  $region8: #{transformer_decoder_layer.9} parent=0 // loop_exit
    _

// kernel: transformer_decoder_layer.10
$region0: #{transformer_decoder_layer.10}
  #allocation0 [shape = 'u32[]', space=smem, size = 0x4, offset = 0x4, fixed_abs, tag = 'smem constant byte address 0x4 - core index']
  #allocation1 [shape = 'u32[144,128]{1,0:T(1,128)}', space=vmem, size = 0x12000, scoped, tag = 'internal scratch']
  #allocation2 [shape = 'f32[32,128]{1,0:T(8,128)}', space=vmem, size = 0x4000, scoped, tag = 'scratch operand']
  %s0 = inlined_call_operand.vmem [shape: bf16[32,128], index: 0, kind: input, shape index: {}]
  %s1 = inlined_call_operand.vmem [shape: bf16[128,128], index: 1, kind: input, shape index: {}]
  %s2 = inlined_call_operand.vmem [shape: f32[1,128], index: 2, kind: input, shape index: {}]
  %s3 = inlined_call_operand.vmem [shape: f32[32,128], index: 3, kind: input, shape index: {}]
  %s4 = inlined_call_operand.vmem [shape: f32[1,128], index: 4, kind: input, shape index: {}]
  %s5 = inlined_call_operand.vmem [shape: f32[1,128], index: 5, kind: input, shape index: {}]
  %s6 = inlined_call_operand.vmem [shape: f32[32,128], index: 6, kind: output, shape index: {}]
  %s7 = sld [smem:[#allocation0]]
  $region42: #{transformer_decoder_layer.10} parent=0
    _
  %s9 = ssub.s32 1, %s7
  %s10 = scalar_select 0, %s9, %s7
  // Predicated region
  $region2: #{transformer_decoder_layer.10} parent=0 // pred_check
    _
  $region3: #{transformer_decoder_layer.10} parent=0 // pred_check_branch
    %12 = sbr.rel (0) target = $region5
  $region4: #{transformer_decoder_layer.10} parent=0 // pred_region
    _
  $region5: #{transformer_decoder_layer.10} parent=0 // pred_fallthru
    _
  // Predicated region
  $region6: #{transformer_decoder_layer.10} parent=0 // pred_check
    _
  $region7: #{transformer_decoder_layer.10} parent=0 // pred_check_branch
    %14 = sbr.rel (0) target = $region9
  $region8: #{transformer_decoder_layer.10} parent=0 // pred_region
    _
  $region9: #{transformer_decoder_layer.10} parent=0 // pred_fallthru
    _
  // Predicated region
  $region10: #{transformer_decoder_layer.10} parent=0 // pred_check
    _
  $region11: #{transformer_decoder_layer.10} parent=0 // pred_check_branch
    %16 = sbr.rel (0) target = $region13
  $region12: #{transformer_decoder_layer.10} parent=0 // pred_region
    _
  $region13: #{transformer_decoder_layer.10} parent=0 // pred_fallthru
    _
  // Predicated region
  $region14: #{transformer_decoder_layer.10} parent=0 // pred_check
    _
  $region15: #{transformer_decoder_layer.10} parent=0 // pred_check_branch
    %18 = sbr.rel (0) target = $region17
  $region16: #{transformer_decoder_layer.10} parent=0 // pred_region
    _
  $region17: #{transformer_decoder_layer.10} parent=0 // pred_fallthru
    _
  // Predicated region
  $region18: #{transformer_decoder_layer.10} parent=0 // pred_check
    _
  $region19: #{transformer_decoder_layer.10} parent=0 // pred_check_branch
    %20 = sbr.rel (0) target = $region21
  $region20: #{transformer_decoder_layer.10} parent=0 // pred_region
    _
  $region21: #{transformer_decoder_layer.10} parent=0 // pred_fallthru
    _
  // Predicated region
  $region22: #{transformer_decoder_layer.10} parent=0 // pred_check
    _
  $region23: #{transformer_decoder_layer.10} parent=0 // pred_check_branch
    %22 = sbr.rel (0) target = $region25
  $region24: #{transformer_decoder_layer.10} parent=0 // pred_region
    _
  $region25: #{transformer_decoder_layer.10} parent=0 // pred_fallthru
    _
  %p24 = scmp.eq.s32.totalorder 0, 0
  // Predicated region
  $region26: #{transformer_decoder_layer.10} parent=0 // pred_check
    %p25 = pneg %p24
  $region27: #{transformer_decoder_layer.10} parent=0 // pred_check_branch
    %27 = sbr.rel (%p25) target = $region29
  $region28: #{transformer_decoder_layer.10} parent=0 // pred_region
    %28 = vst [vmem:[#allocation2] sm:$0xff] 0.0
    %29 = vst [vmem:[#allocation2 + $0x8] sm:$0xff] 0.0
    %30 = vst [vmem:[#allocation2 + $0x10] sm:$0xff] 0.0
    %31 = vst [vmem:[#allocation2 + $0x18] sm:$0xff] 0.0
  $region29: #{transformer_decoder_layer.10} parent=0 // pred_fallthru
    _
  %v32 = vld [vmem:[#allocation2] sm:$0xff]
  %v33 = vld [vmem:[#allocation2 + $0x8] sm:$0xff]
  %v34 = vld [vmem:[#allocation2 + $0x10] sm:$0xff]
  %v35 = vld [vmem:[#allocation2 + $0x18] sm:$0xff]
  %v36 = vld [vmem:[%s0] sm:$0xf]
  %v37 = vld [vmem:[%s0 + $0x4] sm:$0xf]
  %v38 = vld [vmem:[%s0 + $0x8] sm:$0xf]
  %v39 = vld [vmem:[%s0 + $0xc] sm:$0xf]
  %v40 = vld [vmem:[%s1] sm:$0xf]
  %v41 = vld [vmem:[%s1 + $0x4] sm:$0xf]
  %v42 = vld [vmem:[%s1 + $0x8] sm:$0xf]
  %v43 = vld [vmem:[%s1 + $0xc] sm:$0xf]
  %v44 = vld [vmem:[%s1 + $0x10] sm:$0xf]
  %v45 = vld [vmem:[%s1 + $0x14] sm:$0xf]
  %v46 = vld [vmem:[%s1 + $0x18] sm:$0xf]
  %v47 = vld [vmem:[%s1 + $0x1c] sm:$0xf]
  %v48 = vld [vmem:[%s1 + $0x20] sm:$0xf]
  %v49 = vld [vmem:[%s1 + $0x24] sm:$0xf]
  %v50 = vld [vmem:[%s1 + $0x28] sm:$0xf]
  %v51 = vld [vmem:[%s1 + $0x2c] sm:$0xf]
  %v52 = vld [vmem:[%s1 + $0x30] sm:$0xf]
  %v53 = vld [vmem:[%s1 + $0x34] sm:$0xf]
  %v54 = vld [vmem:[%s1 + $0x38] sm:$0xf]
  %v55 = vld [vmem:[%s1 + $0x3c] sm:$0xf]
  %v60 = vunpack.c.l.b16 %v36
  %v61 = vunpack.c.l.b16 %v37
  %v62 = vunpack.c.l.b16 %v38
  %v63 = vunpack.c.l.b16 %v39
  %v64 = vpack.c.b16 %v61, %v60
  %v65 = vpack.c.b16 %v63, %v62
  %v84 = vunpack.c.l.b16 %v40
  %v85 = vunpack.c.l.b16 %v41
  %v86 = vunpack.c.l.b16 %v42
  %v87 = vunpack.c.l.b16 %v43
  %v88 = vunpack.c.l.b16 %v44
  %v89 = vunpack.c.l.b16 %v45
  %v90 = vunpack.c.l.b16 %v46
  %v91 = vunpack.c.l.b16 %v47
  %v92 = vunpack.c.l.b16 %v48
  %v93 = vunpack.c.l.b16 %v49
  %v94 = vunpack.c.l.b16 %v50
  %v95 = vunpack.c.l.b16 %v51
  %v96 = vunpack.c.l.b16 %v52
  %v97 = vunpack.c.l.b16 %v53
  %v98 = vunpack.c.l.b16 %v54
  %v99 = vunpack.c.l.b16 %v55
  %v100 = vpack.c.b16 %v85, %v84
  %v101 = vpack.c.b16 %v87, %v86
  %v102 = vpack.c.b16 %v89, %v88
  %v103 = vpack.c.b16 %v91, %v90
  %v104 = vpack.c.b16 %v93, %v92
  %v105 = vpack.c.b16 %v95, %v94
  %v106 = vpack.c.b16 %v97, %v96
  %v107 = vpack.c.b16 %v99, %v98
  %116 = vmatprep.subr.bf16.mxu0 0
  %117 = vmatpush1.bf16.msra.mxu0 %v100
  %118 = vmatprep.subr.bf16.mxu0 0
  %119 = vmatpush1.bf16.msra.mxu0 %v101
  %120 = vmatprep.subr.bf16.mxu0 0
  %121 = vmatpush1.bf16.msra.mxu0 %v102
  %122 = vmatprep.subr.bf16.mxu0 0
  %123 = vmatpush1.bf16.msra.mxu0 %v103
  %124 = vmatprep.subr.bf16.mxu0 0
  %125 = vmatpush1.bf16.msra.mxu0 %v104
  %126 = vmatprep.subr.bf16.mxu0 0
  %127 = vmatpush1.bf16.msra.mxu0 %v105
  %128 = vmatprep.subr.bf16.mxu0 0
  %129 = vmatpush1.bf16.msra.mxu0 %v106
  %130 = vmatprep.subr.bf16.mxu0 0
  %131 = vmatpush1.bf16.msra.mxu0 %v107
  %132 = vmatprep.subr.bf16.mxu0 0
  %133 = vmatpush1.bf16.msra.mxu0 0
  %134 = vmatprep.subr.bf16.mxu0 0
  %135 = vmatpush1.bf16.msra.mxu0 0
  %136 = vmatprep.subr.bf16.mxu0 0
  %137 = vmatpush1.bf16.msra.mxu0 0
  %138 = vmatprep.subr.bf16.mxu0 0
  %139 = vmatpush1.bf16.msra.mxu0 0
  %140 = vmatprep.subr.bf16.mxu0 0
  %141 = vmatpush1.bf16.msra.mxu0 0
  %142 = vmatprep.subr.bf16.mxu0 0
  %143 = vmatpush1.bf16.msra.mxu0 0
  %144 = vmatprep.subr.bf16.mxu0 0
  %145 = vmatpush1.bf16.msra.mxu0 0
  %146 = vmatprep.subr.bf16.mxu0 0
  %147 = vmatpush1.bf16.msra.mxu0 0
  %148 = vmatprep.mubr.bf16.mxu0 0
  %149 = vmatmul.mubr.bf16.gmra.mrb[0].mxu0 %v64
  %v150 = vpop.f32.mrb[0].mxu0
  %v151 = vadd.f32 0.0, %v150
  %v152 = vpop.f32.mrb[0].mxu0
  %v153 = vpop.f32.mrb[0].mxu0
  %v154 = vadd.f32 0.0, %v153
  %v155 = vpop.f32.mrb[0].mxu0
  %156 = vmatprep.mubr.bf16.mxu0 0
  %157 = vmatmul.mubr.bf16.gmra.mrb[0].mxu0 %v65
  %v158 = vpop.f32.mrb[0].mxu0
  %v159 = vadd.f32 0.0, %v158
  %v160 = vpop.f32.mrb[0].mxu0
  %v161 = vpop.f32.mrb[0].mxu0
  %v162 = vadd.f32 0.0, %v161
  %v163 = vpop.f32.mrb[0].mxu0
  %164 = vdwg.mxu0
  %v165 = vadd.f32 %v32, %v151
  %v166 = vadd.f32 %v33, %v154
  %v167 = vadd.f32 %v34, %v159
  %v168 = vadd.f32 %v35, %v162
  %169 = vst [vmem:[#allocation2] sm:$0xff] %v165
  %170 = vst [vmem:[#allocation2 + $0x8] sm:$0xff] %v166
  %171 = vst [vmem:[#allocation2 + $0x10] sm:$0xff] %v167
  %172 = vst [vmem:[#allocation2 + $0x18] sm:$0xff] %v168
  // Predicated region
  $region30: #{transformer_decoder_layer.10} parent=0 // pred_check
    %p173 = pneg %p24
  $region31: #{transformer_decoder_layer.10} parent=0 // pred_check_branch
    %175 = sbr.rel (%p173) target = $region33
  $region32: #{transformer_decoder_layer.10} parent=0 // pred_region
    %v176 = vld [vmem:[#allocation2] sm:$0xff]
    %v177 = vld [vmem:[#allocation2 + $0x8] sm:$0xff]
    %v178 = vld [vmem:[#allocation2 + $0x10] sm:$0xff]
    %v179 = vld [vmem:[#allocation2 + $0x18] sm:$0xff]
    %v180 = vld [vmem:[%s2] sm:$0x1]
    %v182 = vlaneseq
    %v183 = vshrl.u32 %v182, 7
    %v184 = vsub.s32 0, %v183
    %v185 = vrot.slane %v180, %v184
    %v187 = vadd.f32 %v176, %v185
    %v188 = vadd.f32 %v177, %v185
    %v189 = vadd.f32 %v178, %v185
    %v190 = vadd.f32 %v179, %v185
    %v191 = vld [vmem:[%s3] sm:$0xff]
    %v192 = vld [vmem:[%s3 + $0x8] sm:$0xff]
    %v193 = vld [vmem:[%s3 + $0x10] sm:$0xff]
    %v194 = vld [vmem:[%s3 + $0x18] sm:$0xff]
    %v195 = vadd.f32 %v187, %v191
    %v196 = vadd.f32 %v188, %v192
    %v197 = vadd.f32 %v189, %v193
    %v198 = vadd.f32 %v190, %v194
    %199 = vadd.xlane.f32.xlu0 %v195
    %v200 = vpop.xlane.xlu0 %199
    %201 = vadd.xlane.f32.xlu0 %v196
    %v202 = vpop.xlane.xlu0 %201
    %203 = vadd.xlane.f32.xlu0 %v197
    %v204 = vpop.xlane.xlu0 %203
    %205 = vadd.xlane.f32.xlu0 %v198
    %v206 = vpop.xlane.xlu0 %205
    %v207 = vrcp.pop 128.0
    %v208 = vmul.f32 %v200, %v207
    %v209 = vmul.f32 %v202, %v207
    %v210 = vmul.f32 %v204, %v207
    %v211 = vmul.f32 %v206, %v207
    %v212 = vsub.f32 %v195, %v208
    %v213 = vsub.f32 %v196, %v209
    %v214 = vsub.f32 %v197, %v210
    %v215 = vsub.f32 %v198, %v211
    %v216 = vmul.f32 %v212, %v212
    %v217 = vmul.f32 %v213, %v213
    %v218 = vmul.f32 %v214, %v214
    %v219 = vmul.f32 %v215, %v215
    %220 = vadd.xlane.f32.xlu0 %v216
    %v221 = vpop.xlane.xlu0 %220
    %222 = vadd.xlane.f32.xlu0 %v217
    %v223 = vpop.xlane.xlu0 %222
    %224 = vadd.xlane.f32.xlu0 %v218
    %v225 = vpop.xlane.xlu0 %224
    %226 = vadd.xlane.f32.xlu0 %v219
    %v227 = vpop.xlane.xlu0 %226
    %v228 = vmul.f32 %v221, %v207
    %v229 = vmul.f32 %v223, %v207
    %v230 = vmul.f32 %v225, %v207
    %v231 = vmul.f32 %v227, %v207
    %v232 = vadd.f32 %v228, 1e-05
    %v233 = vadd.f32 %v229, 1e-05
    %v234 = vadd.f32 %v230, 1e-05
    %v235 = vadd.f32 %v231, 1e-05
    %v236 = vrsqrt.pop %v232
    %v237 = vrsqrt.pop %v233
    %v238 = vrsqrt.pop %v234
    %v239 = vrsqrt.pop %v235
    %v240 = vmul.f32 %v212, %v236
    %v241 = vmul.f32 %v213, %v237
    %v242 = vmul.f32 %v214, %v238
    %v243 = vmul.f32 %v215, %v239
    %v244 = vld [vmem:[%s4] sm:$0x1]
    %v246 = vlaneseq
    %v247 = vshrl.u32 %v246, 7
    %v248 = vsub.s32 0, %v247
    %v249 = vrot.slane %v244, %v248
    %v251 = vmul.f32 %v240, %v249
    %v252 = vmul.f32 %v241, %v249
    %v253 = vmul.f32 %v242, %v249
    %v254 = vmul.f32 %v243, %v249
    %v255 = vld [vmem:[%s5] sm:$0x1]
    %v257 = vlaneseq
    %v258 = vshrl.u32 %v257, 7
    %v259 = vsub.s32 0, %v258
    %v260 = vrot.slane %v255, %v259
    %v262 = vadd.f32 %v251, %v260
    %v263 = vadd.f32 %v252, %v260
    %v264 = vadd.f32 %v253, %v260
    %v265 = vadd.f32 %v254, %v260
    %266 = vst [vmem:[%s6] sm:$0xff] %v262
    %267 = vst [vmem:[%s6 + $0x8] sm:$0xff] %v263
    %268 = vst [vmem:[%s6 + $0x10] sm:$0xff] %v264
    %269 = vst [vmem:[%s6 + $0x18] sm:$0xff] %v265
  $region33: #{transformer_decoder_layer.10} parent=0 // pred_fallthru
    _
  // Predicated region
  $region34: #{transformer_decoder_layer.10} parent=0 // pred_check
    _
  $region35: #{transformer_decoder_layer.10} parent=0 // pred_check_branch
    %271 = sbr.rel (0) target = $region37
  $region36: #{transformer_decoder_layer.10} parent=0 // pred_region
    _
  $region37: #{transformer_decoder_layer.10} parent=0 // pred_fallthru
    _
  // Predicated region
  $region38: #{transformer_decoder_layer.10} parent=0 // pred_check
    _
  $region39: #{transformer_decoder_layer.10} parent=0 // pred_check_branch
    %273 = sbr.rel (0) target = $region41
  $region40: #{transformer_decoder_layer.10} parent=0 // pred_region
    _
  $region41: #{transformer_decoder_layer.10} parent=0 // pred_fallthru
    _

// kernel: transformer_decoder_layer.11
$region0: #{transformer_decoder_layer.11}
  #allocation0 [shape = 'u32[]', space=smem, size = 0x4, offset = 0x4, fixed_abs, tag = 'smem constant byte address 0x4 - core index']
  #allocation1 [shape = 'u32[144,128]{1,0:T(1,128)}', space=vmem, size = 0x12000, scoped, tag = 'internal scratch']
  #allocation2 [shape = 'f32[32,128]{1,0:T(8,128)}', space=vmem, size = 0x4000, scoped, tag = 'scratch operand']
  %s0 = inlined_call_operand.vmem [shape: f32[32,128], index: 0, kind: input, shape index: {}]
  %s1 = inlined_call_operand.vmem [shape: bf16[128,128], index: 1, kind: input, shape index: {}]
  %s2 = inlined_call_operand.vmem [shape: f32[1,128], index: 2, kind: input, shape index: {}]
  %s3 = inlined_call_operand.vmem [shape: bf16[32,128], index: 3, kind: output, shape index: {}]
  %s4 = sld [smem:[#allocation0]]
  $region30: #{transformer_decoder_layer.11} parent=0
    _
  %s6 = ssub.s32 1, %s4
  %s7 = scalar_select 0, %s6, %s4
  // Predicated region
  $region2: #{transformer_decoder_layer.11} parent=0 // pred_check
    _
  $region3: #{transformer_decoder_layer.11} parent=0 // pred_check_branch
    %9 = sbr.rel (0) target = $region5
  $region4: #{transformer_decoder_layer.11} parent=0 // pred_region
    _
  $region5: #{transformer_decoder_layer.11} parent=0 // pred_fallthru
    _
  // Predicated region
  $region6: #{transformer_decoder_layer.11} parent=0 // pred_check
    _
  $region7: #{transformer_decoder_layer.11} parent=0 // pred_check_branch
    %11 = sbr.rel (0) target = $region9
  $region8: #{transformer_decoder_layer.11} parent=0 // pred_region
    _
  $region9: #{transformer_decoder_layer.11} parent=0 // pred_fallthru
    _
  // Predicated region
  $region10: #{transformer_decoder_layer.11} parent=0 // pred_check
    _
  $region11: #{transformer_decoder_layer.11} parent=0 // pred_check_branch
    %13 = sbr.rel (0) target = $region13
  $region12: #{transformer_decoder_layer.11} parent=0 // pred_region
    _
  $region13: #{transformer_decoder_layer.11} parent=0 // pred_fallthru
    _
  %p15 = scmp.eq.s32.totalorder 0, 0
  // Predicated region
  $region14: #{transformer_decoder_layer.11} parent=0 // pred_check
    %p16 = pneg %p15
  $region15: #{transformer_decoder_layer.11} parent=0 // pred_check_branch
    %18 = sbr.rel (%p16) target = $region17
  $region16: #{transformer_decoder_layer.11} parent=0 // pred_region
    %19 = vst [vmem:[#allocation2] sm:$0xff] 0.0
    %20 = vst [vmem:[#allocation2 + $0x8] sm:$0xff] 0.0
    %21 = vst [vmem:[#allocation2 + $0x10] sm:$0xff] 0.0
    %22 = vst [vmem:[#allocation2 + $0x18] sm:$0xff] 0.0
  $region17: #{transformer_decoder_layer.11} parent=0 // pred_fallthru
    _
  %v23 = vld [vmem:[#allocation2] sm:$0xff]
  %v24 = vld [vmem:[#allocation2 + $0x8] sm:$0xff]
  %v25 = vld [vmem:[#allocation2 + $0x10] sm:$0xff]
  %v26 = vld [vmem:[#allocation2 + $0x18] sm:$0xff]
  %v27 = vld [vmem:[%s0] sm:$0xff]
  %v28 = vld [vmem:[%s0 + $0x8] sm:$0xff]
  %v29 = vld [vmem:[%s0 + $0x10] sm:$0xff]
  %v30 = vld [vmem:[%s0 + $0x18] sm:$0xff]
  %v31 = vpack.c.bf16 %v28, %v27
  %v32 = vpack.c.bf16 %v30, %v29
  %v33 = vld [vmem:[%s1] sm:$0xf]
  %v34 = vld [vmem:[%s1 + $0x4] sm:$0xf]
  %v35 = vld [vmem:[%s1 + $0x8] sm:$0xf]
  %v36 = vld [vmem:[%s1 + $0xc] sm:$0xf]
  %v37 = vld [vmem:[%s1 + $0x10] sm:$0xf]
  %v38 = vld [vmem:[%s1 + $0x14] sm:$0xf]
  %v39 = vld [vmem:[%s1 + $0x18] sm:$0xf]
  %v40 = vld [vmem:[%s1 + $0x1c] sm:$0xf]
  %v41 = vld [vmem:[%s1 + $0x20] sm:$0xf]
  %v42 = vld [vmem:[%s1 + $0x24] sm:$0xf]
  %v43 = vld [vmem:[%s1 + $0x28] sm:$0xf]
  %v44 = vld [vmem:[%s1 + $0x2c] sm:$0xf]
  %v45 = vld [vmem:[%s1 + $0x30] sm:$0xf]
  %v46 = vld [vmem:[%s1 + $0x34] sm:$0xf]
  %v47 = vld [vmem:[%s1 + $0x38] sm:$0xf]
  %v48 = vld [vmem:[%s1 + $0x3c] sm:$0xf]
  %v65 = vunpack.c.l.b16 %v33
  %v66 = vunpack.c.l.b16 %v34
  %v67 = vunpack.c.l.b16 %v35
  %v68 = vunpack.c.l.b16 %v36
  %v69 = vunpack.c.l.b16 %v37
  %v70 = vunpack.c.l.b16 %v38
  %v71 = vunpack.c.l.b16 %v39
  %v72 = vunpack.c.l.b16 %v40
  %v73 = vunpack.c.l.b16 %v41
  %v74 = vunpack.c.l.b16 %v42
  %v75 = vunpack.c.l.b16 %v43
  %v76 = vunpack.c.l.b16 %v44
  %v77 = vunpack.c.l.b16 %v45
  %v78 = vunpack.c.l.b16 %v46
  %v79 = vunpack.c.l.b16 %v47
  %v80 = vunpack.c.l.b16 %v48
  %v81 = vpack.c.b16 %v66, %v65
  %v82 = vpack.c.b16 %v68, %v67
  %v83 = vpack.c.b16 %v70, %v69
  %v84 = vpack.c.b16 %v72, %v71
  %v85 = vpack.c.b16 %v74, %v73
  %v86 = vpack.c.b16 %v76, %v75
  %v87 = vpack.c.b16 %v78, %v77
  %v88 = vpack.c.b16 %v80, %v79
  %97 = vmatprep.subr.bf16.mxu0 0
  %98 = vmatpush1.bf16.msra.mxu0 %v81
  %99 = vmatprep.subr.bf16.mxu0 0
  %100 = vmatpush1.bf16.msra.mxu0 %v82
  %101 = vmatprep.subr.bf16.mxu0 0
  %102 = vmatpush1.bf16.msra.mxu0 %v83
  %103 = vmatprep.subr.bf16.mxu0 0
  %104 = vmatpush1.bf16.msra.mxu0 %v84
  %105 = vmatprep.subr.bf16.mxu0 0
  %106 = vmatpush1.bf16.msra.mxu0 %v85
  %107 = vmatprep.subr.bf16.mxu0 0
  %108 = vmatpush1.bf16.msra.mxu0 %v86
  %109 = vmatprep.subr.bf16.mxu0 0
  %110 = vmatpush1.bf16.msra.mxu0 %v87
  %111 = vmatprep.subr.bf16.mxu0 0
  %112 = vmatpush1.bf16.msra.mxu0 %v88
  %113 = vmatprep.subr.bf16.mxu0 0
  %114 = vmatpush1.bf16.msra.mxu0 0
  %115 = vmatprep.subr.bf16.mxu0 0
  %116 = vmatpush1.bf16.msra.mxu0 0
  %117 = vmatprep.subr.bf16.mxu0 0
  %118 = vmatpush1.bf16.msra.mxu0 0
  %119 = vmatprep.subr.bf16.mxu0 0
  %120 = vmatpush1.bf16.msra.mxu0 0
  %121 = vmatprep.subr.bf16.mxu0 0
  %122 = vmatpush1.bf16.msra.mxu0 0
  %123 = vmatprep.subr.bf16.mxu0 0
  %124 = vmatpush1.bf16.msra.mxu0 0
  %125 = vmatprep.subr.bf16.mxu0 0
  %126 = vmatpush1.bf16.msra.mxu0 0
  %127 = vmatprep.subr.bf16.mxu0 0
  %128 = vmatpush1.bf16.msra.mxu0 0
  %129 = vmatprep.mubr.bf16.mxu0 0
  %130 = vmatmul.mubr.bf16.gmra.mrb[0].mxu0 %v31
  %v131 = vpop.f32.mrb[0].mxu0
  %v132 = vadd.f32 0.0, %v131
  %v133 = vpop.f32.mrb[0].mxu0
  %v134 = vpop.f32.mrb[0].mxu0
  %v135 = vadd.f32 0.0, %v134
  %v136 = vpop.f32.mrb[0].mxu0
  %137 = vmatprep.mubr.bf16.mxu0 0
  %138 = vmatmul.mubr.bf16.gmra.mrb[0].mxu0 %v32
  %v139 = vpop.f32.mrb[0].mxu0
  %v140 = vadd.f32 0.0, %v139
  %v141 = vpop.f32.mrb[0].mxu0
  %v142 = vpop.f32.mrb[0].mxu0
  %v143 = vadd.f32 0.0, %v142
  %v144 = vpop.f32.mrb[0].mxu0
  %145 = vdwg.mxu0
  %v146 = vadd.f32 %v23, %v132
  %v147 = vadd.f32 %v24, %v135
  %v148 = vadd.f32 %v25, %v140
  %v149 = vadd.f32 %v26, %v143
  %150 = vst [vmem:[#allocation2] sm:$0xff] %v146
  %151 = vst [vmem:[#allocation2 + $0x8] sm:$0xff] %v147
  %152 = vst [vmem:[#allocation2 + $0x10] sm:$0xff] %v148
  %153 = vst [vmem:[#allocation2 + $0x18] sm:$0xff] %v149
  // Predicated region
  $region18: #{transformer_decoder_layer.11} parent=0 // pred_check
    %p154 = pneg %p15
  $region19: #{transformer_decoder_layer.11} parent=0 // pred_check_branch
    %156 = sbr.rel (%p154) target = $region21
  $region20: #{transformer_decoder_layer.11} parent=0 // pred_region
    %v157 = vld [vmem:[#allocation2] sm:$0xff]
    %v158 = vld [vmem:[#allocation2 + $0x8] sm:$0xff]
    %v159 = vld [vmem:[#allocation2 + $0x10] sm:$0xff]
    %v160 = vld [vmem:[#allocation2 + $0x18] sm:$0xff]
    %v161 = vld [vmem:[%s2] sm:$0x1]
    %v163 = vlaneseq
    %v164 = vshrl.u32 %v163, 7
    %v165 = vsub.s32 0, %v164
    %v166 = vrot.slane %v161, %v165
    %v168 = vadd.f32 %v157, %v166
    %v169 = vadd.f32 %v158, %v166
    %v170 = vadd.f32 %v159, %v166
    %v171 = vadd.f32 %v160, %v166
    %v172 = vpack.c.bf16 %v169, %v168
    %v173 = vpack.c.bf16 %v171, %v170
    %v176 = vunpack.c.l.b16 %v172
    %v177 = vunpack.c.h.b16 %v172
    %v178 = vunpack.c.l.b16 %v173
    %v179 = vunpack.c.h.b16 %v173
    %v180 = vpack.c.b16 %v176, %v176
    %v181 = vpack.c.b16 %v177, %v177
    %v182 = vpack.c.b16 %v178, %v178
    %v183 = vpack.c.b16 %v179, %v179
    %188 = vst [vmem:[%s3] sm:$0xf] %v180
    %189 = vst [vmem:[%s3 + $0x4] sm:$0xf] %v181
    %190 = vst [vmem:[%s3 + $0x8] sm:$0xf] %v182
    %191 = vst [vmem:[%s3 + $0xc] sm:$0xf] %v183
  $region21: #{transformer_decoder_layer.11} parent=0 // pred_fallthru
    _
  // Predicated region
  $region22: #{transformer_decoder_layer.11} parent=0 // pred_check
    _
  $region23: #{transformer_decoder_layer.11} parent=0 // pred_check_branch
    %193 = sbr.rel (0) target = $region25
  $region24: #{transformer_decoder_layer.11} parent=0 // pred_region
    _
  $region25: #{transformer_decoder_layer.11} parent=0 // pred_fallthru
    _
  // Predicated region
  $region26: #{transformer_decoder_layer.11} parent=0 // pred_check
    _
  $region27: #{transformer_decoder_layer.11} parent=0 // pred_check_branch
    %195 = sbr.rel (0) target = $region29
  $region28: #{transformer_decoder_layer.11} parent=0 // pred_region
    _
  $region29: #{transformer_decoder_layer.11} parent=0 // pred_fallthru
    _

// kernel: transformer_decoder_layer.12
$region0: #{transformer_decoder_layer.12}
  #allocation0 [shape = 'u32[]', space=smem, size = 0x4, offset = 0x4, fixed_abs, tag = 'smem constant byte address 0x4 - core index']
  #allocation1 [shape = 'u32[144,128]{1,0:T(1,128)}', space=vmem, size = 0x12000, scoped, tag = 'internal scratch']
  #allocation2 [shape = 'f32[64,256]{1,0:T(8,128)}', space=vmem, size = 0x10000, scoped, tag = 'scratch operand']
  %s0 = inlined_call_operand.vmem [shape: f32[64,128], index: 0, kind: input, shape index: {}]
  %s1 = inlined_call_operand.vmem [shape: bf16[128,256], index: 1, kind: input, shape index: {}]
  %s2 = inlined_call_operand.vmem [shape: f32[1,256], index: 2, kind: input, shape index: {}]
  %s3 = inlined_call_operand.vmem [shape: bf16[64,256], index: 3, kind: output, shape index: {}]
  %s4 = sld [smem:[#allocation0]]
  $region30: #{transformer_decoder_layer.12} parent=0
    _
  %s6 = ssub.s32 1, %s4
  %s7 = scalar_select 0, %s6, %s4
  // Predicated region
  $region2: #{transformer_decoder_layer.12} parent=0 // pred_check
    _
  $region3: #{transformer_decoder_layer.12} parent=0 // pred_check_branch
    %9 = sbr.rel (0) target = $region5
  $region4: #{transformer_decoder_layer.12} parent=0 // pred_region
    _
  $region5: #{transformer_decoder_layer.12} parent=0 // pred_fallthru
    _
  // Predicated region
  $region6: #{transformer_decoder_layer.12} parent=0 // pred_check
    _
  $region7: #{transformer_decoder_layer.12} parent=0 // pred_check_branch
    %11 = sbr.rel (0) target = $region9
  $region8: #{transformer_decoder_layer.12} parent=0 // pred_region
    _
  $region9: #{transformer_decoder_layer.12} parent=0 // pred_fallthru
    _
  // Predicated region
  $region10: #{transformer_decoder_layer.12} parent=0 // pred_check
    _
  $region11: #{transformer_decoder_layer.12} parent=0 // pred_check_branch
    %13 = sbr.rel (0) target = $region13
  $region12: #{transformer_decoder_layer.12} parent=0 // pred_region
    _
  $region13: #{transformer_decoder_layer.12} parent=0 // pred_fallthru
    _
  %p15 = scmp.eq.s32.totalorder 0, 0
  // Predicated region
  $region14: #{transformer_decoder_layer.12} parent=0 // pred_check
    %p16 = pneg %p15
  $region15: #{transformer_decoder_layer.12} parent=0 // pred_check_branch
    %18 = sbr.rel (%p16) target = $region17
  $region16: #{transformer_decoder_layer.12} parent=0 // pred_region
    %19 = vst [vmem:[#allocation2] sm:$0xff] 0.0
    %20 = vst [vmem:[#allocation2 + $0x8] sm:$0xff] 0.0
    %21 = vst [vmem:[#allocation2 + $0x10] sm:$0xff] 0.0
    %22 = vst [vmem:[#allocation2 + $0x18] sm:$0xff] 0.0
    %23 = vst [vmem:[#allocation2 + $0x20] sm:$0xff] 0.0
    %24 = vst [vmem:[#allocation2 + $0x28] sm:$0xff] 0.0
    %25 = vst [vmem:[#allocation2 + $0x30] sm:$0xff] 0.0
    %26 = vst [vmem:[#allocation2 + $0x38] sm:$0xff] 0.0
    %27 = vst [vmem:[#allocation2 + $0x40] sm:$0xff] 0.0
    %28 = vst [vmem:[#allocation2 + $0x48] sm:$0xff] 0.0
    %29 = vst [vmem:[#allocation2 + $0x50] sm:$0xff] 0.0
    %30 = vst [vmem:[#allocation2 + $0x58] sm:$0xff] 0.0
    %31 = vst [vmem:[#allocation2 + $0x60] sm:$0xff] 0.0
    %32 = vst [vmem:[#allocation2 + $0x68] sm:$0xff] 0.0
    %33 = vst [vmem:[#allocation2 + $0x70] sm:$0xff] 0.0
    %34 = vst [vmem:[#allocation2 + $0x78] sm:$0xff] 0.0
  $region17: #{transformer_decoder_layer.12} parent=0 // pred_fallthru
    _
  %v35 = vld [vmem:[#allocation2] sm:$0xff]
  %v36 = vld [vmem:[#allocation2 + $0x8] sm:$0xff]
  %v37 = vld [vmem:[#allocation2 + $0x10] sm:$0xff]
  %v38 = vld [vmem:[#allocation2 + $0x18] sm:$0xff]
  %v39 = vld [vmem:[#allocation2 + $0x20] sm:$0xff]
  %v40 = vld [vmem:[#allocation2 + $0x28] sm:$0xff]
  %v41 = vld [vmem:[#allocation2 + $0x30] sm:$0xff]
  %v42 = vld [vmem:[#allocation2 + $0x38] sm:$0xff]
  %v43 = vld [vmem:[#allocation2 + $0x40] sm:$0xff]
  %v44 = vld [vmem:[#allocation2 + $0x48] sm:$0xff]
  %v45 = vld [vmem:[#allocation2 + $0x50] sm:$0xff]
  %v46 = vld [vmem:[#allocation2 + $0x58] sm:$0xff]
  %v47 = vld [vmem:[#allocation2 + $0x60] sm:$0xff]
  %v48 = vld [vmem:[#allocation2 + $0x68] sm:$0xff]
  %v49 = vld [vmem:[#allocation2 + $0x70] sm:$0xff]
  %v50 = vld [vmem:[#allocation2 + $0x78] sm:$0xff]
  %v51 = vld [vmem:[%s0] sm:$0xff]
  %v52 = vld [vmem:[%s0 + $0x8] sm:$0xff]
  %v53 = vld [vmem:[%s0 + $0x10] sm:$0xff]
  %v54 = vld [vmem:[%s0 + $0x18] sm:$0xff]
  %v55 = vld [vmem:[%s0 + $0x20] sm:$0xff]
  %v56 = vld [vmem:[%s0 + $0x28] sm:$0xff]
  %v57 = vld [vmem:[%s0 + $0x30] sm:$0xff]
  %v58 = vld [vmem:[%s0 + $0x38] sm:$0xff]
  %v59 = vpack.c.bf16 %v52, %v51
  %v60 = vpack.c.bf16 %v54, %v53
  %v61 = vpack.c.bf16 %v56, %v55
  %v62 = vpack.c.bf16 %v58, %v57
  %v63 = vld [vmem:[%s1] sm:$0xff]
  %v64 = vld [vmem:[%s1 + $0x8] sm:$0xff]
  %v65 = vld [vmem:[%s1 + $0x10] sm:$0xff]
  %v66 = vld [vmem:[%s1 + $0x18] sm:$0xff]
  %v67 = vld [vmem:[%s1 + $0x20] sm:$0xff]
  %v68 = vld [vmem:[%s1 + $0x28] sm:$0xff]
  %v69 = vld [vmem:[%s1 + $0x30] sm:$0xff]
  %v70 = vld [vmem:[%s1 + $0x38] sm:$0xff]
  %v71 = vld [vmem:[%s1 + $0x40] sm:$0xff]
  %v72 = vld [vmem:[%s1 + $0x48] sm:$0xff]
  %v73 = vld [vmem:[%s1 + $0x50] sm:$0xff]
  %v74 = vld [vmem:[%s1 + $0x58] sm:$0xff]
  %v75 = vld [vmem:[%s1 + $0x60] sm:$0xff]
  %v76 = vld [vmem:[%s1 + $0x68] sm:$0xff]
  %v77 = vld [vmem:[%s1 + $0x70] sm:$0xff]
  %v78 = vld [vmem:[%s1 + $0x78] sm:$0xff]
  %v95 = vunpack.c.l.b16 %v63
  %v96 = vunpack.c.h.b16 %v63
  %v97 = vunpack.c.l.b16 %v64
  %v98 = vunpack.c.h.b16 %v64
  %v99 = vunpack.c.l.b16 %v65
  %v100 = vunpack.c.h.b16 %v65
  %v101 = vunpack.c.l.b16 %v66
  %v102 = vunpack.c.h.b16 %v66
  %v103 = vunpack.c.l.b16 %v67
  %v104 = vunpack.c.h.b16 %v67
  %v105 = vunpack.c.l.b16 %v68
  %v106 = vunpack.c.h.b16 %v68
  %v107 = vunpack.c.l.b16 %v69
  %v108 = vunpack.c.h.b16 %v69
  %v109 = vunpack.c.l.b16 %v70
  %v110 = vunpack.c.h.b16 %v70
  %v111 = vunpack.c.l.b16 %v71
  %v112 = vunpack.c.h.b16 %v71
  %v113 = vunpack.c.l.b16 %v72
  %v114 = vunpack.c.h.b16 %v72
  %v115 = vunpack.c.l.b16 %v73
  %v116 = vunpack.c.h.b16 %v73
  %v117 = vunpack.c.l.b16 %v74
  %v118 = vunpack.c.h.b16 %v74
  %v119 = vunpack.c.l.b16 %v75
  %v120 = vunpack.c.h.b16 %v75
  %v121 = vunpack.c.l.b16 %v76
  %v122 = vunpack.c.h.b16 %v76
  %v123 = vunpack.c.l.b16 %v77
  %v124 = vunpack.c.h.b16 %v77
  %v125 = vunpack.c.l.b16 %v78
  %v126 = vunpack.c.h.b16 %v78
  %v127 = vpack.c.b16 %v97, %v95
  %v128 = vpack.c.b16 %v98, %v96
  %v129 = vpack.c.b16 %v101, %v99
  %v130 = vpack.c.b16 %v102, %v100
  %v131 = vpack.c.b16 %v105, %v103
  %v132 = vpack.c.b16 %v106, %v104
  %v133 = vpack.c.b16 %v109, %v107
  %v134 = vpack.c.b16 %v110, %v108
  %v135 = vpack.c.b16 %v113, %v111
  %v136 = vpack.c.b16 %v114, %v112
  %v137 = vpack.c.b16 %v117, %v115
  %v138 = vpack.c.b16 %v118, %v116
  %v139 = vpack.c.b16 %v121, %v119
  %v140 = vpack.c.b16 %v122, %v120
  %v141 = vpack.c.b16 %v125, %v123
  %v142 = vpack.c.b16 %v126, %v124
  %159 = vmatprep.subr.bf16.mxu0 %v128
  %160 = vmatpush1.bf16.msra.mxu0 %v127
  %161 = vmatprep.subr.bf16.mxu0 %v130
  %162 = vmatpush1.bf16.msra.mxu0 %v129
  %163 = vmatprep.subr.bf16.mxu0 %v132
  %164 = vmatpush1.bf16.msra.mxu0 %v131
  %165 = vmatprep.subr.bf16.mxu0 %v134
  %166 = vmatpush1.bf16.msra.mxu0 %v133
  %167 = vmatprep.subr.bf16.mxu0 %v136
  %168 = vmatpush1.bf16.msra.mxu0 %v135
  %169 = vmatprep.subr.bf16.mxu0 %v138
  %170 = vmatpush1.bf16.msra.mxu0 %v137
  %171 = vmatprep.subr.bf16.mxu0 %v140
  %172 = vmatpush1.bf16.msra.mxu0 %v139
  %173 = vmatprep.subr.bf16.mxu0 %v142
  %174 = vmatpush1.bf16.msra.mxu0 %v141
  %175 = vmatprep.subr.bf16.mxu0 0
  %176 = vmatpush1.bf16.msra.mxu0 0
  %177 = vmatprep.subr.bf16.mxu0 0
  %178 = vmatpush1.bf16.msra.mxu0 0
  %179 = vmatprep.subr.bf16.mxu0 0
  %180 = vmatpush1.bf16.msra.mxu0 0
  %181 = vmatprep.subr.bf16.mxu0 0
  %182 = vmatpush1.bf16.msra.mxu0 0
  %183 = vmatprep.subr.bf16.mxu0 0
  %184 = vmatpush1.bf16.msra.mxu0 0
  %185 = vmatprep.subr.bf16.mxu0 0
  %186 = vmatpush1.bf16.msra.mxu0 0
  %187 = vmatprep.subr.bf16.mxu0 0
  %188 = vmatpush1.bf16.msra.mxu0 0
  %189 = vmatprep.subr.bf16.mxu0 0
  %190 = vmatpush1.bf16.msra.mxu0 0
  %191 = vmatprep.mubr.bf16.mxu0 0
  %192 = vmatmul.mubr.bf16.gmra.mrb[0].mxu0 %v59
  %v193 = vpop.f32.mrb[0].mxu0
  %v194 = vadd.f32 0.0, %v193
  %v195 = vpop.f32.mrb[0].mxu0
  %v196 = vadd.f32 0.0, %v195
  %v197 = vpop.f32.mrb[0].mxu0
  %v198 = vadd.f32 0.0, %v197
  %v199 = vpop.f32.mrb[0].mxu0
  %v200 = vadd.f32 0.0, %v199
  %201 = vmatprep.mubr.bf16.mxu0 0
  %202 = vmatmul.mubr.bf16.gmra.mrb[0].mxu0 %v60
  %v203 = vpop.f32.mrb[0].mxu0
  %v204 = vadd.f32 0.0, %v203
  %v205 = vpop.f32.mrb[0].mxu0
  %v206 = vadd.f32 0.0, %v205
  %v207 = vpop.f32.mrb[0].mxu0
  %v208 = vadd.f32 0.0, %v207
  %v209 = vpop.f32.mrb[0].mxu0
  %v210 = vadd.f32 0.0, %v209
  %211 = vmatprep.mubr.bf16.mxu0 0
  %212 = vmatmul.mubr.bf16.gmra.mrb[0].mxu0 %v61
  %v213 = vpop.f32.mrb[0].mxu0
  %v214 = vadd.f32 0.0, %v213
  %v215 = vpop.f32.mrb[0].mxu0
  %v216 = vadd.f32 0.0, %v215
  %v217 = vpop.f32.mrb[0].mxu0
  %v218 = vadd.f32 0.0, %v217
  %v219 = vpop.f32.mrb[0].mxu0
  %v220 = vadd.f32 0.0, %v219
  %221 = vmatprep.mubr.bf16.mxu0 0
  %222 = vmatmul.mubr.bf16.gmra.mrb[0].mxu0 %v62
  %v223 = vpop.f32.mrb[0].mxu0
  %v224 = vadd.f32 0.0, %v223
  %v225 = vpop.f32.mrb[0].mxu0
  %v226 = vadd.f32 0.0, %v225
  %v227 = vpop.f32.mrb[0].mxu0
  %v228 = vadd.f32 0.0, %v227
  %v229 = vpop.f32.mrb[0].mxu0
  %v230 = vadd.f32 0.0, %v229
  %231 = vdwg.mxu0
  %v232 = vadd.f32 %v35, %v194
  %v233 = vadd.f32 %v36, %v196
  %v234 = vadd.f32 %v37, %v198
  %v235 = vadd.f32 %v38, %v200
  %v236 = vadd.f32 %v39, %v204
  %v237 = vadd.f32 %v40, %v206
  %v238 = vadd.f32 %v41, %v208
  %v239 = vadd.f32 %v42, %v210
  %v240 = vadd.f32 %v43, %v214
  %v241 = vadd.f32 %v44, %v216
  %v242 = vadd.f32 %v45, %v218
  %v243 = vadd.f32 %v46, %v220
  %v244 = vadd.f32 %v47, %v224
  %v245 = vadd.f32 %v48, %v226
  %v246 = vadd.f32 %v49, %v228
  %v247 = vadd.f32 %v50, %v230
  %248 = vst [vmem:[#allocation2] sm:$0xff] %v232
  %249 = vst [vmem:[#allocation2 + $0x8] sm:$0xff] %v233
  %250 = vst [vmem:[#allocation2 + $0x10] sm:$0xff] %v234
  %251 = vst [vmem:[#allocation2 + $0x18] sm:$0xff] %v235
  %252 = vst [vmem:[#allocation2 + $0x20] sm:$0xff] %v236
  %253 = vst [vmem:[#allocation2 + $0x28] sm:$0xff] %v237
  %254 = vst [vmem:[#allocation2 + $0x30] sm:$0xff] %v238
  %255 = vst [vmem:[#allocation2 + $0x38] sm:$0xff] %v239
  %256 = vst [vmem:[#allocation2 + $0x40] sm:$0xff] %v240
  %257 = vst [vmem:[#allocation2 + $0x48] sm:$0xff] %v241
  %258 = vst [vmem:[#allocation2 + $0x50] sm:$0xff] %v242
  %259 = vst [vmem:[#allocation2 + $0x58] sm:$0xff] %v243
  %260 = vst [vmem:[#allocation2 + $0x60] sm:$0xff] %v244
  %261 = vst [vmem:[#allocation2 + $0x68] sm:$0xff] %v245
  %262 = vst [vmem:[#allocation2 + $0x70] sm:$0xff] %v246
  %263 = vst [vmem:[#allocation2 + $0x78] sm:$0xff] %v247
  // Predicated region
  $region18: #{transformer_decoder_layer.12} parent=0 // pred_check
    %p264 = pneg %p15
  $region19: #{transformer_decoder_layer.12} parent=0 // pred_check_branch
    %266 = sbr.rel (%p264) target = $region21
  $region20: #{transformer_decoder_layer.12} parent=0 // pred_region
    %v267 = vld [vmem:[#allocation2] sm:$0xff]
    %v268 = vld [vmem:[#allocation2 + $0x8] sm:$0xff]
    %v269 = vld [vmem:[#allocation2 + $0x10] sm:$0xff]
    %v270 = vld [vmem:[#allocation2 + $0x18] sm:$0xff]
    %v271 = vld [vmem:[#allocation2 + $0x20] sm:$0xff]
    %v272 = vld [vmem:[#allocation2 + $0x28] sm:$0xff]
    %v273 = vld [vmem:[#allocation2 + $0x30] sm:$0xff]
    %v274 = vld [vmem:[#allocation2 + $0x38] sm:$0xff]
    %v275 = vld [vmem:[#allocation2 + $0x40] sm:$0xff]
    %v276 = vld [vmem:[#allocation2 + $0x48] sm:$0xff]
    %v277 = vld [vmem:[#allocation2 + $0x50] sm:$0xff]
    %v278 = vld [vmem:[#allocation2 + $0x58] sm:$0xff]
    %v279 = vld [vmem:[#allocation2 + $0x60] sm:$0xff]
    %v280 = vld [vmem:[#allocation2 + $0x68] sm:$0xff]
    %v281 = vld [vmem:[#allocation2 + $0x70] sm:$0xff]
    %v282 = vld [vmem:[#allocation2 + $0x78] sm:$0xff]
    %v283 = vld [vmem:[%s2] sm:$0x3]
    %v285 = vlaneseq
    %v286 = vshrl.u32 %v285, 7
    %v287 = vsub.s32 0, %v286
    %v288 = vrot.slane %v283, %v287
    %v289 = vlaneseq
    %v290 = vshrl.u32 %v289, 7
    %v291 = vsub.s32 1, %v290
    %v292 = vrot.slane %v283, %v291
    %v295 = vadd.f32 %v267, %v288
    %v296 = vadd.f32 %v268, %v292
    %v297 = vadd.f32 %v269, %v288
    %v298 = vadd.f32 %v270, %v292
    %v299 = vadd.f32 %v271, %v288
    %v300 = vadd.f32 %v272, %v292
    %v301 = vadd.f32 %v273, %v288
    %v302 = vadd.f32 %v274, %v292
    %v303 = vadd.f32 %v275, %v288
    %v304 = vadd.f32 %v276, %v292
    %v305 = vadd.f32 %v277, %v288
    %v306 = vadd.f32 %v278, %v292
    %v307 = vadd.f32 %v279, %v288
    %v308 = vadd.f32 %v280, %v292
    %v309 = vadd.f32 %v281, %v288
    %v310 = vadd.f32 %v282, %v292
    %v311 = vpack.c.bf16 %v297, %v295
    %v312 = vpack.c.bf16 %v298, %v296
    %v313 = vpack.c.bf16 %v301, %v299
    %v314 = vpack.c.bf16 %v302, %v300
    %v315 = vpack.c.bf16 %v305, %v303
    %v316 = vpack.c.bf16 %v306, %v304
    %v317 = vpack.c.bf16 %v309, %v307
    %v318 = vpack.c.bf16 %v310, %v308
    %v327 = vunpack.c.l.b16 %v311
    %v328 = vunpack.c.l.b16 %v312
    %v329 = vunpack.c.h.b16 %v311
    %v330 = vunpack.c.h.b16 %v312
    %v331 = vunpack.c.l.b16 %v313
    %v332 = vunpack.c.l.b16 %v314
    %v333 = vunpack.c.h.b16 %v313
    %v334 = vunpack.c.h.b16 %v314
    %v335 = vunpack.c.l.b16 %v315
    %v336 = vunpack.c.l.b16 %v316
    %v337 = vunpack.c.h.b16 %v315
    %v338 = vunpack.c.h.b16 %v316
    %v339 = vunpack.c.l.b16 %v317
    %v340 = vunpack.c.l.b16 %v318
    %v341 = vunpack.c.h.b16 %v317
    %v342 = vunpack.c.h.b16 %v318
    %v343 = vpack.c.b16 %v328, %v327
    %v344 = vpack.c.b16 %v330, %v329
    %v345 = vpack.c.b16 %v332, %v331
    %v346 = vpack.c.b16 %v334, %v333
    %v347 = vpack.c.b16 %v336, %v335
    %v348 = vpack.c.b16 %v338, %v337
    %v349 = vpack.c.b16 %v340, %v339
    %v350 = vpack.c.b16 %v342, %v341
    %359 = vst [vmem:[%s3] sm:$0xff] %v343
    %360 = vst [vmem:[%s3 + $0x8] sm:$0xff] %v344
    %361 = vst [vmem:[%s3 + $0x10] sm:$0xff] %v345
    %362 = vst [vmem:[%s3 + $0x18] sm:$0xff] %v346
    %363 = vst [vmem:[%s3 + $0x20] sm:$0xff] %v347
    %364 = vst [vmem:[%s3 + $0x28] sm:$0xff] %v348
    %365 = vst [vmem:[%s3 + $0x30] sm:$0xff] %v349
    %366 = vst [vmem:[%s3 + $0x38] sm:$0xff] %v350
  $region21: #{transformer_decoder_layer.12} parent=0 // pred_fallthru
    _
  // Predicated region
  $region22: #{transformer_decoder_layer.12} parent=0 // pred_check
    _
  $region23: #{transformer_decoder_layer.12} parent=0 // pred_check_branch
    %368 = sbr.rel (0) target = $region25
  $region24: #{transformer_decoder_layer.12} parent=0 // pred_region
    _
  $region25: #{transformer_decoder_layer.12} parent=0 // pred_fallthru
    _
  // Predicated region
  $region26: #{transformer_decoder_layer.12} parent=0 // pred_check
    _
  $region27: #{transformer_decoder_layer.12} parent=0 // pred_check_branch
    %370 = sbr.rel (0) target = $region29
  $region28: #{transformer_decoder_layer.12} parent=0 // pred_region
    _
  $region29: #{transformer_decoder_layer.12} parent=0 // pred_fallthru
    _

// kernel: transformer_decoder_layer.13
$region0: #{transformer_decoder_layer.13}
  #allocation0 [shape = 'u32[]', space=smem, size = 0x4, offset = 0x4, fixed_abs, tag = 'smem constant byte address 0x4 - core index']
  #allocation1 [shape = 'u32[144,128]{1,0:T(1,128)}', space=vmem, size = 0x12000, scoped, tag = 'internal scratch']
  %s0 = inlined_call_operand.vmem [shape: bf16[2,4,16,32], index: 0, kind: input, shape index: {}]
  %s1 = inlined_call_operand.vmem [shape: bf16[2,4,32,32], index: 1, kind: input, shape index: {}]
  %s2 = inlined_call_operand.vmem [shape: bf16[2,4,32,32], index: 2, kind: input, shape index: {}]
  %s3 = inlined_call_operand.vmem [shape: f32[2,1,32], index: 3, kind: input, shape index: {}]
  %s4 = inlined_call_operand.vmem [shape: bf16[2,4,16,32], index: 4, kind: output, shape index: {0}]
  %s5 = inlined_call_operand.hbm [shape: f32[2,16,32], index: 5, kind: output, shape index: {1}]
  %6 = xla_tuple %s4, %s5
  %s7 = sld [smem:[#allocation0]]
  $region65: #{transformer_decoder_layer.13} parent=0
    _
  %s9 = ssub.s32 1, %s7
  %s10 = scalar_select 0, %s9, %s7
  $region1: #{transformer_decoder_layer.13} parent=0
    #allocation2 [shape = 'u8[16384]{0}', space=vmem, size = 0x4000, scoped, tag = 'output window, operand 1']
    #allocation3 [shape = 's32[2]{0}', space=sflag, size = 0x8, scoped, tag = 'scoped memory for transformer_decoder_layer.13']
    %11 = vsyncpa [#allocation3], 0
    %s12 = scalar_lea.sflag [#allocation3], 1
    %13 = vsyncpa %s12, 0
    loop: start=0, step=1, limit=10
    $region2: #{transformer_decoder_layer.13} parent=1 // loop_pre_header
      _
    $region3: #{transformer_decoder_layer.13} parent=1 // loop_header
      %s15 = sphi 0, %s19
      %p16 = scmp.ge.s32.totalorder %s15, 10
      %s22 = sphi 0, %s41
      %s23 = sphi 0, %s37
      %s24 = sphi 0, %s33
      %s25 = sphi 0, %s22
      %s26 = sphi 0, %s23
      %s27 = sphi 0, %s24
      %s28 = sphi 0, %s25
      %s29 = sphi 0, %s26
      %s30 = sphi 0, %s27
      %s48 = sphi 0, %s50
      %s51 = sphi 0, %s48
      %s52 = sphi 0, %s51
      %s68 = sphi 0, %s52
      %s76 = sphi 0, %s78
      %s79 = sphi 0, %s76
      %s80 = sphi 0, %s79
      %s96 = sphi 0, %s80
      %s104 = sphi 0, %s106
      %s107 = sphi 0, %s104
      %s108 = sphi 0, %s107
      %s124 = sphi 0, %s108
      %s130 = sphi 0, %s132
      %s133 = sphi 0, %s130
      %s134 = sphi 0, %s133
      %s150 = sphi 0, %s134
      %s160 = sphi 0, %s162
      %s163 = sphi 0, %s160
      %s164 = sphi 0, %s163
      %s180 = sphi 0, %s164
      %s188 = sphi 0, %s190
      %s191 = sphi 0, %s188
      %s192 = sphi 0, %s191
      %s208 = sphi 0, %s192
    $region4: #{transformer_decoder_layer.13} parent=1 // loop_header_branch
      %18 = sbr.rel (%p16) target = $region8
    $region5: #{transformer_decoder_layer.13} parent=1 // loop_body
      %s20 = ssub.s32 %s15, 1
      %s21 = ssub.s32 %s15, 2
      %s31 = sadd.s32 1, %s24
      %p32 = scmp.ge.s32.totalorder %s31, 4
      %s33 = scalar_select %p32, 0, %s31
      %s34 = sadd.s32 1, %s23
      %s35 = scalar_select %p32, %s34, %s23
      %p36 = scmp.ge.s32.totalorder %s35, 1
      %s37 = scalar_select %p36, 0, %s35
      %s38 = sadd.s32 1, %s22
      %s39 = scalar_select %p36, %s38, %s22
      %p40 = scmp.ge.s32.totalorder %s39, 2
      %s41 = scalar_select %p40, 0, %s39
      %s42 = ssub.s32 %s22, %s41
      %s43 = ssub.s32 %s24, %s33
      %s44 = sor.u32 %s42, %s43
      %s45 = ssub.s32 %s23, %s37
      %s46 = sor.u32 %s44, %s45
      %p47 = scmp.eq.s32.totalorder %s46, 0
      %s49 = sadd.s32 %s48, 1
      %s50 = scalar_select %p47, %s48, %s49
      %p53 = pneg %p47
      %p54 = scmp.eq.s32.totalorder %s15, 7
      %p55 = por %p53, %p54
      %p56 = scmp.ne.s32.totalorder %s48, %s51
      %p57 = scmp.eq.s32.totalorder %s15, 0
      %p58 = por %p56, %p57
      %p59 = scmp.ne.s32.totalorder %s48, %s51
      %p60 = scmp.eq.s32.totalorder %s20, 7
      %p61 = por %p59, %p60
      %p62 = scmp.ne.s32.totalorder %s51, %s52
      %p63 = scmp.eq.s32.totalorder %s20, 0
      %p64 = por %p62, %p63
      %p65 = scmp.ne.s32.totalorder %s51, %s52
      %p66 = scmp.eq.s32.totalorder %s21, 7
      %p67 = por %p65, %p66
      %p69 = scmp.ne.s32.totalorder %s52, %s68
      %p70 = scmp.eq.s32.totalorder %s21, 0
      %p71 = por %p69, %p70
      %s72 = ssub.s32 %s22, %s41
      %s73 = ssub.s32 %s24, %s33
      %s74 = sor.u32 %s72, %s73
      %p75 = scmp.eq.s32.totalorder %s74, 0
      %s77 = sadd.s32 %s76, 1
      %s78 = scalar_select %p75, %s76, %s77
      %p81 = pneg %p75
      %p82 = scmp.eq.s32.totalorder %s15, 7
      %p83 = por %p81, %p82
      %p84 = scmp.ne.s32.totalorder %s76, %s79
      %p85 = scmp.eq.s32.totalorder %s15, 0
      %p86 = por %p84, %p85
      %p87 = scmp.ne.s32.totalorder %s76, %s79
      %p88 = scmp.eq.s32.totalorder %s20, 7
      %p89 = por %p87, %p88
      %p90 = scmp.ne.s32.totalorder %s79, %s80
      %p91 = scmp.eq.s32.totalorder %s20, 0
      %p92 = por %p90, %p91
      %p93 = scmp.ne.s32.totalorder %s79, %s80
      %p94 = scmp.eq.s32.totalorder %s21, 7
      %p95 = por %p93, %p94
      %p97 = scmp.ne.s32.totalorder %s80, %s96
      %p98 = scmp.eq.s32.totalorder %s21, 0
      %p99 = por %p97, %p98
      %s100 = ssub.s32 %s22, %s41
      %s101 = ssub.s32 %s24, %s33
      %s102 = sor.u32 %s100, %s101
      %p103 = scmp.eq.s32.totalorder %s102, 0
      %s105 = sadd.s32 %s104, 1
      %s106 = scalar_select %p103, %s104, %s105
      %p109 = pneg %p103
      %p110 = scmp.eq.s32.totalorder %s15, 7
      %p111 = por %p109, %p110
      %p112 = scmp.ne.s32.totalorder %s104, %s107
      %p113 = scmp.eq.s32.totalorder %s15, 0
      %p114 = por %p112, %p113
      %p115 = scmp.ne.s32.totalorder %s104, %s107
      %p116 = scmp.eq.s32.totalorder %s20, 7
      %p117 = por %p115, %p116
      %p118 = scmp.ne.s32.totalorder %s107, %s108
      %p119 = scmp.eq.s32.totalorder %s20, 0
      %p120 = por %p118, %p119
      %p121 = scmp.ne.s32.totalorder %s107, %s108
      %p122 = scmp.eq.s32.totalorder %s21, 7
      %p123 = por %p121, %p122
      %p125 = scmp.ne.s32.totalorder %s108, %s124
      %p126 = scmp.eq.s32.totalorder %s21, 0
      %p127 = por %p125, %p126
      %s128 = ssub.s32 %s22, %s41
      %p129 = scmp.eq.s32.totalorder %s128, 0
      %s131 = sadd.s32 %s130, 1
      %s132 = scalar_select %p129, %s130, %s131
      %p135 = pneg %p129
      %p136 = scmp.eq.s32.totalorder %s15, 7
      %p137 = por %p135, %p136
      %p138 = scmp.ne.s32.totalorder %s130, %s133
      %p139 = scmp.eq.s32.totalorder %s15, 0
      %p140 = por %p138, %p139
      %p141 = scmp.ne.s32.totalorder %s130, %s133
      %p142 = scmp.eq.s32.totalorder %s20, 7
      %p143 = por %p141, %p142
      %p144 = scmp.ne.s32.totalorder %s133, %s134
      %p145 = scmp.eq.s32.totalorder %s20, 0
      %p146 = por %p144, %p145
      %p147 = scmp.ne.s32.totalorder %s133, %s134
      %p148 = scmp.eq.s32.totalorder %s21, 7
      %p149 = por %p147, %p148
      %p151 = scmp.ne.s32.totalorder %s134, %s150
      %p152 = scmp.eq.s32.totalorder %s21, 0
      %p153 = por %p151, %p152
      %s154 = ssub.s32 %s22, %s41
      %s155 = ssub.s32 %s24, %s33
      %s156 = sor.u32 %s154, %s155
      %s157 = ssub.s32 %s23, %s37
      %s158 = sor.u32 %s156, %s157
      %p159 = scmp.eq.s32.totalorder %s158, 0
      %s161 = sadd.s32 %s160, 1
      %s162 = scalar_select %p159, %s160, %s161
      %p165 = pneg %p159
      %p166 = scmp.eq.s32.totalorder %s15, 7
      %p167 = por %p165, %p166
      %p168 = scmp.ne.s32.totalorder %s160, %s163
      %p169 = scmp.eq.s32.totalorder %s15, 0
      %p170 = por %p168, %p169
      %p171 = scmp.ne.s32.totalorder %s160, %s163
      %p172 = scmp.eq.s32.totalorder %s20, 7
      %p173 = por %p171, %p172
      %p174 = scmp.ne.s32.totalorder %s163, %s164
      %p175 = scmp.eq.s32.totalorder %s20, 0
      %p176 = por %p174, %p175
      %p177 = scmp.ne.s32.totalorder %s163, %s164
      %p178 = scmp.eq.s32.totalorder %s21, 7
      %p179 = por %p177, %p178
      %p181 = scmp.ne.s32.totalorder %s164, %s180
      %p182 = scmp.eq.s32.totalorder %s21, 0
      %p183 = por %p181, %p182
      %s184 = ssub.s32 %s22, %s41
      %s185 = ssub.s32 %s23, %s37
      %s186 = sor.u32 %s184, %s185
      %p187 = scmp.eq.s32.totalorder %s186, 0
      %s189 = sadd.s32 %s188, 1
      %s190 = scalar_select %p187, %s188, %s189
      %p193 = pneg %p187
      %p194 = scmp.eq.s32.totalorder %s15, 7
      %p195 = por %p193, %p194
      %p196 = scmp.ne.s32.totalorder %s188, %s191
      %p197 = scmp.eq.s32.totalorder %s15, 0
      %p198 = por %p196, %p197
      %p199 = scmp.ne.s32.totalorder %s188, %s191
      %p200 = scmp.eq.s32.totalorder %s20, 7
      %p201 = por %p199, %p200
      %p202 = scmp.ne.s32.totalorder %s191, %s192
      %p203 = scmp.eq.s32.totalorder %s20, 0
      %p204 = por %p202, %p203
      %p205 = scmp.ne.s32.totalorder %s191, %s192
      %p206 = scmp.eq.s32.totalorder %s21, 7
      %p207 = por %p205, %p206
      %p209 = scmp.ne.s32.totalorder %s192, %s208
      %p210 = scmp.eq.s32.totalorder %s21, 0
      %p211 = por %p209, %p210
      %p212 = scmp.le.s32.totalorder 1, %s15
      %p213 = scmp.lt.s32.totalorder %s15, 9
      %p214 = pnand %p212, %p213
      %p215 = pneg %p214
      // Predicated region
      $region9: #{transformer_decoder_layer.13} parent=5 // pred_check
        _
      $region10: #{transformer_decoder_layer.13} parent=5 // pred_check_branch
        %217 = sbr.rel (%p214) target = $region12
      $region11: #{transformer_decoder_layer.13} parent=5 // pred_region
        %s218 = ssub.s32 %s15, 1
      $region12: #{transformer_decoder_layer.13} parent=5 // pred_fallthru
        _
      %p219 = scmp.lt.s32.totalorder %s15, 8
      // Predicated region
      $region13: #{transformer_decoder_layer.13} parent=5 // pred_check
        %p220 = pneg %p219
      $region14: #{transformer_decoder_layer.13} parent=5 // pred_check_branch
        %222 = sbr.rel (%p220) target = $region16
      $region15: #{transformer_decoder_layer.13} parent=5 // pred_region
        // Predicated region
        $region17: #{transformer_decoder_layer.13} parent=15 // pred_check
          %p223 = pneg %p58
        $region18: #{transformer_decoder_layer.13} parent=15 // pred_check_branch
          %225 = sbr.rel (%p223) target = $region20
        $region19: #{transformer_decoder_layer.13} parent=15 // pred_region
          %s226 = smul.u32 2, %s23
          %p227 = scmp.lt.s32.totalorder %s22, 1
          %s228 = scalar_select %p227, %s22, 1
          %p229 = scmp.lt.s32.totalorder %s24, 3
          %s230 = scalar_select %p229, %s24, 3
          %p231 = scmp.lt.s32.totalorder %s226, 1
          %s232 = scalar_select %p231, %s226, 1
          %s233 = smul.addr %s230, 2
          %s234 = sadd.s32 %s232, %s233
          %s235 = smul.addr %s228, 8
          %s236 = sadd.s32 %s234, %s235
          %s237 = smul.addr %s236, 4
          %s238 = scalar_lea.vmem %s0, %s237
          %s239 = smul.u32 2, %s23
        $region20: #{transformer_decoder_layer.13} parent=15 // pred_fallthru
          _
        // Predicated region
        $region21: #{transformer_decoder_layer.13} parent=15 // pred_check
          %p240 = pneg %p86
        $region22: #{transformer_decoder_layer.13} parent=15 // pred_check_branch
          %242 = sbr.rel (%p240) target = $region24
        $region23: #{transformer_decoder_layer.13} parent=15 // pred_region
          %p243 = scmp.lt.s32.totalorder %s22, 1
          %s244 = scalar_select %p243, %s22, 1
          %p245 = scmp.lt.s32.totalorder %s24, 3
          %s246 = scalar_select %p245, %s24, 3
          %s247 = smul.addr %s246, 4
          %s248 = smul.addr %s244, 16
          %s249 = sadd.s32 %s247, %s248
          %s250 = smul.addr %s249, 4
          %s251 = scalar_lea.vmem %s1, %s250
        $region24: #{transformer_decoder_layer.13} parent=15 // pred_fallthru
          _
        // Predicated region
        $region25: #{transformer_decoder_layer.13} parent=15 // pred_check
          %p252 = pneg %p114
        $region26: #{transformer_decoder_layer.13} parent=15 // pred_check_branch
          %254 = sbr.rel (%p252) target = $region28
        $region27: #{transformer_decoder_layer.13} parent=15 // pred_region
          %p255 = scmp.lt.s32.totalorder %s22, 1
          %s256 = scalar_select %p255, %s22, 1
          %p257 = scmp.lt.s32.totalorder %s24, 3
          %s258 = scalar_select %p257, %s24, 3
          %s259 = smul.addr %s258, 4
          %s260 = smul.addr %s256, 16
          %s261 = sadd.s32 %s259, %s260
          %s262 = smul.addr %s261, 4
          %s263 = scalar_lea.vmem %s2, %s262
        $region28: #{transformer_decoder_layer.13} parent=15 // pred_fallthru
          _
        // Predicated region
        $region29: #{transformer_decoder_layer.13} parent=15 // pred_check
          %p264 = pneg %p140
        $region30: #{transformer_decoder_layer.13} parent=15 // pred_check_branch
          %266 = sbr.rel (%p264) target = $region32
        $region31: #{transformer_decoder_layer.13} parent=15 // pred_region
          %p267 = scmp.lt.s32.totalorder %s22, 1
          %s268 = scalar_select %p267, %s22, 1
          %s269 = scalar_lea.vmem %s3, %s268
        $region32: #{transformer_decoder_layer.13} parent=15 // pred_fallthru
          _
      $region16: #{transformer_decoder_layer.13} parent=5 // pred_fallthru
        _
      %p270 = scmp.le.s32.totalorder 1, %s15
      %p271 = scmp.lt.s32.totalorder %s15, 9
      %p272 = pnand %p270, %p271
      %p273 = pneg %p272
      // Predicated region
      $region33: #{transformer_decoder_layer.13} parent=5 // pred_check
        _
      $region34: #{transformer_decoder_layer.13} parent=5 // pred_check_branch
        %275 = sbr.rel (%p272) target = $region36
      $region35: #{transformer_decoder_layer.13} parent=5 // pred_region
        %s276 = ssub.s32 %s15, 1
        %s277 = smul.u32 2, %s26
        %p278 = scmp.lt.s32.totalorder %s25, 1
        %s279 = scalar_select %p278, %s25, 1
        %p280 = scmp.lt.s32.totalorder %s27, 3
        %s281 = scalar_select %p280, %s27, 3
        %p282 = scmp.lt.s32.totalorder %s277, 1
        %s283 = scalar_select %p282, %s277, 1
        %s284 = smul.addr %s281, 2
        %s285 = sadd.s32 %s283, %s284
        %s286 = smul.addr %s279, 8
        %s287 = sadd.s32 %s285, %s286
        %s288 = smul.addr %s287, 4
        %s289 = scalar_lea.vmem %s0, %s288
        %p290 = pneg %p64
        %p291 = pneg %p61
        %p292 = scmp.lt.s32.totalorder %s25, 1
        %s293 = scalar_select %p292, %s25, 1
        %p294 = scmp.lt.s32.totalorder %s27, 3
        %s295 = scalar_select %p294, %s27, 3
        %s296 = smul.addr %s295, 4
        %s297 = smul.addr %s293, 16
        %s298 = sadd.s32 %s296, %s297
        %s299 = smul.addr %s298, 4
        %s300 = scalar_lea.vmem %s1, %s299
        %p301 = pneg %p92
        %p302 = pneg %p89
        %p303 = scmp.lt.s32.totalorder %s25, 1
        %s304 = scalar_select %p303, %s25, 1
        %p305 = scmp.lt.s32.totalorder %s27, 3
        %s306 = scalar_select %p305, %s27, 3
        %s307 = smul.addr %s306, 4
        %s308 = smul.addr %s304, 16
        %s309 = sadd.s32 %s307, %s308
        %s310 = smul.addr %s309, 4
        %s311 = scalar_lea.vmem %s2, %s310
        %p312 = pneg %p120
        %p313 = pneg %p117
        %p314 = scmp.lt.s32.totalorder %s25, 1
        %s315 = scalar_select %p314, %s25, 1
        %s316 = scalar_lea.vmem %s3, %s315
        %p317 = pneg %p146
        %p318 = pneg %p143
        %p319 = pneg %p176
        %p320 = pneg %p173
        %s321 = smul.u32 2, %s26
        %p322 = scmp.lt.s32.totalorder %s25, 1
        %s323 = scalar_select %p322, %s25, 1
        %p324 = scmp.lt.s32.totalorder %s27, 3
        %s325 = scalar_select %p324, %s27, 3
        %p326 = scmp.lt.s32.totalorder %s321, 1
        %s327 = scalar_select %p326, %s321, 1
        %s328 = smul.addr %s325, 2
        %s329 = sadd.s32 %s327, %s328
        %s330 = smul.addr %s323, 8
        %s331 = sadd.s32 %s329, %s330
        %s332 = smul.addr %s331, 4
        %s333 = scalar_lea.vmem %s4, %s332
        %p334 = pneg %p204
        %p335 = pneg %p201
        %s336 = sand.u32 %s191, 1
        %s337 = scalar_lea.sflag [#allocation3], %s336
        %s338 = sand.u32 %s191, 1
        %s339 = smul.addr %s338, 16
        %s340 = scalar_lea.vmem [#allocation2], %s339
        %s341 = smul.u32 2, %s26
        %p342 = scmp.lt.s32.totalorder %s25, 1
        %s343 = scalar_select %p342, %s25, 1
        %p344 = scmp.lt.s32.totalorder %s27, 3
        %s345 = scalar_select %p344, %s27, 3
        %p346 = scmp.lt.s32.totalorder %s341, 1
        %s347 = scalar_select %p346, %s341, 1
        %s348 = smul.addr %s345, 2
        %s349 = sadd.s32 %s347, %s348
        %s350 = smul.addr %s343, 8
        %s351 = sadd.s32 %s349, %s350
        %s352 = smul.addr %s351, 4
        %s353 = scalar_lea.vmem %s0, %s352
        %s354 = smul.u32 2, %s26
        %p355 = scmp.lt.s32.totalorder %s25, 1
        %s356 = scalar_select %p355, %s25, 1
        %p357 = scmp.lt.s32.totalorder %s27, 3
        %s358 = scalar_select %p357, %s27, 3
        %s359 = smul.addr %s358, 4
        %s360 = smul.addr %s356, 16
        %s361 = sadd.s32 %s359, %s360
        %s362 = smul.addr %s361, 4
        %s363 = scalar_lea.vmem %s1, %s362
        %p364 = scmp.lt.s32.totalorder %s25, 1
        %s365 = scalar_select %p364, %s25, 1
        %p366 = scmp.lt.s32.totalorder %s27, 3
        %s367 = scalar_select %p366, %s27, 3
        %s368 = smul.addr %s367, 4
        %s369 = smul.addr %s365, 16
        %s370 = sadd.s32 %s368, %s369
        %s371 = smul.addr %s370, 4
        %s372 = scalar_lea.vmem %s2, %s371
        %p373 = scmp.lt.s32.totalorder %s25, 1
        %s374 = scalar_select %p373, %s25, 1
        %s375 = scalar_lea.vmem %s3, %s374
        %s376 = smul.u32 2, %s26
        %p377 = scmp.lt.s32.totalorder %s25, 1
        %s378 = scalar_select %p377, %s25, 1
        %p379 = scmp.lt.s32.totalorder %s27, 3
        %s380 = scalar_select %p379, %s27, 3
        %p381 = scmp.lt.s32.totalorder %s376, 1
        %s382 = scalar_select %p381, %s376, 1
        %s383 = smul.addr %s380, 2
        %s384 = sadd.s32 %s382, %s383
        %s385 = smul.addr %s378, 8
        %s386 = sadd.s32 %s384, %s385
        %s387 = smul.addr %s386, 4
        %s388 = scalar_lea.vmem %s4, %s387
        %s389 = smul.u32 2, %s26
        %s390 = smul.u32 2, %s26
        %v392 = vld [vmem:[%s353] sm:$0xf]
        %v393 = vld [vmem:[%s353 + $0x4] sm:$0xf]
        %v394 = vld [vmem:[%s363] sm:$0xf]
        %v395 = vld [vmem:[%s363 + $0x4] sm:$0xf]
        %v396 = vld [vmem:[%s363 + $0x8] sm:$0xf]
        %v397 = vld [vmem:[%s363 + $0xc] sm:$0xf]
        %v398 = vld [vmem:[%s372] sm:$0xf]
        %v399 = vld [vmem:[%s372 + $0x4] sm:$0xf]
        %v400 = vld [vmem:[%s372 + $0x8] sm:$0xf]
        %v401 = vld [vmem:[%s372 + $0xc] sm:$0xf]
        %v404 = vunpack.c.l.b16 %v392
        %v405 = vunpack.c.l.b16 %v393
        %v406 = vpack.c.b16 %v405, %v404
        %v411 = vunpack.c.l.b16 %v394
        %v412 = vunpack.c.l.b16 %v395
        %v413 = vunpack.c.l.b16 %v396
        %v414 = vunpack.c.l.b16 %v397
        %v415 = vpack.c.b16 %v412, %v411
        %v416 = vpack.c.b16 %v414, %v413
        %vm417 = vcmask 261120
        %v419 = vsel %vm417, %v406, 0
        %v422 = vsel %vm417, %v415, 0
        %v425 = vsel %vm417, %v416, 0
        %427 = vmatprep.subr.bf16.mxu0 0
        %428 = vmatpush1.bf16.xpose.msra.mxu0 %v422
        %429 = vmatprep.subr.bf16.mxu0 0
        %430 = vmatpush1.bf16.xpose.msra.mxu0 %v425
        %431 = vmatprep.subr.bf16.mxu0 0
        %432 = vmatpush1.bf16.xpose.msra.mxu0 0
        %433 = vmatprep.subr.bf16.mxu0 0
        %434 = vmatpush1.bf16.xpose.msra.mxu0 0
        %435 = vmatprep.subr.bf16.mxu0 0
        %436 = vmatpush1.bf16.xpose.msra.mxu0 0
        %437 = vmatprep.subr.bf16.mxu0 0
        %438 = vmatpush1.bf16.xpose.msra.mxu0 0
        %439 = vmatprep.subr.bf16.mxu0 0
        %440 = vmatpush1.bf16.xpose.msra.mxu0 0
        %441 = vmatprep.subr.bf16.mxu0 0
        %442 = vmatpush1.bf16.xpose.msra.mxu0 0
        %443 = vmatprep.subr.bf16.mxu0 0
        %444 = vmatpush1.bf16.xpose.msra.mxu0 0
        %445 = vmatprep.subr.bf16.mxu0 0
        %446 = vmatpush1.bf16.xpose.msra.mxu0 0
        %447 = vmatprep.subr.bf16.mxu0 0
        %448 = vmatpush1.bf16.xpose.msra.mxu0 0
        %449 = vmatprep.subr.bf16.mxu0 0
        %450 = vmatpush1.bf16.xpose.msra.mxu0 0
        %451 = vmatprep.subr.bf16.mxu0 0
        %452 = vmatpush1.bf16.xpose.msra.mxu0 0
        %453 = vmatprep.subr.bf16.mxu0 0
        %454 = vmatpush1.bf16.xpose.msra.mxu0 0
        %455 = vmatprep.subr.bf16.mxu0 0
        %456 = vmatpush1.bf16.xpose.msra.mxu0 0
        %457 = vmatprep.subr.bf16.mxu0 0
        %458 = vmatpush1.bf16.xpose.msra.mxu0 0
        %459 = vmatprep.mubr.bf16.mxu0 0
        %460 = vmatmul.mubr.bf16.gmra.mrb[0].mxu0 %v419
        %v461 = vpop.f32.mrb[0].mxu0
        %v462 = vadd.f32 0.0, %v461
        %v463 = vpop.f32.mrb[0].mxu0
        %v464 = vpop.f32.mrb[0].mxu0
        %v465 = vadd.f32 0.0, %v464
        %v466 = vpop.f32.mrb[0].mxu0
        %467 = vdwg.mxu0
        %v468 = vmul.f32 %v462, 0.17677669
        %v469 = vmul.f32 %v465, 0.17677669
        %v470 = vld [vmem:[%s375] sm:$0x1]
        %v472 = vlaneseq
        %v473 = vshrl.u32 %v472, 7
        %v474 = vsub.s32 0, %v473
        %v475 = vrot.slane %v470, %v474
        %v477 = vadd.f32 %v468, %v475
        %v478 = vadd.f32 %v469, %v475
        %v479 = vsel %vm417, %v477, -inf
        %480 = vmax.xlane.f32.xlu0 %v479
        %v481 = vpop.xlane.xlu0 %480
        %v482 = vsel %vm417, %v478, -inf
        %483 = vmax.xlane.f32.xlu0 %v482
        %v484 = vpop.xlane.xlu0 %483
        %v485 = vsub.f32 %v477, %v481
        %v486 = vsub.f32 %v478, %v484
        %v487 = vmul.f32 %v485, 1.442695
        %v488 = vpow.pop %v487
        %v489 = vmul.f32 %v486, 1.442695
        %v490 = vpow.pop %v489
        %v491 = vsel %vm417, %v488, 0.0
        %492 = vadd.xlane.f32.xlu0 %v491
        %v493 = vpop.xlane.xlu0 %492
        %v494 = vsel %vm417, %v490, 0.0
        %495 = vadd.xlane.f32.xlu0 %v494
        %v496 = vpop.xlane.xlu0 %495
        %v497 = vrcp.pop %v493
        %v498 = vrcp.pop %v496
        %v499 = vmul.f32 %v488, %v497
        %v500 = vmul.f32 %v490, %v498
        %v501 = vpack.c.bf16 %v500, %v499
        %v506 = vunpack.c.l.b16 %v398
        %v507 = vunpack.c.l.b16 %v399
        %v508 = vunpack.c.l.b16 %v400
        %v509 = vunpack.c.l.b16 %v401
        %v510 = vpack.c.b16 %v507, %v506
        %v511 = vpack.c.b16 %v509, %v508
        %v515 = vsel %vm417, %v501, 0
        %517 = vmatprep.subr.bf16.mxu0 0
        %518 = vmatpush1.bf16.msra.mxu0 %v510
        %519 = vmatprep.subr.bf16.mxu0 0
        %520 = vmatpush1.bf16.msra.mxu0 %v511
        %521 = vmatprep.subr.bf16.mxu0 0
        %522 = vmatpush1.bf16.msra.mxu0 0
        %523 = vmatprep.subr.bf16.mxu0 0
        %524 = vmatpush1.bf16.msra.mxu0 0
        %525 = vmatprep.subr.bf16.mxu0 0
        %526 = vmatpush1.bf16.msra.mxu0 0
        %527 = vmatprep.subr.bf16.mxu0 0
        %528 = vmatpush1.bf16.msra.mxu0 0
        %529 = vmatprep.subr.bf16.mxu0 0
        %530 = vmatpush1.bf16.msra.mxu0 0
        %531 = vmatprep.subr.bf16.mxu0 0
        %532 = vmatpush1.bf16.msra.mxu0 0
        %533 = vmatprep.subr.bf16.mxu0 0
        %534 = vmatpush1.bf16.msra.mxu0 0
        %535 = vmatprep.subr.bf16.mxu0 0
        %536 = vmatpush1.bf16.msra.mxu0 0
        %537 = vmatprep.subr.bf16.mxu0 0
        %538 = vmatpush1.bf16.msra.mxu0 0
        %539 = vmatprep.subr.bf16.mxu0 0
        %540 = vmatpush1.bf16.msra.mxu0 0
        %541 = vmatprep.subr.bf16.mxu0 0
        %542 = vmatpush1.bf16.msra.mxu0 0
        %543 = vmatprep.subr.bf16.mxu0 0
        %544 = vmatpush1.bf16.msra.mxu0 0
        %545 = vmatprep.subr.bf16.mxu0 0
        %546 = vmatpush1.bf16.msra.mxu0 0
        %547 = vmatprep.subr.bf16.mxu0 0
        %548 = vmatpush1.bf16.msra.mxu0 0
        %549 = vmatprep.mubr.bf16.mxu0 0
        %550 = vmatmul.mubr.bf16.gmra.mrb[0].mxu0 %v515
        %v551 = vpop.f32.mrb[0].mxu0
        %v552 = vadd.f32 0.0, %v551
        %v553 = vpop.f32.mrb[0].mxu0
        %v554 = vpop.f32.mrb[0].mxu0
        %v555 = vadd.f32 0.0, %v554
        %v556 = vpop.f32.mrb[0].mxu0
        %557 = vdwg.mxu0
        %v558 = vpack.c.bf16 %v555, %v552
        %v560 = vunpack.c.l.b16 %v558
        %v561 = vunpack.c.h.b16 %v558
        %v562 = vpack.c.b16 %v560, %v560
        %v563 = vpack.c.b16 %v561, %v561
        %vm566 = vcmask 257024
        %567 = vst.msk [vmem:[%s388] sm:$0xf] %vm566, %v562
        %568 = vst.msk [vmem:[%s388 + $0x4] sm:$0xf] %vm566, %v563
        %v569 = vmul.f32 %v499, 0.25
        %v570 = vmul.f32 %v500, 0.25
        %p571 = scmp.eq.s32.totalorder %s27, 0
        // Predicated region
        $region37: #{transformer_decoder_layer.13} parent=35 // pred_check
          %p572 = pneg %p571
        $region38: #{transformer_decoder_layer.13} parent=35 // pred_check_branch
          %574 = sbr.rel (%p572) target = $region40
        $region39: #{transformer_decoder_layer.13} parent=35 // pred_region
          %575 = vst.msk [vmem:[%s340] sm:$0xff] %vm417, %v569
          %576 = vst.msk [vmem:[%s340 + $0x8] sm:$0xff] %vm417, %v570
        $region40: #{transformer_decoder_layer.13} parent=35 // pred_fallthru
          _
        %p577 = scmp.ne.s32.totalorder %s27, 0
        // Predicated region
        $region41: #{transformer_decoder_layer.13} parent=35 // pred_check
          %p578 = pneg %p577
        $region42: #{transformer_decoder_layer.13} parent=35 // pred_check_branch
          %580 = sbr.rel (%p578) target = $region44
        $region43: #{transformer_decoder_layer.13} parent=35 // pred_region
          %v581 = vld [vmem:[%s340] sm:$0xff]
          %v582 = vld [vmem:[%s340 + $0x8] sm:$0xff]
          %v583 = vadd.f32 %v581, %v569
          %v584 = vadd.f32 %v582, %v570
          %585 = vst.msk [vmem:[%s340] sm:$0xff] %vm417, %v583
          %586 = vst.msk [vmem:[%s340 + $0x8] sm:$0xff] %vm417, %v584
        $region44: #{transformer_decoder_layer.13} parent=35 // pred_fallthru
          _
        %s587 = smul.u32 2, %s26
        %p588 = scmp.lt.s32.totalorder %s25, 1
        %s589 = scalar_select %p588, %s25, 1
        %p590 = scmp.lt.s32.totalorder %s27, 3
        %s591 = scalar_select %p590, %s27, 3
        %p592 = scmp.lt.s32.totalorder %s587, 1
        %s593 = scalar_select %p592, %s587, 1
        %s594 = smul.addr %s591, 2
        %s595 = sadd.s32 %s593, %s594
        %s596 = smul.addr %s589, 8
        %s597 = sadd.s32 %s595, %s596
        %s598 = smul.addr %s597, 4
        %s599 = scalar_lea.vmem %s4, %s598
        %s600 = sand.u32 %s191, 1
        %s601 = scalar_lea.sflag [#allocation3], %s600
        %s602 = sand.u32 %s191, 1
        %s603 = smul.addr %s602, 16
        %s604 = scalar_lea.vmem [#allocation2], %s603
        // Predicated region
        $region45: #{transformer_decoder_layer.13} parent=35 // pred_check
          %p605 = pneg %p173
        $region46: #{transformer_decoder_layer.13} parent=35 // pred_check_branch
          %607 = sbr.rel (%p605) target = $region48
        $region47: #{transformer_decoder_layer.13} parent=35 // pred_region
          %s608 = smul.u32 2, %s26
        $region48: #{transformer_decoder_layer.13} parent=35 // pred_fallthru
          _
        // Predicated region
        $region49: #{transformer_decoder_layer.13} parent=35 // pred_check
          %p609 = pneg %p201
        $region50: #{transformer_decoder_layer.13} parent=35 // pred_check_branch
          %611 = sbr.rel (%p609) target = $region52
        $region51: #{transformer_decoder_layer.13} parent=35 // pred_region
          %s612 = smul.u32 2, %s26
          %s614 = ssub.s32 256, 256
          %615 = vsyncadd %s601, %s614
          %s616 = smul.addr %s25, 2
          %s617 = sadd.s32 %s612, %s616
          %s618 = smul.addr %s617, 128
          %s619 = scalar_lea.hbm %s5, %s618
          %s620 = sshll.u32 %s604, 4
          %s621 = int_to_ptr.vmem [resolvable:$true] %s620
          %626 = dma.vmem_to_hbm [thread:$0]  %s621, 256, %s619, %s601, 128, 128, 8
        $region52: #{transformer_decoder_layer.13} parent=35 // pred_fallthru
          _
      $region36: #{transformer_decoder_layer.13} parent=5 // pred_fallthru
        _
      %p627 = scmp.le.s32.totalorder 2, %s15
      // Predicated region
      $region53: #{transformer_decoder_layer.13} parent=5 // pred_check
        %p628 = pneg %p627
      $region54: #{transformer_decoder_layer.13} parent=5 // pred_check_branch
        %630 = sbr.rel (%p628) target = $region56
      $region55: #{transformer_decoder_layer.13} parent=5 // pred_region
        %s631 = ssub.s32 %s15, 2
        // Predicated region
        $region57: #{transformer_decoder_layer.13} parent=55 // pred_check
          %p632 = pneg %p179
        $region58: #{transformer_decoder_layer.13} parent=55 // pred_check_branch
          %634 = sbr.rel (%p632) target = $region60
        $region59: #{transformer_decoder_layer.13} parent=55 // pred_region
          %s635 = smul.u32 2, %s29
          %p636 = scmp.lt.s32.totalorder %s28, 1
          %s637 = scalar_select %p636, %s28, 1
          %p638 = scmp.lt.s32.totalorder %s30, 3
          %s639 = scalar_select %p638, %s30, 3
          %p640 = scmp.lt.s32.totalorder %s635, 1
          %s641 = scalar_select %p640, %s635, 1
          %s642 = smul.addr %s639, 2
          %s643 = sadd.s32 %s641, %s642
          %s644 = smul.addr %s637, 8
          %s645 = sadd.s32 %s643, %s644
          %s646 = smul.addr %s645, 4
          %s647 = scalar_lea.vmem %s4, %s646
        $region60: #{transformer_decoder_layer.13} parent=55 // pred_fallthru
          _
        // Predicated region
        $region61: #{transformer_decoder_layer.13} parent=55 // pred_check
          %p648 = pneg %p207
        $region62: #{transformer_decoder_layer.13} parent=55 // pred_check_branch
          %650 = sbr.rel (%p648) target = $region64
        $region63: #{transformer_decoder_layer.13} parent=55 // pred_region
          %s651 = sand.u32 %s192, 1
          %s652 = scalar_lea.sflag [#allocation3], %s651
          %s653 = sand.u32 %s192, 1
          %s654 = smul.addr %s653, 16
          %s655 = scalar_lea.vmem [#allocation2], %s654
          %656 = dma.done %s652, 256
        $region64: #{transformer_decoder_layer.13} parent=55 // pred_fallthru
          _
      $region56: #{transformer_decoder_layer.13} parent=5 // pred_fallthru
        _
    $region6: #{transformer_decoder_layer.13} parent=1 // loop_footer
      %s19 = sadd.s32 1, %s15
    $region7: #{transformer_decoder_layer.13} parent=1 // loop_footer_branch
      %14 = sbr.rel target = $region3
    $region8: #{transformer_decoder_layer.13} parent=1 // loop_exit
      _
    %657 = vsyncpa [#allocation3], 1
    %s658 = scalar_lea.sflag [#allocation3], 1
    %659 = vsyncpa %s658, 1

// kernel: transformer_decoder_layer.15
$region0: #{transformer_decoder_layer.15}
  #allocation0 [shape = 'u32[]', space=smem, size = 0x4, offset = 0x4, fixed_abs, tag = 'smem constant byte address 0x4 - core index']
  #allocation1 [shape = 'u32[144,128]{1,0:T(1,128)}', space=vmem, size = 0x12000, scoped, tag = 'internal scratch']
  #allocation2 [shape = 'f32[32,128]{1,0:T(8,128)}', space=vmem, size = 0x4000, scoped, tag = 'scratch operand']
  %s0 = inlined_call_operand.vmem [shape: f32[32,128], index: 0, kind: input, shape index: {}]
  %s1 = inlined_call_operand.vmem [shape: bf16[128,256], index: 1, kind: input, shape index: {}]
  %s2 = inlined_call_operand.vmem [shape: f32[1,256], index: 2, kind: input, shape index: {}]
  %s3 = inlined_call_operand.vmem [shape: bf16[256,128], index: 3, kind: input, shape index: {}]
  %s4 = inlined_call_operand.vmem [shape: f32[1,128], index: 4, kind: input, shape index: {}]
  %s5 = inlined_call_operand.vmem [shape: f32[1,128], index: 5, kind: input, shape index: {}]
  %s6 = inlined_call_operand.vmem [shape: f32[1,128], index: 6, kind: input, shape index: {}]
  %s7 = inlined_call_operand.hbm [shape: f32[32,128], index: 7, kind: output, shape index: {}]
  %s8 = sld [smem:[#allocation0]]
  $region46: #{transformer_decoder_layer.15} parent=0
    _
  %s10 = ssub.s32 1, %s8
  %s11 = scalar_select 0, %s10, %s8
  $region1: #{transformer_decoder_layer.15} parent=0
    #allocation3 [shape = 'u8[16384]{0}', space=vmem, size = 0x4000, scoped, tag = 'output window, operand 0, single buffered']
    #allocation4 [shape = 's32[1]{0}', space=sflag, size = 0x4, scoped, tag = 'scoped memory for transformer_decoder_layer.15']
    %12 = vsyncpa [#allocation4], 0
    // Predicated region
    $region2: #{transformer_decoder_layer.15} parent=1 // pred_check
      _
    $region3: #{transformer_decoder_layer.15} parent=1 // pred_check_branch
      %14 = sbr.rel (0) target = $region5
    $region4: #{transformer_decoder_layer.15} parent=1 // pred_region
      _
    $region5: #{transformer_decoder_layer.15} parent=1 // pred_fallthru
      _
    // Predicated region
    $region6: #{transformer_decoder_layer.15} parent=1 // pred_check
      _
    $region7: #{transformer_decoder_layer.15} parent=1 // pred_check_branch
      %16 = sbr.rel (0) target = $region9
    $region8: #{transformer_decoder_layer.15} parent=1 // pred_region
      _
    $region9: #{transformer_decoder_layer.15} parent=1 // pred_fallthru
      _
    // Predicated region
    $region10: #{transformer_decoder_layer.15} parent=1 // pred_check
      _
    $region11: #{transformer_decoder_layer.15} parent=1 // pred_check_branch
      %18 = sbr.rel (0) target = $region13
    $region12: #{transformer_decoder_layer.15} parent=1 // pred_region
      _
    $region13: #{transformer_decoder_layer.15} parent=1 // pred_fallthru
      _
    // Predicated region
    $region14: #{transformer_decoder_layer.15} parent=1 // pred_check
      _
    $region15: #{transformer_decoder_layer.15} parent=1 // pred_check_branch
      %20 = sbr.rel (0) target = $region17
    $region16: #{transformer_decoder_layer.15} parent=1 // pred_region
      _
    $region17: #{transformer_decoder_layer.15} parent=1 // pred_fallthru
      _
    // Predicated region
    $region18: #{transformer_decoder_layer.15} parent=1 // pred_check
      _
    $region19: #{transformer_decoder_layer.15} parent=1 // pred_check_branch
      %22 = sbr.rel (0) target = $region21
    $region20: #{transformer_decoder_layer.15} parent=1 // pred_region
      _
    $region21: #{transformer_decoder_layer.15} parent=1 // pred_fallthru
      _
    // Predicated region
    $region22: #{transformer_decoder_layer.15} parent=1 // pred_check
      _
    $region23: #{transformer_decoder_layer.15} parent=1 // pred_check_branch
      %24 = sbr.rel (0) target = $region25
    $region24: #{transformer_decoder_layer.15} parent=1 // pred_region
      _
    $region25: #{transformer_decoder_layer.15} parent=1 // pred_fallthru
      _
    // Predicated region
    $region26: #{transformer_decoder_layer.15} parent=1 // pred_check
      _
    $region27: #{transformer_decoder_layer.15} parent=1 // pred_check_branch
      %26 = sbr.rel (0) target = $region29
    $region28: #{transformer_decoder_layer.15} parent=1 // pred_region
      _
    $region29: #{transformer_decoder_layer.15} parent=1 // pred_fallthru
      _
    %p28 = scmp.eq.s32.totalorder 0, 0
    // Predicated region
    $region30: #{transformer_decoder_layer.15} parent=1 // pred_check
      %p29 = pneg %p28
    $region31: #{transformer_decoder_layer.15} parent=1 // pred_check_branch
      %31 = sbr.rel (%p29) target = $region33
    $region32: #{transformer_decoder_layer.15} parent=1 // pred_region
      %32 = vst [vmem:[#allocation2] sm:$0xff] 0.0
      %33 = vst [vmem:[#allocation2 + $0x8] sm:$0xff] 0.0
      %34 = vst [vmem:[#allocation2 + $0x10] sm:$0xff] 0.0
      %35 = vst [vmem:[#allocation2 + $0x18] sm:$0xff] 0.0
    $region33: #{transformer_decoder_layer.15} parent=1 // pred_fallthru
      _
    %v36 = vld [vmem:[%s0] sm:$0xff]
    %v37 = vld [vmem:[%s0 + $0x8] sm:$0xff]
    %v38 = vld [vmem:[%s0 + $0x10] sm:$0xff]
    %v39 = vld [vmem:[%s0 + $0x18] sm:$0xff]
    %v40 = vpack.c.bf16 %v37, %v36
    %v41 = vpack.c.bf16 %v39, %v38
    %v42 = vld [vmem:[%s1] sm:$0xff]
    %v43 = vld [vmem:[%s1 + $0x8] sm:$0xff]
    %v44 = vld [vmem:[%s1 + $0x10] sm:$0xff]
    %v45 = vld [vmem:[%s1 + $0x18] sm:$0xff]
    %v46 = vld [vmem:[%s1 + $0x20] sm:$0xff]
    %v47 = vld [vmem:[%s1 + $0x28] sm:$0xff]
    %v48 = vld [vmem:[%s1 + $0x30] sm:$0xff]
    %v49 = vld [vmem:[%s1 + $0x38] sm:$0xff]
    %v50 = vld [vmem:[%s1 + $0x40] sm:$0xff]
    %v51 = vld [vmem:[%s1 + $0x48] sm:$0xff]
    %v52 = vld [vmem:[%s1 + $0x50] sm:$0xff]
    %v53 = vld [vmem:[%s1 + $0x58] sm:$0xff]
    %v54 = vld [vmem:[%s1 + $0x60] sm:$0xff]
    %v55 = vld [vmem:[%s1 + $0x68] sm:$0xff]
    %v56 = vld [vmem:[%s1 + $0x70] sm:$0xff]
    %v57 = vld [vmem:[%s1 + $0x78] sm:$0xff]
    %v58 = vld [vmem:[%s2] sm:$0x3]
    %v60 = vlaneseq
    %v61 = vshrl.u32 %v60, 7
    %v62 = vsub.s32 0, %v61
    %v63 = vrot.slane %v58, %v62
    %v64 = vlaneseq
    %v65 = vshrl.u32 %v64, 7
    %v66 = vsub.s32 1, %v65
    %v67 = vrot.slane %v58, %v66
    %v86 = vunpack.c.l.b16 %v42
    %v87 = vunpack.c.h.b16 %v42
    %v88 = vunpack.c.l.b16 %v43
    %v89 = vunpack.c.h.b16 %v43
    %v90 = vunpack.c.l.b16 %v44
    %v91 = vunpack.c.h.b16 %v44
    %v92 = vunpack.c.l.b16 %v45
    %v93 = vunpack.c.h.b16 %v45
    %v94 = vunpack.c.l.b16 %v46
    %v95 = vunpack.c.h.b16 %v46
    %v96 = vunpack.c.l.b16 %v47
    %v97 = vunpack.c.h.b16 %v47
    %v98 = vunpack.c.l.b16 %v48
    %v99 = vunpack.c.h.b16 %v48
    %v100 = vunpack.c.l.b16 %v49
    %v101 = vunpack.c.h.b16 %v49
    %v102 = vunpack.c.l.b16 %v50
    %v103 = vunpack.c.h.b16 %v50
    %v104 = vunpack.c.l.b16 %v51
    %v105 = vunpack.c.h.b16 %v51
    %v106 = vunpack.c.l.b16 %v52
    %v107 = vunpack.c.h.b16 %v52
    %v108 = vunpack.c.l.b16 %v53
    %v109 = vunpack.c.h.b16 %v53
    %v110 = vunpack.c.l.b16 %v54
    %v111 = vunpack.c.h.b16 %v54
    %v112 = vunpack.c.l.b16 %v55
    %v113 = vunpack.c.h.b16 %v55
    %v114 = vunpack.c.l.b16 %v56
    %v115 = vunpack.c.h.b16 %v56
    %v116 = vunpack.c.l.b16 %v57
    %v117 = vunpack.c.h.b16 %v57
    %v118 = vpack.c.b16 %v88, %v86
    %v119 = vpack.c.b16 %v89, %v87
    %v120 = vpack.c.b16 %v92, %v90
    %v121 = vpack.c.b16 %v93, %v91
    %v122 = vpack.c.b16 %v96, %v94
    %v123 = vpack.c.b16 %v97, %v95
    %v124 = vpack.c.b16 %v100, %v98
    %v125 = vpack.c.b16 %v101, %v99
    %v126 = vpack.c.b16 %v104, %v102
    %v127 = vpack.c.b16 %v105, %v103
    %v128 = vpack.c.b16 %v108, %v106
    %v129 = vpack.c.b16 %v109, %v107
    %v130 = vpack.c.b16 %v112, %v110
    %v131 = vpack.c.b16 %v113, %v111
    %v132 = vpack.c.b16 %v116, %v114
    %v133 = vpack.c.b16 %v117, %v115
    %150 = vmatprep.subr.bf16.mxu0 %v119
    %151 = vmatpush1.bf16.msra.mxu0 %v118
    %152 = vmatprep.subr.bf16.mxu0 %v121
    %153 = vmatpush1.bf16.msra.mxu0 %v120
    %154 = vmatprep.subr.bf16.mxu0 %v123
    %155 = vmatpush1.bf16.msra.mxu0 %v122
    %156 = vmatprep.subr.bf16.mxu0 %v125
    %157 = vmatpush1.bf16.msra.mxu0 %v124
    %158 = vmatprep.subr.bf16.mxu0 %v127
    %159 = vmatpush1.bf16.msra.mxu0 %v126
    %160 = vmatprep.subr.bf16.mxu0 %v129
    %161 = vmatpush1.bf16.msra.mxu0 %v128
    %162 = vmatprep.subr.bf16.mxu0 %v131
    %163 = vmatpush1.bf16.msra.mxu0 %v130
    %164 = vmatprep.subr.bf16.mxu0 %v133
    %165 = vmatpush1.bf16.msra.mxu0 %v132
    %166 = vmatprep.subr.bf16.mxu0 0
    %167 = vmatpush1.bf16.msra.mxu0 0
    %168 = vmatprep.subr.bf16.mxu0 0
    %169 = vmatpush1.bf16.msra.mxu0 0
    %170 = vmatprep.subr.bf16.mxu0 0
    %171 = vmatpush1.bf16.msra.mxu0 0
    %172 = vmatprep.subr.bf16.mxu0 0
    %173 = vmatpush1.bf16.msra.mxu0 0
    %174 = vmatprep.subr.bf16.mxu0 0
    %175 = vmatpush1.bf16.msra.mxu0 0
    %176 = vmatprep.subr.bf16.mxu0 0
    %177 = vmatpush1.bf16.msra.mxu0 0
    %178 = vmatprep.subr.bf16.mxu0 0
    %179 = vmatpush1.bf16.msra.mxu0 0
    %180 = vmatprep.subr.bf16.mxu0 0
    %181 = vmatpush1.bf16.msra.mxu0 0
    %182 = vmatprep.mubr.bf16.mxu0 0
    %183 = vmatmul.mubr.bf16.gmra.mrb[0].mxu0 %v40
    %v184 = vpop.f32.mrb[0].mxu0
    %v185 = vadd.f32 %v63, %v184
    %v186 = vpop.f32.mrb[0].mxu0
    %v187 = vadd.f32 %v67, %v186
    %v188 = vpop.f32.mrb[0].mxu0
    %v189 = vadd.f32 %v63, %v188
    %v190 = vpop.f32.mrb[0].mxu0
    %v191 = vadd.f32 %v67, %v190
    %192 = vmatprep.mubr.bf16.mxu0 0
    %193 = vmatmul.mubr.bf16.gmra.mrb[0].mxu0 %v41
    %v194 = vpop.f32.mrb[0].mxu0
    %v195 = vadd.f32 %v63, %v194
    %v196 = vpop.f32.mrb[0].mxu0
    %v197 = vadd.f32 %v67, %v196
    %v198 = vpop.f32.mrb[0].mxu0
    %v199 = vadd.f32 %v63, %v198
    %v200 = vpop.f32.mrb[0].mxu0
    %v201 = vadd.f32 %v67, %v200
    %202 = vdwg.mxu0
    %v203 = vmax.f32 %v185, 0.0
    %v204 = vmax.f32 %v187, 0.0
    %v205 = vmax.f32 %v189, 0.0
    %v206 = vmax.f32 %v191, 0.0
    %v207 = vmax.f32 %v195, 0.0
    %v208 = vmax.f32 %v197, 0.0
    %v209 = vmax.f32 %v199, 0.0
    %v210 = vmax.f32 %v201, 0.0
    %v211 = vld [vmem:[#allocation2] sm:$0xff]
    %v212 = vld [vmem:[#allocation2 + $0x8] sm:$0xff]
    %v213 = vld [vmem:[#allocation2 + $0x10] sm:$0xff]
    %v214 = vld [vmem:[#allocation2 + $0x18] sm:$0xff]
    %v215 = vpack.c.bf16 %v205, %v203
    %v216 = vpack.c.bf16 %v206, %v204
    %v217 = vpack.c.bf16 %v209, %v207
    %v218 = vpack.c.bf16 %v210, %v208
    %v219 = vld [vmem:[%s3] sm:$0xf]
    %v220 = vld [vmem:[%s3 + $0x4] sm:$0xf]
    %v221 = vld [vmem:[%s3 + $0x8] sm:$0xf]
    %v222 = vld [vmem:[%s3 + $0xc] sm:$0xf]
    %v223 = vld [vmem:[%s3 + $0x10] sm:$0xf]
    %v224 = vld [vmem:[%s3 + $0x14] sm:$0xf]
    %v225 = vld [vmem:[%s3 + $0x18] sm:$0xf]
    %v226 = vld [vmem:[%s3 + $0x1c] sm:$0xf]
    %v227 = vld [vmem:[%s3 + $0x20] sm:$0xf]
    %v228 = vld [vmem:[%s3 + $0x24] sm:$0xf]
    %v229 = vld [vmem:[%s3 + $0x28] sm:$0xf]
    %v230 = vld [vmem:[%s3 + $0x2c] sm:$0xf]
    %v231 = vld [vmem:[%s3 + $0x30] sm:$0xf]
    %v232 = vld [vmem:[%s3 + $0x34] sm:$0xf]
    %v233 = vld [vmem:[%s3 + $0x38] sm:$0xf]
    %v234 = vld [vmem:[%s3 + $0x3c] sm:$0xf]
    %v235 = vld [vmem:[%s3 + $0x40] sm:$0xf]
    %v236 = vld [vmem:[%s3 + $0x44] sm:$0xf]
    %v237 = vld [vmem:[%s3 + $0x48] sm:$0xf]
    %v238 = vld [vmem:[%s3 + $0x4c] sm:$0xf]
    %v239 = vld [vmem:[%s3 + $0x50] sm:$0xf]
    %v240 = vld [vmem:[%s3 + $0x54] sm:$0xf]
    %v241 = vld [vmem:[%s3 + $0x58] sm:$0xf]
    %v242 = vld [vmem:[%s3 + $0x5c] sm:$0xf]
    %v243 = vld [vmem:[%s3 + $0x60] sm:$0xf]
    %v244 = vld [vmem:[%s3 + $0x64] sm:$0xf]
    %v245 = vld [vmem:[%s3 + $0x68] sm:$0xf]
    %v246 = vld [vmem:[%s3 + $0x6c] sm:$0xf]
    %v247 = vld [vmem:[%s3 + $0x70] sm:$0xf]
    %v248 = vld [vmem:[%s3 + $0x74] sm:$0xf]
    %v249 = vld [vmem:[%s3 + $0x78] sm:$0xf]
    %v250 = vld [vmem:[%s3 + $0x7c] sm:$0xf]
    %v283 = vunpack.c.l.b16 %v219
    %v284 = vunpack.c.l.b16 %v220
    %v285 = vunpack.c.l.b16 %v221
    %v286 = vunpack.c.l.b16 %v222
    %v287 = vunpack.c.l.b16 %v223
    %v288 = vunpack.c.l.b16 %v224
    %v289 = vunpack.c.l.b16 %v225
    %v290 = vunpack.c.l.b16 %v226
    %v291 = vunpack.c.l.b16 %v227
    %v292 = vunpack.c.l.b16 %v228
    %v293 = vunpack.c.l.b16 %v229
    %v294 = vunpack.c.l.b16 %v230
    %v295 = vunpack.c.l.b16 %v231
    %v296 = vunpack.c.l.b16 %v232
    %v297 = vunpack.c.l.b16 %v233
    %v298 = vunpack.c.l.b16 %v234
    %v299 = vunpack.c.l.b16 %v235
    %v300 = vunpack.c.l.b16 %v236
    %v301 = vunpack.c.l.b16 %v237
    %v302 = vunpack.c.l.b16 %v238
    %v303 = vunpack.c.l.b16 %v239
    %v304 = vunpack.c.l.b16 %v240
    %v305 = vunpack.c.l.b16 %v241
    %v306 = vunpack.c.l.b16 %v242
    %v307 = vunpack.c.l.b16 %v243
    %v308 = vunpack.c.l.b16 %v244
    %v309 = vunpack.c.l.b16 %v245
    %v310 = vunpack.c.l.b16 %v246
    %v311 = vunpack.c.l.b16 %v247
    %v312 = vunpack.c.l.b16 %v248
    %v313 = vunpack.c.l.b16 %v249
    %v314 = vunpack.c.l.b16 %v250
    %v315 = vpack.c.b16 %v284, %v283
    %v316 = vpack.c.b16 %v286, %v285
    %v317 = vpack.c.b16 %v288, %v287
    %v318 = vpack.c.b16 %v290, %v289
    %v319 = vpack.c.b16 %v292, %v291
    %v320 = vpack.c.b16 %v294, %v293
    %v321 = vpack.c.b16 %v296, %v295
    %v322 = vpack.c.b16 %v298, %v297
    %v323 = vpack.c.b16 %v300, %v299
    %v324 = vpack.c.b16 %v302, %v301
    %v325 = vpack.c.b16 %v304, %v303
    %v326 = vpack.c.b16 %v306, %v305
    %v327 = vpack.c.b16 %v308, %v307
    %v328 = vpack.c.b16 %v310, %v309
    %v329 = vpack.c.b16 %v312, %v311
    %v330 = vpack.c.b16 %v314, %v313
    %347 = vmatprep.subr.bf16.mxu0 0
    %348 = vmatpush1.bf16.msra.mxu0 %v315
    %349 = vmatprep.subr.bf16.mxu0 0
    %350 = vmatpush1.bf16.msra.mxu0 %v316
    %351 = vmatprep.subr.bf16.mxu0 0
    %352 = vmatpush1.bf16.msra.mxu0 %v317
    %353 = vmatprep.subr.bf16.mxu0 0
    %354 = vmatpush1.bf16.msra.mxu0 %v318
    %355 = vmatprep.subr.bf16.mxu0 0
    %356 = vmatpush1.bf16.msra.mxu0 %v319
    %357 = vmatprep.subr.bf16.mxu0 0
    %358 = vmatpush1.bf16.msra.mxu0 %v320
    %359 = vmatprep.subr.bf16.mxu0 0
    %360 = vmatpush1.bf16.msra.mxu0 %v321
    %361 = vmatprep.subr.bf16.mxu0 0
    %362 = vmatpush1.bf16.msra.mxu0 %v322
    %363 = vmatprep.subr.bf16.mxu0 0
    %364 = vmatpush1.bf16.msra.mxu0 %v323
    %365 = vmatprep.subr.bf16.mxu0 0
    %366 = vmatpush1.bf16.msra.mxu0 %v324
    %367 = vmatprep.subr.bf16.mxu0 0
    %368 = vmatpush1.bf16.msra.mxu0 %v325
    %369 = vmatprep.subr.bf16.mxu0 0
    %370 = vmatpush1.bf16.msra.mxu0 %v326
    %371 = vmatprep.subr.bf16.mxu0 0
    %372 = vmatpush1.bf16.msra.mxu0 %v327
    %373 = vmatprep.subr.bf16.mxu0 0
    %374 = vmatpush1.bf16.msra.mxu0 %v328
    %375 = vmatprep.subr.bf16.mxu0 0
    %376 = vmatpush1.bf16.msra.mxu0 %v329
    %377 = vmatprep.subr.bf16.mxu0 0
    %378 = vmatpush1.bf16.msra.mxu0 %v330
    %379 = vmatprep.mubr.bf16.mxu0 %v216
    %380 = vmatmul.mubr.bf16.gmra.mrb[0].mxu0 %v215
    %v381 = vpop.f32.mrb[0].mxu0
    %v382 = vadd.f32 0.0, %v381
    %v383 = vpop.f32.mrb[0].mxu0
    %v384 = vpop.f32.mrb[0].mxu0
    %v385 = vadd.f32 0.0, %v384
    %v386 = vpop.f32.mrb[0].mxu0
    %387 = vmatprep.mubr.bf16.mxu0 %v218
    %388 = vmatmul.mubr.bf16.gmra.mrb[0].mxu0 %v217
    %v389 = vpop.f32.mrb[0].mxu0
    %v390 = vadd.f32 0.0, %v389
    %v391 = vpop.f32.mrb[0].mxu0
    %v392 = vpop.f32.mrb[0].mxu0
    %v393 = vadd.f32 0.0, %v392
    %v394 = vpop.f32.mrb[0].mxu0
    %395 = vdwg.mxu0
    %v396 = vadd.f32 %v211, %v382
    %v397 = vadd.f32 %v212, %v385
    %v398 = vadd.f32 %v213, %v390
    %v399 = vadd.f32 %v214, %v393
    %400 = vst [vmem:[#allocation2] sm:$0xff] %v396
    %401 = vst [vmem:[#allocation2 + $0x8] sm:$0xff] %v397
    %402 = vst [vmem:[#allocation2 + $0x10] sm:$0xff] %v398
    %403 = vst [vmem:[#allocation2 + $0x18] sm:$0xff] %v399
    // Predicated region
    $region34: #{transformer_decoder_layer.15} parent=1 // pred_check
      %p404 = pneg %p28
    $region35: #{transformer_decoder_layer.15} parent=1 // pred_check_branch
      %406 = sbr.rel (%p404) target = $region37
    $region36: #{transformer_decoder_layer.15} parent=1 // pred_region
      %v407 = vld [vmem:[#allocation2] sm:$0xff]
      %v408 = vld [vmem:[#allocation2 + $0x8] sm:$0xff]
      %v409 = vld [vmem:[#allocation2 + $0x10] sm:$0xff]
      %v410 = vld [vmem:[#allocation2 + $0x18] sm:$0xff]
      %v411 = vld [vmem:[%s4] sm:$0x1]
      %v413 = vlaneseq
      %v414 = vshrl.u32 %v413, 7
      %v415 = vsub.s32 0, %v414
      %v416 = vrot.slane %v411, %v415
      %v418 = vadd.f32 %v407, %v416
      %v419 = vadd.f32 %v408, %v416
      %v420 = vadd.f32 %v409, %v416
      %v421 = vadd.f32 %v410, %v416
      %v422 = vld [vmem:[%s0] sm:$0xff]
      %v423 = vld [vmem:[%s0 + $0x8] sm:$0xff]
      %v424 = vld [vmem:[%s0 + $0x10] sm:$0xff]
      %v425 = vld [vmem:[%s0 + $0x18] sm:$0xff]
      %v426 = vadd.f32 %v418, %v422
      %v427 = vadd.f32 %v419, %v423
      %v428 = vadd.f32 %v420, %v424
      %v429 = vadd.f32 %v421, %v425
      %430 = vadd.xlane.f32.xlu0 %v426
      %v431 = vpop.xlane.xlu0 %430
      %432 = vadd.xlane.f32.xlu0 %v427
      %v433 = vpop.xlane.xlu0 %432
      %434 = vadd.xlane.f32.xlu0 %v428
      %v435 = vpop.xlane.xlu0 %434
      %436 = vadd.xlane.f32.xlu0 %v429
      %v437 = vpop.xlane.xlu0 %436
      %v438 = vrcp.pop 128.0
      %v439 = vmul.f32 %v431, %v438
      %v440 = vmul.f32 %v433, %v438
      %v441 = vmul.f32 %v435, %v438
      %v442 = vmul.f32 %v437, %v438
      %v443 = vsub.f32 %v426, %v439
      %v444 = vsub.f32 %v427, %v440
      %v445 = vsub.f32 %v428, %v441
      %v446 = vsub.f32 %v429, %v442
      %v447 = vmul.f32 %v443, %v443
      %v448 = vmul.f32 %v444, %v444
      %v449 = vmul.f32 %v445, %v445
      %v450 = vmul.f32 %v446, %v446
      %451 = vadd.xlane.f32.xlu0 %v447
      %v452 = vpop.xlane.xlu0 %451
      %453 = vadd.xlane.f32.xlu0 %v448
      %v454 = vpop.xlane.xlu0 %453
      %455 = vadd.xlane.f32.xlu0 %v449
      %v456 = vpop.xlane.xlu0 %455
      %457 = vadd.xlane.f32.xlu0 %v450
      %v458 = vpop.xlane.xlu0 %457
      %v459 = vmul.f32 %v452, %v438
      %v460 = vmul.f32 %v454, %v438
      %v461 = vmul.f32 %v456, %v438
      %v462 = vmul.f32 %v458, %v438
      %v463 = vadd.f32 %v459, 1e-05
      %v464 = vadd.f32 %v460, 1e-05
      %v465 = vadd.f32 %v461, 1e-05
      %v466 = vadd.f32 %v462, 1e-05
      %v467 = vrsqrt.pop %v463
      %v468 = vrsqrt.pop %v464
      %v469 = vrsqrt.pop %v465
      %v470 = vrsqrt.pop %v466
      %v471 = vmul.f32 %v443, %v467
      %v472 = vmul.f32 %v444, %v468
      %v473 = vmul.f32 %v445, %v469
      %v474 = vmul.f32 %v446, %v470
      %v475 = vld [vmem:[%s5] sm:$0x1]
      %v477 = vlaneseq
      %v478 = vshrl.u32 %v477, 7
      %v479 = vsub.s32 0, %v478
      %v480 = vrot.slane %v475, %v479
      %v482 = vmul.f32 %v471, %v480
      %v483 = vmul.f32 %v472, %v480
      %v484 = vmul.f32 %v473, %v480
      %v485 = vmul.f32 %v474, %v480
      %v486 = vld [vmem:[%s6] sm:$0x1]
      %v488 = vlaneseq
      %v489 = vshrl.u32 %v488, 7
      %v490 = vsub.s32 0, %v489
      %v491 = vrot.slane %v486, %v490
      %v493 = vadd.f32 %v482, %v491
      %v494 = vadd.f32 %v483, %v491
      %v495 = vadd.f32 %v484, %v491
      %v496 = vadd.f32 %v485, %v491
      %497 = vst [vmem:[#allocation3] sm:$0xff] %v493
      %498 = vst [vmem:[#allocation3 + $0x8] sm:$0xff] %v494
      %499 = vst [vmem:[#allocation3 + $0x10] sm:$0xff] %v495
      %500 = vst [vmem:[#allocation3 + $0x18] sm:$0xff] %v496
    $region37: #{transformer_decoder_layer.15} parent=1 // pred_fallthru
      _
    // Predicated region
    $region38: #{transformer_decoder_layer.15} parent=1 // pred_check
      _
    $region39: #{transformer_decoder_layer.15} parent=1 // pred_check_branch
      %502 = sbr.rel (0) target = $region41
    $region40: #{transformer_decoder_layer.15} parent=1 // pred_region
      %s504 = ssub.s32 512, 512
      %505 = vsyncadd [#allocation4], %s504
      %s506 = sshll.u32 [#allocation3], 4
      %s507 = int_to_ptr.vmem [resolvable:$true] %s506
      %512 = dma.vmem_to_hbm [thread:$0]  %s507, 512, %s7, [#allocation4], 128, 128, 8
    $region41: #{transformer_decoder_layer.15} parent=1 // pred_fallthru
      _
    // Predicated region
    $region42: #{transformer_decoder_layer.15} parent=1 // pred_check
      _
    $region43: #{transformer_decoder_layer.15} parent=1 // pred_check_branch
      %514 = sbr.rel (0) target = $region45
    $region44: #{transformer_decoder_layer.15} parent=1 // pred_region
      %515 = dma.done [#allocation4], 512
    $region45: #{transformer_decoder_layer.15} parent=1 // pred_fallthru
      _
    %516 = vsyncpa [#allocation4], 1

</llo_original>
